<compile_context>
chip_gen: v7x
topology: tpu7x:2x2x1
jax: 0.10.0
libtpu: 0.0.40
codegen_flags: <defaults>
</compile_context>

<pallas_src>
import functools

import jax
import jax.numpy as jnp
import numpy as np
from jax.experimental import pallas as pl
from jax.experimental.pallas import tpu as pltpu

BN_EPS = 1e-5


# --------------------------------------------------------------------------
# In-kernel helpers
# --------------------------------------------------------------------------
def _fill_im2col(col_ref, act, masks_ref, w, p, cin):
    """Write the 9-tap im2col of `act` (Cin, P) into col_ref (9*Cin, P).

    Only ONE shifted/masked tap is live in vregs at a time; the big K=9*Cin
    operand lives in VMEM scratch.  Halo masks come from masks_ref (8, P),
    precomputed at trace time; they also cover the wrap-around of the flat
    roll, which is only correct for stride=1 / pad=1 / contiguous per-sample
    layout (asserted in the wrapper).
    """
    tap = 0
    mask_row = 0
    for dy in (-1, 0, 1):
        for dx in (-1, 0, 1):
            s = dy * w + dx                      # flat source offset of this tap
            if s == 0:
                col_ref[pl.ds(tap * cin, cin), :] = act
            else:
                # shifted[:, i] = act[:, (i + s) % P]; invalid lanes zeroed by mask.
                shifted = pltpu.roll(act, shift=(-s) % p, axis=1)
                m = masks_ref[pl.ds(mask_row, 1), :]          # (1, P) constant
                col_ref[pl.ds(tap * cin, cin), :] = shifted * m
                mask_row += 1
            tap += 1


def _batchnorm(a, gamma, beta, rmean_ref):
    """Train-mode BatchNorm2d (biased variance) on lane-dense a (C, P).

    The two reductions (mean, mean-of-squares) are a single MXU matmul of the
    sublane-stacked [a; a*a] against a (P, 1) column of 1/P, keeping the XLU
    free for the conv rolls.  Stats stay in f32.
    """
    c = a.shape[0]
    stacked = jnp.concatenate([a, a * a], axis=0)                      # (2C, P)
    stats = jnp.dot(stacked, rmean_ref[...],
                    preferred_element_type=jnp.float32)                # (2C, 1)
    mu = stats[:c]                                                     # (C, 1)
    ex2 = stats[c:]                                                    # (C, 1)
    var = ex2 - mu * mu
    scale = gamma * jax.lax.rsqrt(var + BN_EPS)
    offset = beta - mu * scale
    return a * scale + offset


def _se_basic_block_kernel(x_ref, w1_ref, g1_ref, b1_ref, w2_ref, g2_ref, b2_ref,
                           sw1_ref, sw2_ref, masks_ref, rmean_ref, pool_ref,
                           bcast_ref, out_ref, col_ref, *, h, w):
    c, p = out_ref.shape
    cin = x_ref.shape[0]

    x = x_ref[...]                                           # (Cin, P) lane-dense

    # conv1 -> bn1 -> relu   (single K=9*Cin MXU matmul from the VMEM slab)
    _fill_im2col(col_ref, x, masks_ref, w, p, cin)
    o1 = jnp.dot(w1_ref[...], col_ref[...], preferred_element_type=jnp.float32)
    o1 = jnp.maximum(_batchnorm(o1, g1_ref[...], b1_ref[...], rmean_ref), 0.0)

    # conv2 -> bn2   (scratch slab reused; o1 never round-trips through HBM)
    _fill_im2col(col_ref, o1, masks_ref, w, p, c)
    o2 = jnp.dot(w2_ref[...], col_ref[...], preferred_element_type=jnp.float32)
    o2 = _batchnorm(o2, g2_ref[...], b2_ref[...], rmean_ref)

    # Squeeze-and-excitation.  Per-sample global-average-pool and the
    # broadcast back are tiny matmuls against trace-time constant indicator
    # matrices, so everything stays lane-dense and on the (idle) MXU.
    pooled = jnp.dot(o2, pool_ref[...], preferred_element_type=jnp.float32)     # (C, N)
    hid = jnp.maximum(jnp.dot(sw1_ref[...], pooled,
                              preferred_element_type=jnp.float32), 0.0)         # (C//r, N)
    gate = jax.nn.sigmoid(jnp.dot(sw2_ref[...], hid,
                                  preferred_element_type=jnp.float32))          # (C, N)
    gate_full = jnp.dot(gate, bcast_ref[...],
                        preferred_element_type=jnp.float32)                     # (C, P)

    # SE scaling, residual add (downsample=None, stride=1), final relu:
    # one lane-dense elementwise pass, stored as unmasked full-lane vst.
    out_ref[...] = jnp.maximum(o2 * gate_full + x, 0.0)


# --------------------------------------------------------------------------
# Trace-time constants (pure numpy; become small VMEM inputs)
# --------------------------------------------------------------------------
def _make_constants(n, h, w):
    hw = h * w
    p = n * hw
    pos = np.arange(p)
    xc = pos % w
    yc = (pos // w) % h

    mask_rows = []
    for dy in (-1, 0, 1):
        for dx in (-1, 0, 1):
            if dy == 0 and dx == 0:
                continue
            valid = ((yc + dy >= 0) & (yc + dy < h) &
                     (xc + dx >= 0) & (xc + dx < w))
            mask_rows.append(valid.astype(np.float32))
    masks = np.stack(mask_rows)                                    # (8, P)

    rmean = np.full((p, 1), 1.0 / p, np.float32)                   # (P, 1): mean reducer
    sample = pos // hw
    pool = (sample[:, None] == np.arange(n)[None, :]).astype(np.float32) / hw   # (P, N)
    bcast = (np.arange(n)[:, None] == sample[None, :]).astype(np.float32)       # (N, P)
    return masks, rmean, pool, bcast


# --------------------------------------------------------------------------
# Host-side wrappers
# --------------------------------------------------------------------------
def pack_params(params):
    """Pre-pack weights once, outside the hot path."""
    def to_w9(w_oihw):   # OIHW -> (Cout, 9*Cin), K ordered (dy, dx, ci)
        return jnp.transpose(w_oihw, (0, 2, 3, 1)).reshape(
            w_oihw.shape[0], -1).astype(jnp.float32)

    return dict(
        w1=to_w9(params["w1"]),
        g1=params["g1"].reshape(-1, 1).astype(jnp.float32),
        b1=params["b1"].reshape(-1, 1).astype(jnp.float32),
        w2=to_w9(params["w2"]),
        g2=params["g2"].reshape(-1, 1).astype(jnp.float32),
        b2=params["b2"].reshape(-1, 1).astype(jnp.float32),
        se_w1=params["se_w1"].astype(jnp.float32),   # (C//r, C)
        se_w2=params["se_w2"].astype(jnp.float32),   # (C, C//r)
    )


def se_basic_block_cp(x_cp, packed, *, n, h, w):
    """Hot-path entry: activations already in (C, P) layout, P = N*H*W."""
    c, p = x_cp.shape
    cout = packed["w1"].shape[0]
    assert p == n * h * w
    assert c % 8 == 0 and cout % 8 == 0, "channel counts must be sublane-aligned"
    assert c == cout, "downsample=None / stride=1 requires inplanes == planes"
    # Lane-dense layout + roll/mask im2col correctness require P % 128 == 0 and
    # a contiguous per-sample (n, y, x) ordering of the flat position axis.
    assert p % 128 == 0, "P = N*H*W must be a multiple of 128"

    masks, rmean, pool, bcast = _make_constants(n, h, w)

    vmem = pl.BlockSpec(memory_space=pltpu.MemorySpace.VMEM)
    args = (
        x_cp.astype(jnp.float32),
        packed["w1"], packed["g1"], packed["b1"],
        packed["w2"], packed["g2"], packed["b2"],
        packed["se_w1"], packed["se_w2"],
        jnp.asarray(masks), jnp.asarray(rmean),
        jnp.asarray(pool), jnp.asarray(bcast),
    )

    return pl.pallas_call(
        functools.partial(_se_basic_block_kernel, h=h, w=w),
        out_shape=jax.ShapeDtypeStruct((cout, p), jnp.float32),
        in_specs=[vmem] * len(args),
        out_specs=vmem,
        scratch_shapes=[pltpu.VMEM((9 * cout, p), jnp.float32)],   # im2col slab
        compiler_params=pltpu.CompilerParams(vmem_limit_bytes=32 * 1024 * 1024),
    )(*args)


def se_basic_block(x_nchw, params):
    """NCHW convenience wrapper (test-only; chained blocks should stay (C, P))."""
    n, cin, h, w = x_nchw.shape
    packed = pack_params(params)
    x_cp = jnp.transpose(x_nchw, (1, 0, 2, 3)).reshape(cin, -1)
    out_cp = se_basic_block_cp(x_cp, packed, n=n, h=h, w=w)
    cout = out_cp.shape[0]
    return jnp.transpose(out_cp.reshape(cout, n, h, w), (1, 0, 2, 3))


# --------------------------------------------------------------------------
# Pure-JAX NCHW reference mirroring the PyTorch module
# --------------------------------------------------------------------------
def ref_forward(x, params):
    def conv(a, wgt):
        return jax.lax.conv_general_dilated(
            a, wgt, (1, 1), ((1, 1), (1, 1)),
            dimension_numbers=("NCHW", "OIHW", "NCHW"))

    def bn(a, g, b):
        mu = a.mean(axis=(0, 2, 3), keepdims=True)
        var = ((a - mu) ** 2).mean(axis=(0, 2, 3), keepdims=True)
        return (a - mu) / jnp.sqrt(var + BN_EPS) * g.reshape(1, -1, 1, 1) + b.reshape(1, -1, 1, 1)

    o = jnp.maximum(bn(conv(x, params["w1"]), params["g1"], params["b1"]), 0.0)
    o = bn(conv(o, params["w2"]), params["g2"], params["b2"])
    pooled = o.mean(axis=(2, 3))                                      # (N, C)
    hid = jnp.maximum(pooled @ params["se_w1"].T, 0.0)
    s = jax.nn.sigmoid(hid @ params["se_w2"].T)
    o = o * s[:, :, None, None]
    return jnp.maximum(o + x, 0.0)


if __name__ == "__main__":
    # SEBasicBlock(inplanes=16, planes=16, stride=1, downsample=None, reduction=4)
    N, C, H, W = 2, 16, 16, 16      # P = N*H*W = 512 (lane-dense, 4x128)
    RED = 4

    key = jax.random.PRNGKey(0)
    ks = jax.random.split(key, 9)
    params = {
        "w1": 0.1 * jax.random.normal(ks[0], (C, C, 3, 3), jnp.float32),      # conv1 OIHW
        "w2": 0.1 * jax.random.normal(ks[1], (C, C, 3, 3), jnp.float32),      # conv2 OIHW
        "g1": 1.0 + 0.1 * jax.random.normal(ks[2], (C,), jnp.float32),        # bn1 gamma
        "b1": 0.1 * jax.random.normal(ks[3], (C,), jnp.float32),              # bn1 beta
        "g2": 1.0 + 0.1 * jax.random.normal(ks[4], (C,), jnp.float32),        # bn2 gamma
        "b2": 0.1 * jax.random.normal(ks[5], (C,), jnp.float32),              # bn2 beta
        "se_w1": 0.2 * jax.random.normal(ks[6], (C // RED, C), jnp.float32),  # Linear(C, C//r)
        "se_w2": 0.2 * jax.random.normal(ks[7], (C, C // RED), jnp.float32),  # Linear(C//r, C)
    }
    x = jax.random.normal(ks[8], (N, C, H, W), jnp.float32)

    out = jax.block_until_ready(se_basic_block(x, params))
    ref = jax.block_until_ready(ref_forward(x, params))

    assert out.shape == (N, C, H, W) and out.dtype == jnp.float32
    np.testing.assert_allclose(np.asarray(out), np.asarray(ref), rtol=2e-3, atol=2e-3)
    print("KERNEL_OK")
</pallas_src>

<mosaic_0001>
module attributes {stable_mosaic.version = 11 : i64} {
  func.func @_se_basic_block_kernel(%arg0: memref<16x512xf32, #tpu.memory_space<vmem>>, %arg1: memref<16x144xf32, #tpu.memory_space<vmem>>, %arg2: memref<16x1xf32, #tpu.memory_space<vmem>>, %arg3: memref<16x1xf32, #tpu.memory_space<vmem>>, %arg4: memref<16x144xf32, #tpu.memory_space<vmem>>, %arg5: memref<16x1xf32, #tpu.memory_space<vmem>>, %arg6: memref<16x1xf32, #tpu.memory_space<vmem>>, %arg7: memref<4x16xf32, #tpu.memory_space<vmem>>, %arg8: memref<16x4xf32, #tpu.memory_space<vmem>>, %arg9: memref<8x512xf32, #tpu.memory_space<vmem>>, %arg10: memref<512x1xf32, #tpu.memory_space<vmem>>, %arg11: memref<512x2xf32, #tpu.memory_space<vmem>>, %arg12: memref<2x512xf32, #tpu.memory_space<vmem>>, %arg13: memref<16x512xf32, #tpu.memory_space<vmem>>, %arg14: memref<144x512xf32, #tpu.memory_space<vmem>>) attributes {dimension_semantics = [], scalar_prefetch = 0 : i64, scratch_operands = 1 : i64, tpu.core_type = #tpu.core_type<tc>} {
    %c0 = arith.constant 0 : index
    %c0_0 = arith.constant 0 : index
    %0 = vector.load %arg0[%c0, %c0_0] : memref<16x512xf32, #tpu.memory_space<vmem>>, vector<16x512xf32>
    %c17_i32 = arith.constant 17 : i32
    %1 = tpu.dynamic_rotate %0 by %c17_i32 dim 1 : vector<16x512xf32>, i32 -> vector<16x512xf32>
    %c0_1 = arith.constant 0 : index
    %c0_2 = arith.constant 0 : index
    %2 = vector.load %arg9[%c0_1, %c0_2] : memref<8x512xf32, #tpu.memory_space<vmem>>, vector<1x512xf32>
    %3 = vector.broadcast %2 : vector<1x512xf32> to vector<16x512xf32>
    %4 = arith.mulf %1, %3 : vector<16x512xf32>
    %c0_3 = arith.constant 0 : index
    %c0_4 = arith.constant 0 : index
    %5 = vector.load %arg14[%c0_3, %c0_4] : memref<144x512xf32, #tpu.memory_space<vmem>>, vector<16x512xf32>
    tpu.vector_store %arg14[%c0_3, %c0_4], %4 {strides = array<i32>} : memref<144x512xf32, #tpu.memory_space<vmem>>, vector<16x512xf32>,
    %c16_i32 = arith.constant 16 : i32
    %6 = tpu.dynamic_rotate %0 by %c16_i32 dim 1 : vector<16x512xf32>, i32 -> vector<16x512xf32>
    %c1 = arith.constant 1 : index
    %c0_5 = arith.constant 0 : index
    %7 = vector.load %arg9[%c1, %c0_5] : memref<8x512xf32, #tpu.memory_space<vmem>>, vector<1x512xf32>
    %8 = vector.broadcast %7 : vector<1x512xf32> to vector<16x512xf32>
    %9 = arith.mulf %6, %8 : vector<16x512xf32>
    %c16 = arith.constant 16 : index
    %c0_6 = arith.constant 0 : index
    %10 = vector.load %arg14[%c16, %c0_6] : memref<144x512xf32, #tpu.memory_space<vmem>>, vector<16x512xf32>
    tpu.vector_store %arg14[%c16, %c0_6], %9 {strides = array<i32>} : memref<144x512xf32, #tpu.memory_space<vmem>>, vector<16x512xf32>,
    %c15_i32 = arith.constant 15 : i32
    %11 = tpu.dynamic_rotate %0 by %c15_i32 dim 1 : vector<16x512xf32>, i32 -> vector<16x512xf32>
    %c2 = arith.constant 2 : index
    %c0_7 = arith.constant 0 : index
    %12 = vector.load %arg9[%c2, %c0_7] : memref<8x512xf32, #tpu.memory_space<vmem>>, vector<1x512xf32>
    %13 = vector.broadcast %12 : vector<1x512xf32> to vector<16x512xf32>
    %14 = arith.mulf %11, %13 : vector<16x512xf32>
    %c32 = arith.constant 32 : index
    %c0_8 = arith.constant 0 : index
    %15 = vector.load %arg14[%c32, %c0_8] : memref<144x512xf32, #tpu.memory_space<vmem>>, vector<16x512xf32>
    tpu.vector_store %arg14[%c32, %c0_8], %14 {strides = array<i32>} : memref<144x512xf32, #tpu.memory_space<vmem>>, vector<16x512xf32>,
    %c1_i32 = arith.constant 1 : i32
    %16 = tpu.dynamic_rotate %0 by %c1_i32 dim 1 : vector<16x512xf32>, i32 -> vector<16x512xf32>
    %c3 = arith.constant 3 : index
    %c0_9 = arith.constant 0 : index
    %17 = vector.load %arg9[%c3, %c0_9] : memref<8x512xf32, #tpu.memory_space<vmem>>, vector<1x512xf32>
    %18 = vector.broadcast %17 : vector<1x512xf32> to vector<16x512xf32>
    %19 = arith.mulf %16, %18 : vector<16x512xf32>
    %c48 = arith.constant 48 : index
    %c0_10 = arith.constant 0 : index
    %20 = vector.load %arg14[%c48, %c0_10] : memref<144x512xf32, #tpu.memory_space<vmem>>, vector<16x512xf32>
    tpu.vector_store %arg14[%c48, %c0_10], %19 {strides = array<i32>} : memref<144x512xf32, #tpu.memory_space<vmem>>, vector<16x512xf32>,
    %c64 = arith.constant 64 : index
    %c0_11 = arith.constant 0 : index
    %21 = vector.load %arg14[%c64, %c0_11] : memref<144x512xf32, #tpu.memory_space<vmem>>, vector<16x512xf32>
    tpu.vector_store %arg14[%c64, %c0_11], %0 {strides = array<i32>} : memref<144x512xf32, #tpu.memory_space<vmem>>, vector<16x512xf32>,
    %c511_i32 = arith.constant 511 : i32
    %22 = tpu.dynamic_rotate %0 by %c511_i32 dim 1 : vector<16x512xf32>, i32 -> vector<16x512xf32>
    %c4 = arith.constant 4 : index
    %c0_12 = arith.constant 0 : index
    %23 = vector.load %arg9[%c4, %c0_12] : memref<8x512xf32, #tpu.memory_space<vmem>>, vector<1x512xf32>
    %24 = vector.broadcast %23 : vector<1x512xf32> to vector<16x512xf32>
    %25 = arith.mulf %22, %24 : vector<16x512xf32>
    %c80 = arith.constant 80 : index
    %c0_13 = arith.constant 0 : index
    %26 = vector.load %arg14[%c80, %c0_13] : memref<144x512xf32, #tpu.memory_space<vmem>>, vector<16x512xf32>
    tpu.vector_store %arg14[%c80, %c0_13], %25 {strides = array<i32>} : memref<144x512xf32, #tpu.memory_space<vmem>>, vector<16x512xf32>,
    %c497_i32 = arith.constant 497 : i32
    %27 = tpu.dynamic_rotate %0 by %c497_i32 dim 1 : vector<16x512xf32>, i32 -> vector<16x512xf32>
    %c5 = arith.constant 5 : index
    %c0_14 = arith.constant 0 : index
    %28 = vector.load %arg9[%c5, %c0_14] : memref<8x512xf32, #tpu.memory_space<vmem>>, vector<1x512xf32>
    %29 = vector.broadcast %28 : vector<1x512xf32> to vector<16x512xf32>
    %30 = arith.mulf %27, %29 : vector<16x512xf32>
    %c96 = arith.constant 96 : index
    %c0_15 = arith.constant 0 : index
    %31 = vector.load %arg14[%c96, %c0_15] : memref<144x512xf32, #tpu.memory_space<vmem>>, vector<16x512xf32>
    tpu.vector_store %arg14[%c96, %c0_15], %30 {strides = array<i32>} : memref<144x512xf32, #tpu.memory_space<vmem>>, vector<16x512xf32>,
    %c496_i32 = arith.constant 496 : i32
    %32 = tpu.dynamic_rotate %0 by %c496_i32 dim 1 : vector<16x512xf32>, i32 -> vector<16x512xf32>
    %c6 = arith.constant 6 : index
    %c0_16 = arith.constant 0 : index
    %33 = vector.load %arg9[%c6, %c0_16] : memref<8x512xf32, #tpu.memory_space<vmem>>, vector<1x512xf32>
    %34 = vector.broadcast %33 : vector<1x512xf32> to vector<16x512xf32>
    %35 = arith.mulf %32, %34 : vector<16x512xf32>
    %c112 = arith.constant 112 : index
    %c0_17 = arith.constant 0 : index
    %36 = vector.load %arg14[%c112, %c0_17] : memref<144x512xf32, #tpu.memory_space<vmem>>, vector<16x512xf32>
    tpu.vector_store %arg14[%c112, %c0_17], %35 {strides = array<i32>} : memref<144x512xf32, #tpu.memory_space<vmem>>, vector<16x512xf32>,
    %c495_i32 = arith.constant 495 : i32
    %37 = tpu.dynamic_rotate %0 by %c495_i32 dim 1 : vector<16x512xf32>, i32 -> vector<16x512xf32>
    %c7 = arith.constant 7 : index
    %c0_18 = arith.constant 0 : index
    %38 = vector.load %arg9[%c7, %c0_18] : memref<8x512xf32, #tpu.memory_space<vmem>>, vector<1x512xf32>
    %39 = vector.broadcast %38 : vector<1x512xf32> to vector<16x512xf32>
    %40 = arith.mulf %37, %39 : vector<16x512xf32>
    %c128 = arith.constant 128 : index
    %c0_19 = arith.constant 0 : index
    %41 = vector.load %arg14[%c128, %c0_19] : memref<144x512xf32, #tpu.memory_space<vmem>>, vector<16x512xf32>
    tpu.vector_store %arg14[%c128, %c0_19], %40 {strides = array<i32>} : memref<144x512xf32, #tpu.memory_space<vmem>>, vector<16x512xf32>,
    %c0_20 = arith.constant 0 : index
    %c0_21 = arith.constant 0 : index
    %42 = vector.load %arg1[%c0_20, %c0_21] : memref<16x144xf32, #tpu.memory_space<vmem>>, vector<16x144xf32>
    %c0_22 = arith.constant 0 : index
    %c0_23 = arith.constant 0 : index
    %43 = vector.load %arg14[%c0_22, %c0_23] : memref<144x512xf32, #tpu.memory_space<vmem>>, vector<144x512xf32>
    %cst = arith.constant dense<0.000000e+00> : vector<16x512xf32>
    %44 = tpu.matmul %42, %43, %cst {dimension_numbers = #tpu.dot_dimension_numbers<[1], [0], [0], [1], [0, 0, 1, 1], [], []>} : vector<16x144xf32>, vector<144x512xf32>, vector<16x512xf32> -> vector<16x512xf32>
    %c0_24 = arith.constant 0 : index
    %c0_25 = arith.constant 0 : index
    %45 = vector.load %arg2[%c0_24, %c0_25] : memref<16x1xf32, #tpu.memory_space<vmem>>, vector<16x1xf32>
    %c0_26 = arith.constant 0 : index
    %c0_27 = arith.constant 0 : index
    %46 = vector.load %arg3[%c0_26, %c0_27] : memref<16x1xf32, #tpu.memory_space<vmem>>, vector<16x1xf32>
    %47 = arith.mulf %44, %44 : vector<16x512xf32>
    %48 = tpu.concatenate %44, %47 in 0 : vector<16x512xf32>, vector<16x512xf32> -> vector<32x512xf32>
    %c0_28 = arith.constant 0 : index
    %c0_29 = arith.constant 0 : index
    %49 = vector.load %arg10[%c0_28, %c0_29] : memref<512x1xf32, #tpu.memory_space<vmem>>, vector<512x1xf32>
    %cst_30 = arith.constant dense<0.000000e+00> : vector<32x1xf32>
    %50 = tpu.matmul %48, %49, %cst_30 {dimension_numbers = #tpu.dot_dimension_numbers<[1], [0], [0], [1], [0, 0, 1, 1], [], []>} : vector<32x512xf32>, vector<512x1xf32>, vector<32x1xf32> -> vector<32x1xf32>
    %51 = vector.extract_strided_slice %50 {offsets = [0, 0], sizes = [16, 1], strides = [1, 1]} : vector<32x1xf32> to vector<16x1xf32>
    %52 = vector.extract_strided_slice %50 {offsets = [16, 0], sizes = [16, 1], strides = [1, 1]} : vector<32x1xf32> to vector<16x1xf32>
    %53 = arith.mulf %51, %51 : vector<16x1xf32>
    %54 = arith.subf %52, %53 : vector<16x1xf32>
    %cst_31 = arith.constant 9.99999974E-6 : f32
    %55 = vector.broadcast %cst_31 : f32 to vector<16x1xf32>
    %56 = arith.addf %54, %55 : vector<16x1xf32>
    %57 = math.rsqrt %56 : vector<16x1xf32>
    %58 = arith.mulf %45, %57 : vector<16x1xf32>
    %59 = arith.mulf %51, %58 : vector<16x1xf32>
    %60 = arith.subf %46, %59 : vector<16x1xf32>
    %61 = vector.broadcast %58 : vector<16x1xf32> to vector<16x512xf32>
    %62 = arith.mulf %44, %61 : vector<16x512xf32>
    %63 = vector.broadcast %60 : vector<16x1xf32> to vector<16x512xf32>
    %64 = arith.addf %62, %63 : vector<16x512xf32>
    %cst_32 = arith.constant 0.000000e+00 : f32
    %65 = vector.broadcast %cst_32 : f32 to vector<16x512xf32>
    %66 = arith.maximumf %64, %65 : vector<16x512xf32>
    %c17_i32_33 = arith.constant 17 : i32
    %67 = tpu.dynamic_rotate %66 by %c17_i32_33 dim 1 : vector<16x512xf32>, i32 -> vector<16x512xf32>
    %c0_34 = arith.constant 0 : index
    %c0_35 = arith.constant 0 : index
    %68 = vector.load %arg9[%c0_34, %c0_35] : memref<8x512xf32, #tpu.memory_space<vmem>>, vector<1x512xf32>
    %69 = vector.broadcast %68 : vector<1x512xf32> to vector<16x512xf32>
    %70 = arith.mulf %67, %69 : vector<16x512xf32>
    %c0_36 = arith.constant 0 : index
    %c0_37 = arith.constant 0 : index
    %71 = vector.load %arg14[%c0_36, %c0_37] : memref<144x512xf32, #tpu.memory_space<vmem>>, vector<16x512xf32>
    tpu.vector_store %arg14[%c0_36, %c0_37], %70 {strides = array<i32>} : memref<144x512xf32, #tpu.memory_space<vmem>>, vector<16x512xf32>,
    %c16_i32_38 = arith.constant 16 : i32
    %72 = tpu.dynamic_rotate %66 by %c16_i32_38 dim 1 : vector<16x512xf32>, i32 -> vector<16x512xf32>
    %c1_39 = arith.constant 1 : index
    %c0_40 = arith.constant 0 : index
    %73 = vector.load %arg9[%c1_39, %c0_40] : memref<8x512xf32, #tpu.memory_space<vmem>>, vector<1x512xf32>
    %74 = vector.broadcast %73 : vector<1x512xf32> to vector<16x512xf32>
    %75 = arith.mulf %72, %74 : vector<16x512xf32>
    %c16_41 = arith.constant 16 : index
    %c0_42 = arith.constant 0 : index
    %76 = vector.load %arg14[%c16_41, %c0_42] : memref<144x512xf32, #tpu.memory_space<vmem>>, vector<16x512xf32>
    tpu.vector_store %arg14[%c16_41, %c0_42], %75 {strides = array<i32>} : memref<144x512xf32, #tpu.memory_space<vmem>>, vector<16x512xf32>,
    %c15_i32_43 = arith.constant 15 : i32
    %77 = tpu.dynamic_rotate %66 by %c15_i32_43 dim 1 : vector<16x512xf32>, i32 -> vector<16x512xf32>
    %c2_44 = arith.constant 2 : index
    %c0_45 = arith.constant 0 : index
    %78 = vector.load %arg9[%c2_44, %c0_45] : memref<8x512xf32, #tpu.memory_space<vmem>>, vector<1x512xf32>
    %79 = vector.broadcast %78 : vector<1x512xf32> to vector<16x512xf32>
    %80 = arith.mulf %77, %79 : vector<16x512xf32>
    %c32_46 = arith.constant 32 : index
    %c0_47 = arith.constant 0 : index
    %81 = vector.load %arg14[%c32_46, %c0_47] : memref<144x512xf32, #tpu.memory_space<vmem>>, vector<16x512xf32>
    tpu.vector_store %arg14[%c32_46, %c0_47], %80 {strides = array<i32>} : memref<144x512xf32, #tpu.memory_space<vmem>>, vector<16x512xf32>,
    %c1_i32_48 = arith.constant 1 : i32
    %82 = tpu.dynamic_rotate %66 by %c1_i32_48 dim 1 : vector<16x512xf32>, i32 -> vector<16x512xf32>
    %c3_49 = arith.constant 3 : index
    %c0_50 = arith.constant 0 : index
    %83 = vector.load %arg9[%c3_49, %c0_50] : memref<8x512xf32, #tpu.memory_space<vmem>>, vector<1x512xf32>
    %84 = vector.broadcast %83 : vector<1x512xf32> to vector<16x512xf32>
    %85 = arith.mulf %82, %84 : vector<16x512xf32>
    %c48_51 = arith.constant 48 : index
    %c0_52 = arith.constant 0 : index
    %86 = vector.load %arg14[%c48_51, %c0_52] : memref<144x512xf32, #tpu.memory_space<vmem>>, vector<16x512xf32>
    tpu.vector_store %arg14[%c48_51, %c0_52], %85 {strides = array<i32>} : memref<144x512xf32, #tpu.memory_space<vmem>>, vector<16x512xf32>,
    %c64_53 = arith.constant 64 : index
    %c0_54 = arith.constant 0 : index
    %87 = vector.load %arg14[%c64_53, %c0_54] : memref<144x512xf32, #tpu.memory_space<vmem>>, vector<16x512xf32>
    tpu.vector_store %arg14[%c64_53, %c0_54], %66 {strides = array<i32>} : memref<144x512xf32, #tpu.memory_space<vmem>>, vector<16x512xf32>,
    %c511_i32_55 = arith.constant 511 : i32
    %88 = tpu.dynamic_rotate %66 by %c511_i32_55 dim 1 : vector<16x512xf32>, i32 -> vector<16x512xf32>
    %c4_56 = arith.constant 4 : index
    %c0_57 = arith.constant 0 : index
    %89 = vector.load %arg9[%c4_56, %c0_57] : memref<8x512xf32, #tpu.memory_space<vmem>>, vector<1x512xf32>
    %90 = vector.broadcast %89 : vector<1x512xf32> to vector<16x512xf32>
    %91 = arith.mulf %88, %90 : vector<16x512xf32>
    %c80_58 = arith.constant 80 : index
    %c0_59 = arith.constant 0 : index
    %92 = vector.load %arg14[%c80_58, %c0_59] : memref<144x512xf32, #tpu.memory_space<vmem>>, vector<16x512xf32>
    tpu.vector_store %arg14[%c80_58, %c0_59], %91 {strides = array<i32>} : memref<144x512xf32, #tpu.memory_space<vmem>>, vector<16x512xf32>,
    %c497_i32_60 = arith.constant 497 : i32
    %93 = tpu.dynamic_rotate %66 by %c497_i32_60 dim 1 : vector<16x512xf32>, i32 -> vector<16x512xf32>
    %c5_61 = arith.constant 5 : index
    %c0_62 = arith.constant 0 : index
    %94 = vector.load %arg9[%c5_61, %c0_62] : memref<8x512xf32, #tpu.memory_space<vmem>>, vector<1x512xf32>
    %95 = vector.broadcast %94 : vector<1x512xf32> to vector<16x512xf32>
    %96 = arith.mulf %93, %95 : vector<16x512xf32>
    %c96_63 = arith.constant 96 : index
    %c0_64 = arith.constant 0 : index
    %97 = vector.load %arg14[%c96_63, %c0_64] : memref<144x512xf32, #tpu.memory_space<vmem>>, vector<16x512xf32>
    tpu.vector_store %arg14[%c96_63, %c0_64], %96 {strides = array<i32>} : memref<144x512xf32, #tpu.memory_space<vmem>>, vector<16x512xf32>,
    %c496_i32_65 = arith.constant 496 : i32
    %98 = tpu.dynamic_rotate %66 by %c496_i32_65 dim 1 : vector<16x512xf32>, i32 -> vector<16x512xf32>
    %c6_66 = arith.constant 6 : index
    %c0_67 = arith.constant 0 : index
    %99 = vector.load %arg9[%c6_66, %c0_67] : memref<8x512xf32, #tpu.memory_space<vmem>>, vector<1x512xf32>
    %100 = vector.broadcast %99 : vector<1x512xf32> to vector<16x512xf32>
    %101 = arith.mulf %98, %100 : vector<16x512xf32>
    %c112_68 = arith.constant 112 : index
    %c0_69 = arith.constant 0 : index
    %102 = vector.load %arg14[%c112_68, %c0_69] : memref<144x512xf32, #tpu.memory_space<vmem>>, vector<16x512xf32>
    tpu.vector_store %arg14[%c112_68, %c0_69], %101 {strides = array<i32>} : memref<144x512xf32, #tpu.memory_space<vmem>>, vector<16x512xf32>,
    %c495_i32_70 = arith.constant 495 : i32
    %103 = tpu.dynamic_rotate %66 by %c495_i32_70 dim 1 : vector<16x512xf32>, i32 -> vector<16x512xf32>
    %c7_71 = arith.constant 7 : index
    %c0_72 = arith.constant 0 : index
    %104 = vector.load %arg9[%c7_71, %c0_72] : memref<8x512xf32, #tpu.memory_space<vmem>>, vector<1x512xf32>
    %105 = vector.broadcast %104 : vector<1x512xf32> to vector<16x512xf32>
    %106 = arith.mulf %103, %105 : vector<16x512xf32>
    %c128_73 = arith.constant 128 : index
    %c0_74 = arith.constant 0 : index
    %107 = vector.load %arg14[%c128_73, %c0_74] : memref<144x512xf32, #tpu.memory_space<vmem>>, vector<16x512xf32>
    tpu.vector_store %arg14[%c128_73, %c0_74], %106 {strides = array<i32>} : memref<144x512xf32, #tpu.memory_space<vmem>>, vector<16x512xf32>,
    %c0_75 = arith.constant 0 : index
    %c0_76 = arith.constant 0 : index
    %108 = vector.load %arg4[%c0_75, %c0_76] : memref<16x144xf32, #tpu.memory_space<vmem>>, vector<16x144xf32>
    %c0_77 = arith.constant 0 : index
    %c0_78 = arith.constant 0 : index
    %109 = vector.load %arg14[%c0_77, %c0_78] : memref<144x512xf32, #tpu.memory_space<vmem>>, vector<144x512xf32>
    %cst_79 = arith.constant dense<0.000000e+00> : vector<16x512xf32>
    %110 = tpu.matmul %108, %109, %cst_79 {dimension_numbers = #tpu.dot_dimension_numbers<[1], [0], [0], [1], [0, 0, 1, 1], [], []>} : vector<16x144xf32>, vector<144x512xf32>, vector<16x512xf32> -> vector<16x512xf32>
    %c0_80 = arith.constant 0 : index
    %c0_81 = arith.constant 0 : index
    %111 = vector.load %arg5[%c0_80, %c0_81] : memref<16x1xf32, #tpu.memory_space<vmem>>, vector<16x1xf32>
    %c0_82 = arith.constant 0 : index
    %c0_83 = arith.constant 0 : index
    %112 = vector.load %arg6[%c0_82, %c0_83] : memref<16x1xf32, #tpu.memory_space<vmem>>, vector<16x1xf32>
    %113 = arith.mulf %110, %110 : vector<16x512xf32>
    %114 = tpu.concatenate %110, %113 in 0 : vector<16x512xf32>, vector<16x512xf32> -> vector<32x512xf32>
    %c0_84 = arith.constant 0 : index
    %c0_85 = arith.constant 0 : index
    %115 = vector.load %arg10[%c0_84, %c0_85] : memref<512x1xf32, #tpu.memory_space<vmem>>, vector<512x1xf32>
    %cst_86 = arith.constant dense<0.000000e+00> : vector<32x1xf32>
    %116 = tpu.matmul %114, %115, %cst_86 {dimension_numbers = #tpu.dot_dimension_numbers<[1], [0], [0], [1], [0, 0, 1, 1], [], []>} : vector<32x512xf32>, vector<512x1xf32>, vector<32x1xf32> -> vector<32x1xf32>
    %117 = vector.extract_strided_slice %116 {offsets = [0, 0], sizes = [16, 1], strides = [1, 1]} : vector<32x1xf32> to vector<16x1xf32>
    %118 = vector.extract_strided_slice %116 {offsets = [16, 0], sizes = [16, 1], strides = [1, 1]} : vector<32x1xf32> to vector<16x1xf32>
    %119 = arith.mulf %117, %117 : vector<16x1xf32>
    %120 = arith.subf %118, %119 : vector<16x1xf32>
    %cst_87 = arith.constant 9.99999974E-6 : f32
    %121 = vector.broadcast %cst_87 : f32 to vector<16x1xf32>
    %122 = arith.addf %120, %121 : vector<16x1xf32>
    %123 = math.rsqrt %122 : vector<16x1xf32>
    %124 = arith.mulf %111, %123 : vector<16x1xf32>
    %125 = arith.mulf %117, %124 : vector<16x1xf32>
    %126 = arith.subf %112, %125 : vector<16x1xf32>
    %127 = vector.broadcast %124 : vector<16x1xf32> to vector<16x512xf32>
    %128 = arith.mulf %110, %127 : vector<16x512xf32>
    %129 = vector.broadcast %126 : vector<16x1xf32> to vector<16x512xf32>
    %130 = arith.addf %128, %129 : vector<16x512xf32>
    %c0_88 = arith.constant 0 : index
    %c0_89 = arith.constant 0 : index
    %131 = vector.load %arg11[%c0_88, %c0_89] : memref<512x2xf32, #tpu.memory_space<vmem>>, vector<512x2xf32>
    %cst_90 = arith.constant dense<0.000000e+00> : vector<16x2xf32>
    %132 = tpu.matmul %130, %131, %cst_90 {dimension_numbers = #tpu.dot_dimension_numbers<[1], [0], [0], [1], [0, 0, 1, 1], [], []>} : vector<16x512xf32>, vector<512x2xf32>, vector<16x2xf32> -> vector<16x2xf32>
    %c0_91 = arith.constant 0 : index
    %c0_92 = arith.constant 0 : index
    %133 = vector.load %arg7[%c0_91, %c0_92] : memref<4x16xf32, #tpu.memory_space<vmem>>, vector<4x16xf32>
    %cst_93 = arith.constant dense<0.000000e+00> : vector<4x2xf32>
    %134 = tpu.matmul %133, %132, %cst_93 {dimension_numbers = #tpu.dot_dimension_numbers<[1], [0], [0], [1], [0, 0, 1, 1], [], []>} : vector<4x16xf32>, vector<16x2xf32>, vector<4x2xf32> -> vector<4x2xf32>
    %cst_94 = arith.constant 0.000000e+00 : f32
    %135 = vector.broadcast %cst_94 : f32 to vector<4x2xf32>
    %136 = arith.maximumf %134, %135 : vector<4x2xf32>
    %c0_95 = arith.constant 0 : index
    %c0_96 = arith.constant 0 : index
    %137 = vector.load %arg8[%c0_95, %c0_96] : memref<16x4xf32, #tpu.memory_space<vmem>>, vector<16x4xf32>
    %cst_97 = arith.constant dense<0.000000e+00> : vector<16x2xf32>
    %138 = tpu.matmul %137, %136, %cst_97 {dimension_numbers = #tpu.dot_dimension_numbers<[1], [0], [0], [1], [0, 0, 1, 1], [], []>} : vector<16x4xf32>, vector<4x2xf32>, vector<16x2xf32> -> vector<16x2xf32>
    %139 = arith.negf %138 : vector<16x2xf32>
    %140 = math.exp %139 : vector<16x2xf32>
    %cst_98 = arith.constant 1.000000e+00 : f32
    %141 = vector.broadcast %cst_98 : f32 to vector<16x2xf32>
    %142 = arith.addf %141, %140 : vector<16x2xf32>
    %143 = arith.divf %141, %142 : vector<16x2xf32>
    %c0_99 = arith.constant 0 : index
    %c0_100 = arith.constant 0 : index
    %144 = vector.load %arg12[%c0_99, %c0_100] : memref<2x512xf32, #tpu.memory_space<vmem>>, vector<2x512xf32>
    %cst_101 = arith.constant dense<0.000000e+00> : vector<16x512xf32>
    %145 = tpu.matmul %143, %144, %cst_101 {dimension_numbers = #tpu.dot_dimension_numbers<[1], [0], [0], [1], [0, 0, 1, 1], [], []>} : vector<16x2xf32>, vector<2x512xf32>, vector<16x512xf32> -> vector<16x512xf32>
    %146 = arith.mulf %130, %145 : vector<16x512xf32>
    %147 = arith.addf %146, %0 : vector<16x512xf32>
    %cst_102 = arith.constant 0.000000e+00 : f32
    %148 = vector.broadcast %cst_102 : f32 to vector<16x512xf32>
    %149 = arith.maximumf %147, %148 : vector<16x512xf32>
    %c0_103 = arith.constant 0 : index
    %c0_104 = arith.constant 0 : index
    %150 = vector.load %arg13[%c0_103, %c0_104] : memref<16x512xf32, #tpu.memory_space<vmem>>, vector<16x512xf32>
    tpu.vector_store %arg13[%c0_103, %c0_104], %149 {strides = array<i32>} : memref<16x512xf32, #tpu.memory_space<vmem>>, vector<16x512xf32>,
    return
  }
}

</mosaic_0001>

<llo_original>
// kernel: tpu_custom_call.1
$region0: #{tpu_custom_call.1}
  #allocation0 [shape = 'u32[]', space=smem, size = 0x4, offset = 0x4, fixed_abs, tag = 'smem constant byte address 0x4 - core index']
  #allocation1 [shape = 'u32[144,128]{1,0:T(1,128)}', space=vmem, size = 0x12000, scoped, tag = 'internal scratch']
  #allocation2 [shape = 'f32[144,512]{1,0:T(8,128)}', space=vmem, size = 0x48000, scoped, tag = 'scratch operand']
  %s0 = inlined_call_operand.vmem [shape: f32[16,512], index: 0, kind: input, shape index: {}]
  %s1 = inlined_call_operand.vmem [shape: f32[16,144], index: 1, kind: input, shape index: {}]
  %s2 = inlined_call_operand.vmem [shape: f32[16,1], index: 2, kind: input, shape index: {}]
  %s3 = inlined_call_operand.vmem [shape: f32[16,1], index: 3, kind: input, shape index: {}]
  %s4 = inlined_call_operand.vmem [shape: f32[16,144], index: 4, kind: input, shape index: {}]
  %s5 = inlined_call_operand.vmem [shape: f32[16,1], index: 5, kind: input, shape index: {}]
  %s6 = inlined_call_operand.vmem [shape: f32[16,1], index: 6, kind: input, shape index: {}]
  %s7 = inlined_call_operand.vmem [shape: f32[4,16], index: 7, kind: input, shape index: {}]
  %s8 = inlined_call_operand.vmem [shape: f32[16,4], index: 8, kind: input, shape index: {}]
  %s9 = inlined_call_operand.vmem [shape: f32[8,512], index: 9, kind: input, shape index: {}]
  %s10 = inlined_call_operand.vmem [shape: f32[512,1], index: 10, kind: input, shape index: {}]
  %s11 = inlined_call_operand.vmem [shape: f32[512,2], index: 11, kind: input, shape index: {}]
  %s12 = inlined_call_operand.vmem [shape: f32[2,512], index: 12, kind: input, shape index: {}]
  %s13 = inlined_call_operand.hbm [shape: f32[16,512], index: 13, kind: output, shape index: {}]
  %s14 = sld [smem:[#allocation0]]
  $region62: #{tpu_custom_call.1} parent=0
    _
  %s16 = ssub.s32 1, %s14
  %s17 = scalar_select 0, %s16, %s14
  $region1: #{tpu_custom_call.1} parent=0
    #allocation3 [shape = 'u8[32768]{0}', space=vmem, size = 0x8000, scoped, tag = 'output window, operand 0, single buffered']
    #allocation4 [shape = 's32[1]{0}', space=sflag, size = 0x4, scoped, tag = 'scoped memory for tpu_custom_call.1']
    %18 = vsyncpa [#allocation4], 0
    // Predicated region
    $region2: #{tpu_custom_call.1} parent=1 // pred_check
      _
    $region3: #{tpu_custom_call.1} parent=1 // pred_check_branch
      %20 = sbr.rel (0) target = $region5
    $region4: #{tpu_custom_call.1} parent=1 // pred_region
      _
    $region5: #{tpu_custom_call.1} parent=1 // pred_fallthru
      _
    // Predicated region
    $region6: #{tpu_custom_call.1} parent=1 // pred_check
      _
    $region7: #{tpu_custom_call.1} parent=1 // pred_check_branch
      %22 = sbr.rel (0) target = $region9
    $region8: #{tpu_custom_call.1} parent=1 // pred_region
      _
    $region9: #{tpu_custom_call.1} parent=1 // pred_fallthru
      _
    // Predicated region
    $region10: #{tpu_custom_call.1} parent=1 // pred_check
      _
    $region11: #{tpu_custom_call.1} parent=1 // pred_check_branch
      %24 = sbr.rel (0) target = $region13
    $region12: #{tpu_custom_call.1} parent=1 // pred_region
      _
    $region13: #{tpu_custom_call.1} parent=1 // pred_fallthru
      _
    // Predicated region
    $region14: #{tpu_custom_call.1} parent=1 // pred_check
      _
    $region15: #{tpu_custom_call.1} parent=1 // pred_check_branch
      %26 = sbr.rel (0) target = $region17
    $region16: #{tpu_custom_call.1} parent=1 // pred_region
      _
    $region17: #{tpu_custom_call.1} parent=1 // pred_fallthru
      _
    // Predicated region
    $region18: #{tpu_custom_call.1} parent=1 // pred_check
      _
    $region19: #{tpu_custom_call.1} parent=1 // pred_check_branch
      %28 = sbr.rel (0) target = $region21
    $region20: #{tpu_custom_call.1} parent=1 // pred_region
      _
    $region21: #{tpu_custom_call.1} parent=1 // pred_fallthru
      _
    // Predicated region
    $region22: #{tpu_custom_call.1} parent=1 // pred_check
      _
    $region23: #{tpu_custom_call.1} parent=1 // pred_check_branch
      %30 = sbr.rel (0) target = $region25
    $region24: #{tpu_custom_call.1} parent=1 // pred_region
      _
    $region25: #{tpu_custom_call.1} parent=1 // pred_fallthru
      _
    // Predicated region
    $region26: #{tpu_custom_call.1} parent=1 // pred_check
      _
    $region27: #{tpu_custom_call.1} parent=1 // pred_check_branch
      %32 = sbr.rel (0) target = $region29
    $region28: #{tpu_custom_call.1} parent=1 // pred_region
      _
    $region29: #{tpu_custom_call.1} parent=1 // pred_fallthru
      _
    // Predicated region
    $region30: #{tpu_custom_call.1} parent=1 // pred_check
      _
    $region31: #{tpu_custom_call.1} parent=1 // pred_check_branch
      %34 = sbr.rel (0) target = $region33
    $region32: #{tpu_custom_call.1} parent=1 // pred_region
      _
    $region33: #{tpu_custom_call.1} parent=1 // pred_fallthru
      _
    // Predicated region
    $region34: #{tpu_custom_call.1} parent=1 // pred_check
      _
    $region35: #{tpu_custom_call.1} parent=1 // pred_check_branch
      %36 = sbr.rel (0) target = $region37
    $region36: #{tpu_custom_call.1} parent=1 // pred_region
      _
    $region37: #{tpu_custom_call.1} parent=1 // pred_fallthru
      _
    // Predicated region
    $region38: #{tpu_custom_call.1} parent=1 // pred_check
      _
    $region39: #{tpu_custom_call.1} parent=1 // pred_check_branch
      %38 = sbr.rel (0) target = $region41
    $region40: #{tpu_custom_call.1} parent=1 // pred_region
      _
    $region41: #{tpu_custom_call.1} parent=1 // pred_fallthru
      _
    // Predicated region
    $region42: #{tpu_custom_call.1} parent=1 // pred_check
      _
    $region43: #{tpu_custom_call.1} parent=1 // pred_check_branch
      %40 = sbr.rel (0) target = $region45
    $region44: #{tpu_custom_call.1} parent=1 // pred_region
      _
    $region45: #{tpu_custom_call.1} parent=1 // pred_fallthru
      _
    // Predicated region
    $region46: #{tpu_custom_call.1} parent=1 // pred_check
      _
    $region47: #{tpu_custom_call.1} parent=1 // pred_check_branch
      %42 = sbr.rel (0) target = $region49
    $region48: #{tpu_custom_call.1} parent=1 // pred_region
      _
    $region49: #{tpu_custom_call.1} parent=1 // pred_fallthru
      _
    // Predicated region
    $region50: #{tpu_custom_call.1} parent=1 // pred_check
      _
    $region51: #{tpu_custom_call.1} parent=1 // pred_check_branch
      %44 = sbr.rel (0) target = $region53
    $region52: #{tpu_custom_call.1} parent=1 // pred_region
      _
    $region53: #{tpu_custom_call.1} parent=1 // pred_fallthru
      _
    %v45 = vld [vmem:[%s0] sm:$0xff]
    %v46 = vld [vmem:[%s0 + $0x8] sm:$0xff]
    %v47 = vld [vmem:[%s0 + $0x10] sm:$0xff]
    %v48 = vld [vmem:[%s0 + $0x18] sm:$0xff]
    %v49 = vld [vmem:[%s0 + $0x20] sm:$0xff]
    %v50 = vld [vmem:[%s0 + $0x28] sm:$0xff]
    %v51 = vld [vmem:[%s0 + $0x30] sm:$0xff]
    %v52 = vld [vmem:[%s0 + $0x38] sm:$0xff]
    %53 = vrot.lane.b32.xlu0 %v45, 17
    %v54 = vpop.permute.xlu0 %53
    %55 = vrot.lane.b32.xlu0 %v49, 17
    %v56 = vpop.permute.xlu0 %55
    %57 = vrot.lane.b32.xlu0 %v46, 17
    %v58 = vpop.permute.xlu0 %57
    %59 = vrot.lane.b32.xlu0 %v50, 17
    %v60 = vpop.permute.xlu0 %59
    %61 = vrot.lane.b32.xlu0 %v47, 17
    %v62 = vpop.permute.xlu0 %61
    %63 = vrot.lane.b32.xlu0 %v51, 17
    %v64 = vpop.permute.xlu0 %63
    %65 = vrot.lane.b32.xlu0 %v48, 17
    %v66 = vpop.permute.xlu0 %65
    %67 = vrot.lane.b32.xlu0 %v52, 17
    %v68 = vpop.permute.xlu0 %67
    %v69 = vlaneseq
    %v70 = vand.u32 %v69, 127
    %vm71 = vcmp.lt.s32.totalorder %v70, 17
    %v72 = vsel %vm71, %v62, %v66
    %v73 = vsel %vm71, %v64, %v68
    %v74 = vsel %vm71, %v58, %v62
    %v75 = vsel %vm71, %v60, %v64
    %v76 = vsel %vm71, %v54, %v58
    %v77 = vsel %vm71, %v56, %v60
    %v78 = vsel %vm71, %v66, %v54
    %v79 = vsel %vm71, %v68, %v56
    %v80 = vld [vmem:[%s9] ss:$8 sm:$0xf]
    %v82 = vlaneseq
    %v83 = vshrl.u32 %v82, 7
    %v84 = vsub.s32 0, %v83
    %v85 = vrot.slane %v80, %v84
    %v86 = vlaneseq
    %v87 = vshrl.u32 %v86, 7
    %v88 = vsub.s32 1, %v87
    %v89 = vrot.slane %v80, %v88
    %v90 = vlaneseq
    %v91 = vshrl.u32 %v90, 7
    %v92 = vsub.s32 2, %v91
    %v93 = vrot.slane %v80, %v92
    %v94 = vlaneseq
    %v95 = vshrl.u32 %v94, 7
    %v96 = vsub.s32 3, %v95
    %v97 = vrot.slane %v80, %v96
    %v102 = vmul.f32 %v78, %v85
    %v103 = vmul.f32 %v76, %v89
    %v104 = vmul.f32 %v74, %v93
    %v105 = vmul.f32 %v72, %v97
    %v106 = vmul.f32 %v79, %v85
    %v107 = vmul.f32 %v77, %v89
    %v108 = vmul.f32 %v75, %v93
    %v109 = vmul.f32 %v73, %v97
    %110 = vst [vmem:[#allocation2] sm:$0xff] %v102
    %111 = vst [vmem:[#allocation2 + $0x8] sm:$0xff] %v103
    %112 = vst [vmem:[#allocation2 + $0x10] sm:$0xff] %v104
    %113 = vst [vmem:[#allocation2 + $0x18] sm:$0xff] %v105
    %114 = vst [vmem:[#allocation2 + $0x20] sm:$0xff] %v106
    %115 = vst [vmem:[#allocation2 + $0x28] sm:$0xff] %v107
    %116 = vst [vmem:[#allocation2 + $0x30] sm:$0xff] %v108
    %117 = vst [vmem:[#allocation2 + $0x38] sm:$0xff] %v109
    %118 = vrot.lane.b32.xlu0 %v45, 16
    %v119 = vpop.permute.xlu0 %118
    %120 = vrot.lane.b32.xlu0 %v49, 16
    %v121 = vpop.permute.xlu0 %120
    %122 = vrot.lane.b32.xlu0 %v46, 16
    %v123 = vpop.permute.xlu0 %122
    %124 = vrot.lane.b32.xlu0 %v50, 16
    %v125 = vpop.permute.xlu0 %124
    %126 = vrot.lane.b32.xlu0 %v47, 16
    %v127 = vpop.permute.xlu0 %126
    %128 = vrot.lane.b32.xlu0 %v51, 16
    %v129 = vpop.permute.xlu0 %128
    %130 = vrot.lane.b32.xlu0 %v48, 16
    %v131 = vpop.permute.xlu0 %130
    %132 = vrot.lane.b32.xlu0 %v52, 16
    %v133 = vpop.permute.xlu0 %132
    %vm134 = vcmp.lt.s32.totalorder %v70, 16
    %v135 = vsel %vm134, %v127, %v131
    %v136 = vsel %vm134, %v129, %v133
    %v137 = vsel %vm134, %v123, %v127
    %v138 = vsel %vm134, %v125, %v129
    %v139 = vsel %vm134, %v119, %v123
    %v140 = vsel %vm134, %v121, %v125
    %v141 = vsel %vm134, %v131, %v119
    %v142 = vsel %vm134, %v133, %v121
    %s143 = scalar_lea.vmem %s9, 1
    %v144 = vld [vmem:[%s143] ss:$8 sm:$0xf]
    %v146 = vlaneseq
    %v147 = vshrl.u32 %v146, 7
    %v148 = vsub.s32 0, %v147
    %v149 = vrot.slane %v144, %v148
    %v150 = vlaneseq
    %v151 = vshrl.u32 %v150, 7
    %v152 = vsub.s32 1, %v151
    %v153 = vrot.slane %v144, %v152
    %v154 = vlaneseq
    %v155 = vshrl.u32 %v154, 7
    %v156 = vsub.s32 2, %v155
    %v157 = vrot.slane %v144, %v156
    %v158 = vlaneseq
    %v159 = vshrl.u32 %v158, 7
    %v160 = vsub.s32 3, %v159
    %v161 = vrot.slane %v144, %v160
    %v166 = vmul.f32 %v141, %v149
    %v167 = vmul.f32 %v139, %v153
    %v168 = vmul.f32 %v137, %v157
    %v169 = vmul.f32 %v135, %v161
    %v170 = vmul.f32 %v142, %v149
    %v171 = vmul.f32 %v140, %v153
    %v172 = vmul.f32 %v138, %v157
    %v173 = vmul.f32 %v136, %v161
    %174 = vst [vmem:[#allocation2 + $0x40] sm:$0xff] %v166
    %175 = vst [vmem:[#allocation2 + $0x48] sm:$0xff] %v167
    %176 = vst [vmem:[#allocation2 + $0x50] sm:$0xff] %v168
    %177 = vst [vmem:[#allocation2 + $0x58] sm:$0xff] %v169
    %178 = vst [vmem:[#allocation2 + $0x60] sm:$0xff] %v170
    %179 = vst [vmem:[#allocation2 + $0x68] sm:$0xff] %v171
    %180 = vst [vmem:[#allocation2 + $0x70] sm:$0xff] %v172
    %181 = vst [vmem:[#allocation2 + $0x78] sm:$0xff] %v173
    %182 = vrot.lane.b32.xlu0 %v45, 15
    %v183 = vpop.permute.xlu0 %182
    %184 = vrot.lane.b32.xlu0 %v49, 15
    %v185 = vpop.permute.xlu0 %184
    %186 = vrot.lane.b32.xlu0 %v46, 15
    %v187 = vpop.permute.xlu0 %186
    %188 = vrot.lane.b32.xlu0 %v50, 15
    %v189 = vpop.permute.xlu0 %188
    %190 = vrot.lane.b32.xlu0 %v47, 15
    %v191 = vpop.permute.xlu0 %190
    %192 = vrot.lane.b32.xlu0 %v51, 15
    %v193 = vpop.permute.xlu0 %192
    %194 = vrot.lane.b32.xlu0 %v48, 15
    %v195 = vpop.permute.xlu0 %194
    %196 = vrot.lane.b32.xlu0 %v52, 15
    %v197 = vpop.permute.xlu0 %196
    %vm198 = vcmp.lt.s32.totalorder %v70, 15
    %v199 = vsel %vm198, %v191, %v195
    %v200 = vsel %vm198, %v193, %v197
    %v201 = vsel %vm198, %v187, %v191
    %v202 = vsel %vm198, %v189, %v193
    %v203 = vsel %vm198, %v183, %v187
    %v204 = vsel %vm198, %v185, %v189
    %v205 = vsel %vm198, %v195, %v183
    %v206 = vsel %vm198, %v197, %v185
    %s207 = scalar_lea.vmem %s9, 2
    %v208 = vld [vmem:[%s207] ss:$8 sm:$0xf]
    %v210 = vlaneseq
    %v211 = vshrl.u32 %v210, 7
    %v212 = vsub.s32 0, %v211
    %v213 = vrot.slane %v208, %v212
    %v214 = vlaneseq
    %v215 = vshrl.u32 %v214, 7
    %v216 = vsub.s32 1, %v215
    %v217 = vrot.slane %v208, %v216
    %v218 = vlaneseq
    %v219 = vshrl.u32 %v218, 7
    %v220 = vsub.s32 2, %v219
    %v221 = vrot.slane %v208, %v220
    %v222 = vlaneseq
    %v223 = vshrl.u32 %v222, 7
    %v224 = vsub.s32 3, %v223
    %v225 = vrot.slane %v208, %v224
    %v230 = vmul.f32 %v205, %v213
    %v231 = vmul.f32 %v203, %v217
    %v232 = vmul.f32 %v201, %v221
    %v233 = vmul.f32 %v199, %v225
    %v234 = vmul.f32 %v206, %v213
    %v235 = vmul.f32 %v204, %v217
    %v236 = vmul.f32 %v202, %v221
    %v237 = vmul.f32 %v200, %v225
    %238 = vst [vmem:[#allocation2 + $0x80] sm:$0xff] %v230
    %239 = vst [vmem:[#allocation2 + $0x88] sm:$0xff] %v231
    %240 = vst [vmem:[#allocation2 + $0x90] sm:$0xff] %v232
    %241 = vst [vmem:[#allocation2 + $0x98] sm:$0xff] %v233
    %242 = vst [vmem:[#allocation2 + $0xa0] sm:$0xff] %v234
    %243 = vst [vmem:[#allocation2 + $0xa8] sm:$0xff] %v235
    %244 = vst [vmem:[#allocation2 + $0xb0] sm:$0xff] %v236
    %245 = vst [vmem:[#allocation2 + $0xb8] sm:$0xff] %v237
    %246 = vrot.lane.b32.xlu0 %v45, 1
    %v247 = vpop.permute.xlu0 %246
    %248 = vrot.lane.b32.xlu0 %v49, 1
    %v249 = vpop.permute.xlu0 %248
    %250 = vrot.lane.b32.xlu0 %v46, 1
    %v251 = vpop.permute.xlu0 %250
    %252 = vrot.lane.b32.xlu0 %v50, 1
    %v253 = vpop.permute.xlu0 %252
    %254 = vrot.lane.b32.xlu0 %v47, 1
    %v255 = vpop.permute.xlu0 %254
    %256 = vrot.lane.b32.xlu0 %v51, 1
    %v257 = vpop.permute.xlu0 %256
    %258 = vrot.lane.b32.xlu0 %v48, 1
    %v259 = vpop.permute.xlu0 %258
    %260 = vrot.lane.b32.xlu0 %v52, 1
    %v261 = vpop.permute.xlu0 %260
    %vm262 = vcmp.lt.s32.totalorder %v70, 1
    %v263 = vsel %vm262, %v255, %v259
    %v264 = vsel %vm262, %v257, %v261
    %v265 = vsel %vm262, %v251, %v255
    %v266 = vsel %vm262, %v253, %v257
    %v267 = vsel %vm262, %v247, %v251
    %v268 = vsel %vm262, %v249, %v253
    %v269 = vsel %vm262, %v259, %v247
    %v270 = vsel %vm262, %v261, %v249
    %s271 = scalar_lea.vmem %s9, 3
    %v272 = vld [vmem:[%s271] ss:$8 sm:$0xf]
    %v274 = vlaneseq
    %v275 = vshrl.u32 %v274, 7
    %v276 = vsub.s32 0, %v275
    %v277 = vrot.slane %v272, %v276
    %v278 = vlaneseq
    %v279 = vshrl.u32 %v278, 7
    %v280 = vsub.s32 1, %v279
    %v281 = vrot.slane %v272, %v280
    %v282 = vlaneseq
    %v283 = vshrl.u32 %v282, 7
    %v284 = vsub.s32 2, %v283
    %v285 = vrot.slane %v272, %v284
    %v286 = vlaneseq
    %v287 = vshrl.u32 %v286, 7
    %v288 = vsub.s32 3, %v287
    %v289 = vrot.slane %v272, %v288
    %v294 = vmul.f32 %v269, %v277
    %v295 = vmul.f32 %v267, %v281
    %v296 = vmul.f32 %v265, %v285
    %v297 = vmul.f32 %v263, %v289
    %v298 = vmul.f32 %v270, %v277
    %v299 = vmul.f32 %v268, %v281
    %v300 = vmul.f32 %v266, %v285
    %v301 = vmul.f32 %v264, %v289
    %302 = vst [vmem:[#allocation2 + $0xc0] sm:$0xff] %v294
    %303 = vst [vmem:[#allocation2 + $0xc8] sm:$0xff] %v295
    %304 = vst [vmem:[#allocation2 + $0xd0] sm:$0xff] %v296
    %305 = vst [vmem:[#allocation2 + $0xd8] sm:$0xff] %v297
    %306 = vst [vmem:[#allocation2 + $0xe0] sm:$0xff] %v298
    %307 = vst [vmem:[#allocation2 + $0xe8] sm:$0xff] %v299
    %308 = vst [vmem:[#allocation2 + $0xf0] sm:$0xff] %v300
    %309 = vst [vmem:[#allocation2 + $0xf8] sm:$0xff] %v301
    %310 = vst [vmem:[#allocation2 + $0x100] sm:$0xff] %v45
    %311 = vst [vmem:[#allocation2 + $0x108] sm:$0xff] %v46
    %312 = vst [vmem:[#allocation2 + $0x110] sm:$0xff] %v47
    %313 = vst [vmem:[#allocation2 + $0x118] sm:$0xff] %v48
    %314 = vst [vmem:[#allocation2 + $0x120] sm:$0xff] %v49
    %315 = vst [vmem:[#allocation2 + $0x128] sm:$0xff] %v50
    %316 = vst [vmem:[#allocation2 + $0x130] sm:$0xff] %v51
    %317 = vst [vmem:[#allocation2 + $0x138] sm:$0xff] %v52
    %318 = vrot.lane.b32.xlu0 %v45, 127
    %v319 = vpop.permute.xlu0 %318
    %320 = vrot.lane.b32.xlu0 %v49, 127
    %v321 = vpop.permute.xlu0 %320
    %322 = vrot.lane.b32.xlu0 %v46, 127
    %v323 = vpop.permute.xlu0 %322
    %324 = vrot.lane.b32.xlu0 %v50, 127
    %v325 = vpop.permute.xlu0 %324
    %326 = vrot.lane.b32.xlu0 %v47, 127
    %v327 = vpop.permute.xlu0 %326
    %328 = vrot.lane.b32.xlu0 %v51, 127
    %v329 = vpop.permute.xlu0 %328
    %330 = vrot.lane.b32.xlu0 %v48, 127
    %v331 = vpop.permute.xlu0 %330
    %332 = vrot.lane.b32.xlu0 %v52, 127
    %v333 = vpop.permute.xlu0 %332
    %vm334 = vcmp.lt.s32.totalorder %v70, 127
    %v335 = vsel %vm334, %v327, %v331
    %v336 = vsel %vm334, %v329, %v333
    %v337 = vsel %vm334, %v323, %v327
    %v338 = vsel %vm334, %v325, %v329
    %v339 = vsel %vm334, %v319, %v323
    %v340 = vsel %vm334, %v321, %v325
    %v341 = vsel %vm334, %v331, %v319
    %v342 = vsel %vm334, %v333, %v321
    %s343 = scalar_lea.vmem %s9, 4
    %v344 = vld [vmem:[%s343] ss:$8 sm:$0xf]
    %v346 = vlaneseq
    %v347 = vshrl.u32 %v346, 7
    %v348 = vsub.s32 0, %v347
    %v349 = vrot.slane %v344, %v348
    %v350 = vlaneseq
    %v351 = vshrl.u32 %v350, 7
    %v352 = vsub.s32 1, %v351
    %v353 = vrot.slane %v344, %v352
    %v354 = vlaneseq
    %v355 = vshrl.u32 %v354, 7
    %v356 = vsub.s32 2, %v355
    %v357 = vrot.slane %v344, %v356
    %v358 = vlaneseq
    %v359 = vshrl.u32 %v358, 7
    %v360 = vsub.s32 3, %v359
    %v361 = vrot.slane %v344, %v360
    %v366 = vmul.f32 %v339, %v349
    %v367 = vmul.f32 %v337, %v353
    %v368 = vmul.f32 %v335, %v357
    %v369 = vmul.f32 %v341, %v361
    %v370 = vmul.f32 %v340, %v349
    %v371 = vmul.f32 %v338, %v353
    %v372 = vmul.f32 %v336, %v357
    %v373 = vmul.f32 %v342, %v361
    %374 = vst [vmem:[#allocation2 + $0x140] sm:$0xff] %v366
    %375 = vst [vmem:[#allocation2 + $0x148] sm:$0xff] %v367
    %376 = vst [vmem:[#allocation2 + $0x150] sm:$0xff] %v368
    %377 = vst [vmem:[#allocation2 + $0x158] sm:$0xff] %v369
    %378 = vst [vmem:[#allocation2 + $0x160] sm:$0xff] %v370
    %379 = vst [vmem:[#allocation2 + $0x168] sm:$0xff] %v371
    %380 = vst [vmem:[#allocation2 + $0x170] sm:$0xff] %v372
    %381 = vst [vmem:[#allocation2 + $0x178] sm:$0xff] %v373
    %382 = vrot.lane.b32.xlu0 %v45, 113
    %v383 = vpop.permute.xlu0 %382
    %384 = vrot.lane.b32.xlu0 %v49, 113
    %v385 = vpop.permute.xlu0 %384
    %386 = vrot.lane.b32.xlu0 %v46, 113
    %v387 = vpop.permute.xlu0 %386
    %388 = vrot.lane.b32.xlu0 %v50, 113
    %v389 = vpop.permute.xlu0 %388
    %390 = vrot.lane.b32.xlu0 %v47, 113
    %v391 = vpop.permute.xlu0 %390
    %392 = vrot.lane.b32.xlu0 %v51, 113
    %v393 = vpop.permute.xlu0 %392
    %394 = vrot.lane.b32.xlu0 %v48, 113
    %v395 = vpop.permute.xlu0 %394
    %396 = vrot.lane.b32.xlu0 %v52, 113
    %v397 = vpop.permute.xlu0 %396
    %vm398 = vcmp.lt.s32.totalorder %v70, 113
    %v399 = vsel %vm398, %v391, %v395
    %v400 = vsel %vm398, %v393, %v397
    %v401 = vsel %vm398, %v387, %v391
    %v402 = vsel %vm398, %v389, %v393
    %v403 = vsel %vm398, %v383, %v387
    %v404 = vsel %vm398, %v385, %v389
    %v405 = vsel %vm398, %v395, %v383
    %v406 = vsel %vm398, %v397, %v385
    %s407 = scalar_lea.vmem %s9, 5
    %v408 = vld [vmem:[%s407] ss:$8 sm:$0xf]
    %v410 = vlaneseq
    %v411 = vshrl.u32 %v410, 7
    %v412 = vsub.s32 0, %v411
    %v413 = vrot.slane %v408, %v412
    %v414 = vlaneseq
    %v415 = vshrl.u32 %v414, 7
    %v416 = vsub.s32 1, %v415
    %v417 = vrot.slane %v408, %v416
    %v418 = vlaneseq
    %v419 = vshrl.u32 %v418, 7
    %v420 = vsub.s32 2, %v419
    %v421 = vrot.slane %v408, %v420
    %v422 = vlaneseq
    %v423 = vshrl.u32 %v422, 7
    %v424 = vsub.s32 3, %v423
    %v425 = vrot.slane %v408, %v424
    %v430 = vmul.f32 %v403, %v413
    %v431 = vmul.f32 %v401, %v417
    %v432 = vmul.f32 %v399, %v421
    %v433 = vmul.f32 %v405, %v425
    %v434 = vmul.f32 %v404, %v413
    %v435 = vmul.f32 %v402, %v417
    %v436 = vmul.f32 %v400, %v421
    %v437 = vmul.f32 %v406, %v425
    %438 = vst [vmem:[#allocation2 + $0x180] sm:$0xff] %v430
    %439 = vst [vmem:[#allocation2 + $0x188] sm:$0xff] %v431
    %440 = vst [vmem:[#allocation2 + $0x190] sm:$0xff] %v432
    %441 = vst [vmem:[#allocation2 + $0x198] sm:$0xff] %v433
    %442 = vst [vmem:[#allocation2 + $0x1a0] sm:$0xff] %v434
    %443 = vst [vmem:[#allocation2 + $0x1a8] sm:$0xff] %v435
    %444 = vst [vmem:[#allocation2 + $0x1b0] sm:$0xff] %v436
    %445 = vst [vmem:[#allocation2 + $0x1b8] sm:$0xff] %v437
    %446 = vrot.lane.b32.xlu0 %v45, 112
    %v447 = vpop.permute.xlu0 %446
    %448 = vrot.lane.b32.xlu0 %v49, 112
    %v449 = vpop.permute.xlu0 %448
    %450 = vrot.lane.b32.xlu0 %v46, 112
    %v451 = vpop.permute.xlu0 %450
    %452 = vrot.lane.b32.xlu0 %v50, 112
    %v453 = vpop.permute.xlu0 %452
    %454 = vrot.lane.b32.xlu0 %v47, 112
    %v455 = vpop.permute.xlu0 %454
    %456 = vrot.lane.b32.xlu0 %v51, 112
    %v457 = vpop.permute.xlu0 %456
    %458 = vrot.lane.b32.xlu0 %v48, 112
    %v459 = vpop.permute.xlu0 %458
    %460 = vrot.lane.b32.xlu0 %v52, 112
    %v461 = vpop.permute.xlu0 %460
    %vm462 = vcmp.lt.s32.totalorder %v70, 112
    %v463 = vsel %vm462, %v455, %v459
    %v464 = vsel %vm462, %v457, %v461
    %v465 = vsel %vm462, %v451, %v455
    %v466 = vsel %vm462, %v453, %v457
    %v467 = vsel %vm462, %v447, %v451
    %v468 = vsel %vm462, %v449, %v453
    %v469 = vsel %vm462, %v459, %v447
    %v470 = vsel %vm462, %v461, %v449
    %s471 = scalar_lea.vmem %s9, 6
    %v472 = vld [vmem:[%s471] ss:$8 sm:$0xf]
    %v474 = vlaneseq
    %v475 = vshrl.u32 %v474, 7
    %v476 = vsub.s32 0, %v475
    %v477 = vrot.slane %v472, %v476
    %v478 = vlaneseq
    %v479 = vshrl.u32 %v478, 7
    %v480 = vsub.s32 1, %v479
    %v481 = vrot.slane %v472, %v480
    %v482 = vlaneseq
    %v483 = vshrl.u32 %v482, 7
    %v484 = vsub.s32 2, %v483
    %v485 = vrot.slane %v472, %v484
    %v486 = vlaneseq
    %v487 = vshrl.u32 %v486, 7
    %v488 = vsub.s32 3, %v487
    %v489 = vrot.slane %v472, %v488
    %v494 = vmul.f32 %v467, %v477
    %v495 = vmul.f32 %v465, %v481
    %v496 = vmul.f32 %v463, %v485
    %v497 = vmul.f32 %v469, %v489
    %v498 = vmul.f32 %v468, %v477
    %v499 = vmul.f32 %v466, %v481
    %v500 = vmul.f32 %v464, %v485
    %v501 = vmul.f32 %v470, %v489
    %502 = vst [vmem:[#allocation2 + $0x1c0] sm:$0xff] %v494
    %503 = vst [vmem:[#allocation2 + $0x1c8] sm:$0xff] %v495
    %504 = vst [vmem:[#allocation2 + $0x1d0] sm:$0xff] %v496
    %505 = vst [vmem:[#allocation2 + $0x1d8] sm:$0xff] %v497
    %506 = vst [vmem:[#allocation2 + $0x1e0] sm:$0xff] %v498
    %507 = vst [vmem:[#allocation2 + $0x1e8] sm:$0xff] %v499
    %508 = vst [vmem:[#allocation2 + $0x1f0] sm:$0xff] %v500
    %509 = vst [vmem:[#allocation2 + $0x1f8] sm:$0xff] %v501
    %510 = vrot.lane.b32.xlu0 %v45, 111
    %v511 = vpop.permute.xlu0 %510
    %512 = vrot.lane.b32.xlu0 %v49, 111
    %v513 = vpop.permute.xlu0 %512
    %514 = vrot.lane.b32.xlu0 %v46, 111
    %v515 = vpop.permute.xlu0 %514
    %516 = vrot.lane.b32.xlu0 %v50, 111
    %v517 = vpop.permute.xlu0 %516
    %518 = vrot.lane.b32.xlu0 %v47, 111
    %v519 = vpop.permute.xlu0 %518
    %520 = vrot.lane.b32.xlu0 %v51, 111
    %v521 = vpop.permute.xlu0 %520
    %522 = vrot.lane.b32.xlu0 %v48, 111
    %v523 = vpop.permute.xlu0 %522
    %524 = vrot.lane.b32.xlu0 %v52, 111
    %v525 = vpop.permute.xlu0 %524
    %vm526 = vcmp.lt.s32.totalorder %v70, 111
    %v527 = vsel %vm526, %v519, %v523
    %v528 = vsel %vm526, %v521, %v525
    %v529 = vsel %vm526, %v515, %v519
    %v530 = vsel %vm526, %v517, %v521
    %v531 = vsel %vm526, %v511, %v515
    %v532 = vsel %vm526, %v513, %v517
    %v533 = vsel %vm526, %v523, %v511
    %v534 = vsel %vm526, %v525, %v513
    %s535 = scalar_lea.vmem %s9, 7
    %v536 = vld [vmem:[%s535] ss:$8 sm:$0xf]
    %v538 = vlaneseq
    %v539 = vshrl.u32 %v538, 7
    %v540 = vsub.s32 0, %v539
    %v541 = vrot.slane %v536, %v540
    %v542 = vlaneseq
    %v543 = vshrl.u32 %v542, 7
    %v544 = vsub.s32 1, %v543
    %v545 = vrot.slane %v536, %v544
    %v546 = vlaneseq
    %v547 = vshrl.u32 %v546, 7
    %v548 = vsub.s32 2, %v547
    %v549 = vrot.slane %v536, %v548
    %v550 = vlaneseq
    %v551 = vshrl.u32 %v550, 7
    %v552 = vsub.s32 3, %v551
    %v553 = vrot.slane %v536, %v552
    %v558 = vmul.f32 %v531, %v541
    %v559 = vmul.f32 %v529, %v545
    %v560 = vmul.f32 %v527, %v549
    %v561 = vmul.f32 %v533, %v553
    %v562 = vmul.f32 %v532, %v541
    %v563 = vmul.f32 %v530, %v545
    %v564 = vmul.f32 %v528, %v549
    %v565 = vmul.f32 %v534, %v553
    %566 = vst [vmem:[#allocation2 + $0x200] sm:$0xff] %v558
    %567 = vst [vmem:[#allocation2 + $0x208] sm:$0xff] %v559
    %568 = vst [vmem:[#allocation2 + $0x210] sm:$0xff] %v560
    %569 = vst [vmem:[#allocation2 + $0x218] sm:$0xff] %v561
    %570 = vst [vmem:[#allocation2 + $0x220] sm:$0xff] %v562
    %571 = vst [vmem:[#allocation2 + $0x228] sm:$0xff] %v563
    %572 = vst [vmem:[#allocation2 + $0x230] sm:$0xff] %v564
    %573 = vst [vmem:[#allocation2 + $0x238] sm:$0xff] %v565
    %v574 = vld [vmem:[%s1] sm:$0xff]
    %v575 = vld [vmem:[%s1 + $0x8] sm:$0xff]
    %v576 = vld [vmem:[%s1 + $0x10] sm:$0xff]
    %v577 = vld [vmem:[%s1 + $0x18] sm:$0xff]
    %v578 = vld [vmem:[#allocation2] sm:$0xff]
    %v579 = vld [vmem:[#allocation2 + $0x8] sm:$0xff]
    %v580 = vld [vmem:[#allocation2 + $0x10] sm:$0xff]
    %v581 = vld [vmem:[#allocation2 + $0x18] sm:$0xff]
    %v582 = vld [vmem:[#allocation2 + $0x20] sm:$0xff]
    %v583 = vld [vmem:[#allocation2 + $0x28] sm:$0xff]
    %v584 = vld [vmem:[#allocation2 + $0x30] sm:$0xff]
    %v585 = vld [vmem:[#allocation2 + $0x38] sm:$0xff]
    %v586 = vld [vmem:[#allocation2 + $0x40] sm:$0xff]
    %v587 = vld [vmem:[#allocation2 + $0x48] sm:$0xff]
    %v588 = vld [vmem:[#allocation2 + $0x50] sm:$0xff]
    %v589 = vld [vmem:[#allocation2 + $0x58] sm:$0xff]
    %v590 = vld [vmem:[#allocation2 + $0x60] sm:$0xff]
    %v591 = vld [vmem:[#allocation2 + $0x68] sm:$0xff]
    %v592 = vld [vmem:[#allocation2 + $0x70] sm:$0xff]
    %v593 = vld [vmem:[#allocation2 + $0x78] sm:$0xff]
    %v594 = vld [vmem:[#allocation2 + $0x80] sm:$0xff]
    %v595 = vld [vmem:[#allocation2 + $0x88] sm:$0xff]
    %v596 = vld [vmem:[#allocation2 + $0x90] sm:$0xff]
    %v597 = vld [vmem:[#allocation2 + $0x98] sm:$0xff]
    %v598 = vld [vmem:[#allocation2 + $0xa0] sm:$0xff]
    %v599 = vld [vmem:[#allocation2 + $0xa8] sm:$0xff]
    %v600 = vld [vmem:[#allocation2 + $0xb0] sm:$0xff]
    %v601 = vld [vmem:[#allocation2 + $0xb8] sm:$0xff]
    %v602 = vld [vmem:[#allocation2 + $0xc0] sm:$0xff]
    %v603 = vld [vmem:[#allocation2 + $0xc8] sm:$0xff]
    %v604 = vld [vmem:[#allocation2 + $0xd0] sm:$0xff]
    %v605 = vld [vmem:[#allocation2 + $0xd8] sm:$0xff]
    %v606 = vld [vmem:[#allocation2 + $0xe0] sm:$0xff]
    %v607 = vld [vmem:[#allocation2 + $0xe8] sm:$0xff]
    %v608 = vld [vmem:[#allocation2 + $0xf0] sm:$0xff]
    %v609 = vld [vmem:[#allocation2 + $0xf8] sm:$0xff]
    %v610 = vld [vmem:[#allocation2 + $0x100] sm:$0xff]
    %v611 = vld [vmem:[#allocation2 + $0x108] sm:$0xff]
    %v612 = vld [vmem:[#allocation2 + $0x110] sm:$0xff]
    %v613 = vld [vmem:[#allocation2 + $0x118] sm:$0xff]
    %v614 = vld [vmem:[#allocation2 + $0x120] sm:$0xff]
    %v615 = vld [vmem:[#allocation2 + $0x128] sm:$0xff]
    %v616 = vld [vmem:[#allocation2 + $0x130] sm:$0xff]
    %v617 = vld [vmem:[#allocation2 + $0x138] sm:$0xff]
    %v618 = vld [vmem:[#allocation2 + $0x140] sm:$0xff]
    %v619 = vld [vmem:[#allocation2 + $0x148] sm:$0xff]
    %v620 = vld [vmem:[#allocation2 + $0x150] sm:$0xff]
    %v621 = vld [vmem:[#allocation2 + $0x158] sm:$0xff]
    %v622 = vld [vmem:[#allocation2 + $0x160] sm:$0xff]
    %v623 = vld [vmem:[#allocation2 + $0x168] sm:$0xff]
    %v624 = vld [vmem:[#allocation2 + $0x170] sm:$0xff]
    %v625 = vld [vmem:[#allocation2 + $0x178] sm:$0xff]
    %v626 = vld [vmem:[#allocation2 + $0x180] sm:$0xff]
    %v627 = vld [vmem:[#allocation2 + $0x188] sm:$0xff]
    %v628 = vld [vmem:[#allocation2 + $0x190] sm:$0xff]
    %v629 = vld [vmem:[#allocation2 + $0x198] sm:$0xff]
    %v630 = vld [vmem:[#allocation2 + $0x1a0] sm:$0xff]
    %v631 = vld [vmem:[#allocation2 + $0x1a8] sm:$0xff]
    %v632 = vld [vmem:[#allocation2 + $0x1b0] sm:$0xff]
    %v633 = vld [vmem:[#allocation2 + $0x1b8] sm:$0xff]
    %v634 = vld [vmem:[#allocation2 + $0x1c0] sm:$0xff]
    %v635 = vld [vmem:[#allocation2 + $0x1c8] sm:$0xff]
    %v636 = vld [vmem:[#allocation2 + $0x1d0] sm:$0xff]
    %v637 = vld [vmem:[#allocation2 + $0x1d8] sm:$0xff]
    %v638 = vld [vmem:[#allocation2 + $0x1e0] sm:$0xff]
    %v639 = vld [vmem:[#allocation2 + $0x1e8] sm:$0xff]
    %v640 = vld [vmem:[#allocation2 + $0x1f0] sm:$0xff]
    %v641 = vld [vmem:[#allocation2 + $0x1f8] sm:$0xff]
    %v642 = vld [vmem:[#allocation2 + $0x200] sm:$0xff]
    %v643 = vld [vmem:[#allocation2 + $0x208] sm:$0xff]
    %v644 = vld [vmem:[#allocation2 + $0x210] sm:$0xff]
    %v645 = vld [vmem:[#allocation2 + $0x218] sm:$0xff]
    %v646 = vld [vmem:[#allocation2 + $0x220] sm:$0xff]
    %v647 = vld [vmem:[#allocation2 + $0x228] sm:$0xff]
    %v648 = vld [vmem:[#allocation2 + $0x230] sm:$0xff]
    %v649 = vld [vmem:[#allocation2 + $0x238] sm:$0xff]
    %vm650 = vcmask 130048
    %v652 = vsel %vm650, %v575, 0
    %v655 = vsel %vm650, %v577, 0
    %657 = vmatprep.subr.mxu0 %v579
    %658 = vmatpush1.msra.mxu0 %v578
    %659 = vmatprep.subr.mxu0 %v583
    %660 = vmatpush1.msra.mxu0 %v582
    %661 = vmatprep.subr.mxu0 %v587
    %662 = vmatpush1.msra.mxu0 %v586
    %663 = vmatprep.subr.mxu0 %v591
    %664 = vmatpush1.msra.mxu0 %v590
    %665 = vmatprep.subr.mxu0 %v595
    %666 = vmatpush1.msra.mxu0 %v594
    %667 = vmatprep.subr.mxu0 %v599
    %668 = vmatpush1.msra.mxu0 %v598
    %669 = vmatprep.subr.mxu0 %v603
    %670 = vmatpush1.msra.mxu0 %v602
    %671 = vmatprep.subr.mxu0 %v607
    %672 = vmatpush1.msra.mxu0 %v606
    %673 = vmatprep.subr.mxu0 %v611
    %674 = vmatpush1.msra.mxu0 %v610
    %675 = vmatprep.subr.mxu0 %v615
    %676 = vmatpush1.msra.mxu0 %v614
    %677 = vmatprep.subr.mxu0 %v619
    %678 = vmatpush1.msra.mxu0 %v618
    %679 = vmatprep.subr.mxu0 %v623
    %680 = vmatpush1.msra.mxu0 %v622
    %681 = vmatprep.subr.mxu0 %v627
    %682 = vmatpush1.msra.mxu0 %v626
    %683 = vmatprep.subr.mxu0 %v631
    %684 = vmatpush1.msra.mxu0 %v630
    %685 = vmatprep.subr.mxu0 %v635
    %686 = vmatpush1.msra.mxu0 %v634
    %687 = vmatprep.subr.mxu0 %v639
    %688 = vmatpush1.msra.mxu0 %v638
    %689 = vmatprep.subr.mxu0 %v643
    %690 = vmatpush1.msra.mxu0 %v642
    %691 = vmatprep.subr.mxu0 %v647
    %692 = vmatpush1.msra.mxu0 %v646
    %693 = vmatprep.subr.mxu0 0.0
    %694 = vmatpush1.msra.mxu0 0.0
    %695 = vmatprep.subr.mxu0 0.0
    %696 = vmatpush1.msra.mxu0 0.0
    %697 = vmatprep.subr.mxu0 0.0
    %698 = vmatpush1.msra.mxu0 0.0
    %699 = vmatprep.subr.mxu0 0.0
    %700 = vmatpush1.msra.mxu0 0.0
    %701 = vmatprep.subr.mxu0 0.0
    %702 = vmatpush1.msra.mxu0 0.0
    %703 = vmatprep.subr.mxu0 0.0
    %704 = vmatpush1.msra.mxu0 0.0
    %705 = vmatprep.subr.mxu0 0.0
    %706 = vmatpush1.msra.mxu0 0.0
    %707 = vmatprep.subr.mxu0 0.0
    %708 = vmatpush1.msra.mxu0 0.0
    %709 = vmatprep.subr.mxu0 0.0
    %710 = vmatpush1.msra.mxu0 0.0
    %711 = vmatprep.subr.mxu0 0.0
    %712 = vmatpush1.msra.mxu0 0.0
    %713 = vmatprep.subr.mxu0 0.0
    %714 = vmatpush1.msra.mxu0 0.0
    %715 = vmatprep.subr.mxu0 0.0
    %716 = vmatpush1.msra.mxu0 0.0
    %717 = vmatprep.subr.mxu0 0.0
    %718 = vmatpush1.msra.mxu0 0.0
    %719 = vmatprep.subr.mxu0 0.0
    %720 = vmatpush1.msra.mxu0 0.0
    %721 = vmatprep.mubr.f32.mxu0 %v652
    %722 = vmatmul.mubr.f32.gmra.mrb[0].mxu0 %v574
    %v723 = vpop.f32.mrb[0].mxu0
    %v724 = vadd.f32 0.0, %v723
    %v725 = vpop.f32.mrb[0].mxu0
    %v726 = vadd.f32 0.0, %v725
    %727 = vmatprep.mubr.f32.mxu0 %v655
    %728 = vmatmul.mubr.f32.gmra.mrb[0].mxu0 %v576
    %v729 = vpop.f32.mrb[0].mxu0
    %v730 = vadd.f32 0.0, %v729
    %v731 = vpop.f32.mrb[0].mxu0
    %v732 = vadd.f32 0.0, %v731
    %733 = vdwg.mxu0
    %734 = vmatprep.subr.mxu0 %v581
    %735 = vmatpush1.msra.mxu0 %v580
    %736 = vmatprep.subr.mxu0 %v585
    %737 = vmatpush1.msra.mxu0 %v584
    %738 = vmatprep.subr.mxu0 %v589
    %739 = vmatpush1.msra.mxu0 %v588
    %740 = vmatprep.subr.mxu0 %v593
    %741 = vmatpush1.msra.mxu0 %v592
    %742 = vmatprep.subr.mxu0 %v597
    %743 = vmatpush1.msra.mxu0 %v596
    %744 = vmatprep.subr.mxu0 %v601
    %745 = vmatpush1.msra.mxu0 %v600
    %746 = vmatprep.subr.mxu0 %v605
    %747 = vmatpush1.msra.mxu0 %v604
    %748 = vmatprep.subr.mxu0 %v609
    %749 = vmatpush1.msra.mxu0 %v608
    %750 = vmatprep.subr.mxu0 %v613
    %751 = vmatpush1.msra.mxu0 %v612
    %752 = vmatprep.subr.mxu0 %v617
    %753 = vmatpush1.msra.mxu0 %v616
    %754 = vmatprep.subr.mxu0 %v621
    %755 = vmatpush1.msra.mxu0 %v620
    %756 = vmatprep.subr.mxu0 %v625
    %757 = vmatpush1.msra.mxu0 %v624
    %758 = vmatprep.subr.mxu0 %v629
    %759 = vmatpush1.msra.mxu0 %v628
    %760 = vmatprep.subr.mxu0 %v633
    %761 = vmatpush1.msra.mxu0 %v632
    %762 = vmatprep.subr.mxu0 %v637
    %763 = vmatpush1.msra.mxu0 %v636
    %764 = vmatprep.subr.mxu0 %v641
    %765 = vmatpush1.msra.mxu0 %v640
    %766 = vmatprep.subr.mxu0 %v645
    %767 = vmatpush1.msra.mxu0 %v644
    %768 = vmatprep.subr.mxu0 %v649
    %769 = vmatpush1.msra.mxu0 %v648
    %770 = vmatprep.subr.mxu0 0.0
    %771 = vmatpush1.msra.mxu0 0.0
    %772 = vmatprep.subr.mxu0 0.0
    %773 = vmatpush1.msra.mxu0 0.0
    %774 = vmatprep.subr.mxu0 0.0
    %775 = vmatpush1.msra.mxu0 0.0
    %776 = vmatprep.subr.mxu0 0.0
    %777 = vmatpush1.msra.mxu0 0.0
    %778 = vmatprep.subr.mxu0 0.0
    %779 = vmatpush1.msra.mxu0 0.0
    %780 = vmatprep.subr.mxu0 0.0
    %781 = vmatpush1.msra.mxu0 0.0
    %782 = vmatprep.subr.mxu0 0.0
    %783 = vmatpush1.msra.mxu0 0.0
    %784 = vmatprep.subr.mxu0 0.0
    %785 = vmatpush1.msra.mxu0 0.0
    %786 = vmatprep.subr.mxu0 0.0
    %787 = vmatpush1.msra.mxu0 0.0
    %788 = vmatprep.subr.mxu0 0.0
    %789 = vmatpush1.msra.mxu0 0.0
    %790 = vmatprep.subr.mxu0 0.0
    %791 = vmatpush1.msra.mxu0 0.0
    %792 = vmatprep.subr.mxu0 0.0
    %793 = vmatpush1.msra.mxu0 0.0
    %794 = vmatprep.subr.mxu0 0.0
    %795 = vmatpush1.msra.mxu0 0.0
    %796 = vmatprep.subr.mxu0 0.0
    %797 = vmatpush1.msra.mxu0 0.0
    %798 = vmatprep.mubr.f32.mxu0 %v652
    %799 = vmatmul.mubr.f32.gmra.mrb[0].mxu0 %v574
    %v800 = vpop.f32.mrb[0].mxu0
    %v801 = vadd.f32 0.0, %v800
    %v802 = vpop.f32.mrb[0].mxu0
    %v803 = vadd.f32 0.0, %v802
    %804 = vmatprep.mubr.f32.mxu0 %v655
    %805 = vmatmul.mubr.f32.gmra.mrb[0].mxu0 %v576
    %v806 = vpop.f32.mrb[0].mxu0
    %v807 = vadd.f32 0.0, %v806
    %v808 = vpop.f32.mrb[0].mxu0
    %v809 = vadd.f32 0.0, %v808
    %810 = vdwg.mxu0
    %v811 = vld [vmem:[%s2] sm:$0xff]
    %v812 = vld [vmem:[%s2 + $0x8] sm:$0xff]
    %v813 = vld [vmem:[%s3] sm:$0xff]
    %v814 = vld [vmem:[%s3 + $0x8] sm:$0xff]
    %v815 = vmul.f32 %v724, %v724
    %v816 = vmul.f32 %v726, %v726
    %v817 = vmul.f32 %v801, %v801
    %v818 = vmul.f32 %v803, %v803
    %v819 = vmul.f32 %v730, %v730
    %v820 = vmul.f32 %v732, %v732
    %v821 = vmul.f32 %v807, %v807
    %v822 = vmul.f32 %v809, %v809
    %v823 = vld [vmem:[%s10] sm:$0xff]
    %v824 = vld [vmem:[%s10 + $0x8] sm:$0xff]
    %v825 = vld [vmem:[%s10 + $0x10] sm:$0xff]
    %v826 = vld [vmem:[%s10 + $0x18] sm:$0xff]
    %v827 = vld [vmem:[%s10 + $0x20] sm:$0xff]
    %v828 = vld [vmem:[%s10 + $0x28] sm:$0xff]
    %v829 = vld [vmem:[%s10 + $0x30] sm:$0xff]
    %v830 = vld [vmem:[%s10 + $0x38] sm:$0xff]
    %v831 = vld [vmem:[%s10 + $0x40] sm:$0xff]
    %v832 = vld [vmem:[%s10 + $0x48] sm:$0xff]
    %v833 = vld [vmem:[%s10 + $0x50] sm:$0xff]
    %v834 = vld [vmem:[%s10 + $0x58] sm:$0xff]
    %v835 = vld [vmem:[%s10 + $0x60] sm:$0xff]
    %v836 = vld [vmem:[%s10 + $0x68] sm:$0xff]
    %v837 = vld [vmem:[%s10 + $0x70] sm:$0xff]
    %v838 = vld [vmem:[%s10 + $0x78] sm:$0xff]
    %v839 = vld [vmem:[%s10 + $0x80] sm:$0xff]
    %v840 = vld [vmem:[%s10 + $0x88] sm:$0xff]
    %v841 = vld [vmem:[%s10 + $0x90] sm:$0xff]
    %v842 = vld [vmem:[%s10 + $0x98] sm:$0xff]
    %v843 = vld [vmem:[%s10 + $0xa0] sm:$0xff]
    %v844 = vld [vmem:[%s10 + $0xa8] sm:$0xff]
    %v845 = vld [vmem:[%s10 + $0xb0] sm:$0xff]
    %v846 = vld [vmem:[%s10 + $0xb8] sm:$0xff]
    %v847 = vld [vmem:[%s10 + $0xc0] sm:$0xff]
    %v848 = vld [vmem:[%s10 + $0xc8] sm:$0xff]
    %v849 = vld [vmem:[%s10 + $0xd0] sm:$0xff]
    %v850 = vld [vmem:[%s10 + $0xd8] sm:$0xff]
    %v851 = vld [vmem:[%s10 + $0xe0] sm:$0xff]
    %v852 = vld [vmem:[%s10 + $0xe8] sm:$0xff]
    %v853 = vld [vmem:[%s10 + $0xf0] sm:$0xff]
    %v854 = vld [vmem:[%s10 + $0xf8] sm:$0xff]
    %v855 = vld [vmem:[%s10 + $0x100] sm:$0xff]
    %v856 = vld [vmem:[%s10 + $0x108] sm:$0xff]
    %v857 = vld [vmem:[%s10 + $0x110] sm:$0xff]
    %v858 = vld [vmem:[%s10 + $0x118] sm:$0xff]
    %v859 = vld [vmem:[%s10 + $0x120] sm:$0xff]
    %v860 = vld [vmem:[%s10 + $0x128] sm:$0xff]
    %v861 = vld [vmem:[%s10 + $0x130] sm:$0xff]
    %v862 = vld [vmem:[%s10 + $0x138] sm:$0xff]
    %v863 = vld [vmem:[%s10 + $0x140] sm:$0xff]
    %v864 = vld [vmem:[%s10 + $0x148] sm:$0xff]
    %v865 = vld [vmem:[%s10 + $0x150] sm:$0xff]
    %v866 = vld [vmem:[%s10 + $0x158] sm:$0xff]
    %v867 = vld [vmem:[%s10 + $0x160] sm:$0xff]
    %v868 = vld [vmem:[%s10 + $0x168] sm:$0xff]
    %v869 = vld [vmem:[%s10 + $0x170] sm:$0xff]
    %v870 = vld [vmem:[%s10 + $0x178] sm:$0xff]
    %v871 = vld [vmem:[%s10 + $0x180] sm:$0xff]
    %v872 = vld [vmem:[%s10 + $0x188] sm:$0xff]
    %v873 = vld [vmem:[%s10 + $0x190] sm:$0xff]
    %v874 = vld [vmem:[%s10 + $0x198] sm:$0xff]
    %v875 = vld [vmem:[%s10 + $0x1a0] sm:$0xff]
    %v876 = vld [vmem:[%s10 + $0x1a8] sm:$0xff]
    %v877 = vld [vmem:[%s10 + $0x1b0] sm:$0xff]
    %v878 = vld [vmem:[%s10 + $0x1b8] sm:$0xff]
    %v879 = vld [vmem:[%s10 + $0x1c0] sm:$0xff]
    %v880 = vld [vmem:[%s10 + $0x1c8] sm:$0xff]
    %v881 = vld [vmem:[%s10 + $0x1d0] sm:$0xff]
    %v882 = vld [vmem:[%s10 + $0x1d8] sm:$0xff]
    %v883 = vld [vmem:[%s10 + $0x1e0] sm:$0xff]
    %v884 = vld [vmem:[%s10 + $0x1e8] sm:$0xff]
    %v885 = vld [vmem:[%s10 + $0x1f0] sm:$0xff]
    %v886 = vld [vmem:[%s10 + $0x1f8] sm:$0xff]
    %887 = vmatprep.subr.mxu0 0.0
    %888 = vmatpush1.msra.mxu0 %v823
    %889 = vmatprep.subr.mxu0 0.0
    %890 = vmatpush1.msra.mxu0 %v824
    %891 = vmatprep.subr.mxu0 0.0
    %892 = vmatpush1.msra.mxu0 %v825
    %893 = vmatprep.subr.mxu0 0.0
    %894 = vmatpush1.msra.mxu0 %v826
    %895 = vmatprep.subr.mxu0 0.0
    %896 = vmatpush1.msra.mxu0 %v827
    %897 = vmatprep.subr.mxu0 0.0
    %898 = vmatpush1.msra.mxu0 %v828
    %899 = vmatprep.subr.mxu0 0.0
    %900 = vmatpush1.msra.mxu0 %v829
    %901 = vmatprep.subr.mxu0 0.0
    %902 = vmatpush1.msra.mxu0 %v830
    %903 = vmatprep.subr.mxu0 0.0
    %904 = vmatpush1.msra.mxu0 %v831
    %905 = vmatprep.subr.mxu0 0.0
    %906 = vmatpush1.msra.mxu0 %v832
    %907 = vmatprep.subr.mxu0 0.0
    %908 = vmatpush1.msra.mxu0 %v833
    %909 = vmatprep.subr.mxu0 0.0
    %910 = vmatpush1.msra.mxu0 %v834
    %911 = vmatprep.subr.mxu0 0.0
    %912 = vmatpush1.msra.mxu0 %v835
    %913 = vmatprep.subr.mxu0 0.0
    %914 = vmatpush1.msra.mxu0 %v836
    %915 = vmatprep.subr.mxu0 0.0
    %916 = vmatpush1.msra.mxu0 %v837
    %917 = vmatprep.subr.mxu0 0.0
    %918 = vmatpush1.msra.mxu0 %v838
    %919 = vmatprep.subr.mxu0 0.0
    %920 = vmatpush1.msra.mxu0 %v839
    %921 = vmatprep.subr.mxu0 0.0
    %922 = vmatpush1.msra.mxu0 %v840
    %923 = vmatprep.subr.mxu0 0.0
    %924 = vmatpush1.msra.mxu0 %v841
    %925 = vmatprep.subr.mxu0 0.0
    %926 = vmatpush1.msra.mxu0 %v842
    %927 = vmatprep.subr.mxu0 0.0
    %928 = vmatpush1.msra.mxu0 %v843
    %929 = vmatprep.subr.mxu0 0.0
    %930 = vmatpush1.msra.mxu0 %v844
    %931 = vmatprep.subr.mxu0 0.0
    %932 = vmatpush1.msra.mxu0 %v845
    %933 = vmatprep.subr.mxu0 0.0
    %934 = vmatpush1.msra.mxu0 %v846
    %935 = vmatprep.subr.mxu0 0.0
    %936 = vmatpush1.msra.mxu0 %v847
    %937 = vmatprep.subr.mxu0 0.0
    %938 = vmatpush1.msra.mxu0 %v848
    %939 = vmatprep.subr.mxu0 0.0
    %940 = vmatpush1.msra.mxu0 %v849
    %941 = vmatprep.subr.mxu0 0.0
    %942 = vmatpush1.msra.mxu0 %v850
    %943 = vmatprep.subr.mxu0 0.0
    %944 = vmatpush1.msra.mxu0 %v851
    %945 = vmatprep.subr.mxu0 0.0
    %946 = vmatpush1.msra.mxu0 %v852
    %947 = vmatprep.subr.mxu0 0.0
    %948 = vmatpush1.msra.mxu0 %v853
    %949 = vmatprep.subr.mxu0 0.0
    %950 = vmatpush1.msra.mxu0 %v854
    %951 = vmatprep.mubr.f32.mxu0 %v726
    %952 = vmatmul.mubr.f32.gmra.mrb[0].mxu0 %v724
    %v953 = vpop.f32.mrb[0].mxu0
    %v954 = vadd.f32 0.0, %v953
    %v955 = vpop.f32.mrb[0].mxu0
    %956 = vmatprep.mubr.f32.mxu0 %v732
    %957 = vmatmul.mubr.f32.gmra.mrb[0].mxu0 %v730
    %v958 = vpop.f32.mrb[0].mxu0
    %v959 = vadd.f32 0.0, %v958
    %v960 = vpop.f32.mrb[0].mxu0
    %961 = vmatprep.mubr.f32.mxu0 %v816
    %962 = vmatmul.mubr.f32.gmra.mrb[0].mxu0 %v815
    %v963 = vpop.f32.mrb[0].mxu0
    %v964 = vadd.f32 0.0, %v963
    %v965 = vpop.f32.mrb[0].mxu0
    %966 = vmatprep.mubr.f32.mxu0 %v820
    %967 = vmatmul.mubr.f32.gmra.mrb[0].mxu0 %v819
    %v968 = vpop.f32.mrb[0].mxu0
    %v969 = vadd.f32 0.0, %v968
    %v970 = vpop.f32.mrb[0].mxu0
    %971 = vdwg.mxu0
    %972 = vmatprep.subr.mxu0 0.0
    %973 = vmatpush1.msra.mxu0 %v855
    %974 = vmatprep.subr.mxu0 0.0
    %975 = vmatpush1.msra.mxu0 %v856
    %976 = vmatprep.subr.mxu0 0.0
    %977 = vmatpush1.msra.mxu0 %v857
    %978 = vmatprep.subr.mxu0 0.0
    %979 = vmatpush1.msra.mxu0 %v858
    %980 = vmatprep.subr.mxu0 0.0
    %981 = vmatpush1.msra.mxu0 %v859
    %982 = vmatprep.subr.mxu0 0.0
    %983 = vmatpush1.msra.mxu0 %v860
    %984 = vmatprep.subr.mxu0 0.0
    %985 = vmatpush1.msra.mxu0 %v861
    %986 = vmatprep.subr.mxu0 0.0
    %987 = vmatpush1.msra.mxu0 %v862
    %988 = vmatprep.subr.mxu0 0.0
    %989 = vmatpush1.msra.mxu0 %v863
    %990 = vmatprep.subr.mxu0 0.0
    %991 = vmatpush1.msra.mxu0 %v864
    %992 = vmatprep.subr.mxu0 0.0
    %993 = vmatpush1.msra.mxu0 %v865
    %994 = vmatprep.subr.mxu0 0.0
    %995 = vmatpush1.msra.mxu0 %v866
    %996 = vmatprep.subr.mxu0 0.0
    %997 = vmatpush1.msra.mxu0 %v867
    %998 = vmatprep.subr.mxu0 0.0
    %999 = vmatpush1.msra.mxu0 %v868
    %1000 = vmatprep.subr.mxu0 0.0
    %1001 = vmatpush1.msra.mxu0 %v869
    %1002 = vmatprep.subr.mxu0 0.0
    %1003 = vmatpush1.msra.mxu0 %v870
    %1004 = vmatprep.subr.mxu0 0.0
    %1005 = vmatpush1.msra.mxu0 %v871
    %1006 = vmatprep.subr.mxu0 0.0
    %1007 = vmatpush1.msra.mxu0 %v872
    %1008 = vmatprep.subr.mxu0 0.0
    %1009 = vmatpush1.msra.mxu0 %v873
    %1010 = vmatprep.subr.mxu0 0.0
    %1011 = vmatpush1.msra.mxu0 %v874
    %1012 = vmatprep.subr.mxu0 0.0
    %1013 = vmatpush1.msra.mxu0 %v875
    %1014 = vmatprep.subr.mxu0 0.0
    %1015 = vmatpush1.msra.mxu0 %v876
    %1016 = vmatprep.subr.mxu0 0.0
    %1017 = vmatpush1.msra.mxu0 %v877
    %1018 = vmatprep.subr.mxu0 0.0
    %1019 = vmatpush1.msra.mxu0 %v878
    %1020 = vmatprep.subr.mxu0 0.0
    %1021 = vmatpush1.msra.mxu0 %v879
    %1022 = vmatprep.subr.mxu0 0.0
    %1023 = vmatpush1.msra.mxu0 %v880
    %1024 = vmatprep.subr.mxu0 0.0
    %1025 = vmatpush1.msra.mxu0 %v881
    %1026 = vmatprep.subr.mxu0 0.0
    %1027 = vmatpush1.msra.mxu0 %v882
    %1028 = vmatprep.subr.mxu0 0.0
    %1029 = vmatpush1.msra.mxu0 %v883
    %1030 = vmatprep.subr.mxu0 0.0
    %1031 = vmatpush1.msra.mxu0 %v884
    %1032 = vmatprep.subr.mxu0 0.0
    %1033 = vmatpush1.msra.mxu0 %v885
    %1034 = vmatprep.subr.mxu0 0.0
    %1035 = vmatpush1.msra.mxu0 %v886
    %1036 = vmatprep.mubr.f32.mxu0 %v803
    %1037 = vmatmul.mubr.f32.gmra.mrb[0].mxu0 %v801
    %v1038 = vpop.f32.mrb[0].mxu0
    %v1039 = vadd.f32 %v954, %v1038
    %v1040 = vpop.f32.mrb[0].mxu0
    %1041 = vmatprep.mubr.f32.mxu0 %v809
    %1042 = vmatmul.mubr.f32.gmra.mrb[0].mxu0 %v807
    %v1043 = vpop.f32.mrb[0].mxu0
    %v1044 = vadd.f32 %v959, %v1043
    %v1045 = vpop.f32.mrb[0].mxu0
    %1046 = vmatprep.mubr.f32.mxu0 %v818
    %1047 = vmatmul.mubr.f32.gmra.mrb[0].mxu0 %v817
    %v1048 = vpop.f32.mrb[0].mxu0
    %v1049 = vadd.f32 %v964, %v1048
    %v1050 = vpop.f32.mrb[0].mxu0
    %1051 = vmatprep.mubr.f32.mxu0 %v822
    %1052 = vmatmul.mubr.f32.gmra.mrb[0].mxu0 %v821
    %v1053 = vpop.f32.mrb[0].mxu0
    %v1054 = vadd.f32 %v969, %v1053
    %v1055 = vpop.f32.mrb[0].mxu0
    %1056 = vdwg.mxu0
    %v1057 = vmul.f32 %v1039, %v1039
    %v1058 = vmul.f32 %v1044, %v1044
    %v1059 = vsub.f32 %v1049, %v1057
    %v1060 = vsub.f32 %v1054, %v1058
    %v1061 = vadd.f32 %v1059, 1e-05
    %v1062 = vadd.f32 %v1060, 1e-05
    %v1063 = vrsqrt.pop %v1061
    %v1064 = vrsqrt.pop %v1062
    %v1065 = vmul.f32 %v811, %v1063
    %v1066 = vmul.f32 %v812, %v1064
    %v1067 = vmul.f32 %v1039, %v1065
    %v1068 = vmul.f32 %v1044, %v1066
    %v1069 = vsub.f32 %v813, %v1067
    %v1070 = vsub.f32 %v814, %v1068
    %1072 = vset.pattern.permute.xlu0 0
    %1073 = vperm.xlu0 %1072, %v1065
    %v1074 = vpop.permute.xlu0 %1073
    %1077 = vset.pattern.permute.xlu0 0
    %1078 = vperm.xlu0 %1077, %v1066
    %v1079 = vpop.permute.xlu0 %1078
    %v1081 = vmul.f32 %v724, %v1074
    %v1082 = vmul.f32 %v726, %v1074
    %v1083 = vmul.f32 %v801, %v1074
    %v1084 = vmul.f32 %v803, %v1074
    %v1085 = vmul.f32 %v730, %v1079
    %v1086 = vmul.f32 %v732, %v1079
    %v1087 = vmul.f32 %v807, %v1079
    %v1088 = vmul.f32 %v809, %v1079
    %1090 = vset.pattern.permute.xlu0 0
    %1091 = vperm.xlu0 %1090, %v1069
    %v1092 = vpop.permute.xlu0 %1091
    %1095 = vset.pattern.permute.xlu0 0
    %1096 = vperm.xlu0 %1095, %v1070
    %v1097 = vpop.permute.xlu0 %1096
    %v1099 = vadd.f32 %v1081, %v1092
    %v1100 = vadd.f32 %v1082, %v1092
    %v1101 = vadd.f32 %v1083, %v1092
    %v1102 = vadd.f32 %v1084, %v1092
    %v1103 = vadd.f32 %v1085, %v1097
    %v1104 = vadd.f32 %v1086, %v1097
    %v1105 = vadd.f32 %v1087, %v1097
    %v1106 = vadd.f32 %v1088, %v1097
    %v1107 = vmax.f32 %v1099, 0.0
    %v1108 = vmax.f32 %v1100, 0.0
    %v1109 = vmax.f32 %v1101, 0.0
    %v1110 = vmax.f32 %v1102, 0.0
    %v1111 = vmax.f32 %v1103, 0.0
    %v1112 = vmax.f32 %v1104, 0.0
    %v1113 = vmax.f32 %v1105, 0.0
    %v1114 = vmax.f32 %v1106, 0.0
    %1115 = vrot.lane.b32.xlu0 %v1107, 17
    %v1116 = vpop.permute.xlu0 %1115
    %1117 = vrot.lane.b32.xlu0 %v1111, 17
    %v1118 = vpop.permute.xlu0 %1117
    %1119 = vrot.lane.b32.xlu0 %v1108, 17
    %v1120 = vpop.permute.xlu0 %1119
    %1121 = vrot.lane.b32.xlu0 %v1112, 17
    %v1122 = vpop.permute.xlu0 %1121
    %1123 = vrot.lane.b32.xlu0 %v1109, 17
    %v1124 = vpop.permute.xlu0 %1123
    %1125 = vrot.lane.b32.xlu0 %v1113, 17
    %v1126 = vpop.permute.xlu0 %1125
    %1127 = vrot.lane.b32.xlu0 %v1110, 17
    %v1128 = vpop.permute.xlu0 %1127
    %1129 = vrot.lane.b32.xlu0 %v1114, 17
    %v1130 = vpop.permute.xlu0 %1129
    %v1131 = vsel %vm71, %v1124, %v1128
    %v1132 = vsel %vm71, %v1126, %v1130
    %v1133 = vsel %vm71, %v1120, %v1124
    %v1134 = vsel %vm71, %v1122, %v1126
    %v1135 = vsel %vm71, %v1116, %v1120
    %v1136 = vsel %vm71, %v1118, %v1122
    %v1137 = vsel %vm71, %v1128, %v1116
    %v1138 = vsel %vm71, %v1130, %v1118
    %v1139 = vld [vmem:[%s9] ss:$8 sm:$0xf]
    %v1141 = vlaneseq
    %v1142 = vshrl.u32 %v1141, 7
    %v1143 = vsub.s32 0, %v1142
    %v1144 = vrot.slane %v1139, %v1143
    %v1145 = vlaneseq
    %v1146 = vshrl.u32 %v1145, 7
    %v1147 = vsub.s32 1, %v1146
    %v1148 = vrot.slane %v1139, %v1147
    %v1149 = vlaneseq
    %v1150 = vshrl.u32 %v1149, 7
    %v1151 = vsub.s32 2, %v1150
    %v1152 = vrot.slane %v1139, %v1151
    %v1153 = vlaneseq
    %v1154 = vshrl.u32 %v1153, 7
    %v1155 = vsub.s32 3, %v1154
    %v1156 = vrot.slane %v1139, %v1155
    %v1161 = vmul.f32 %v1137, %v1144
    %v1162 = vmul.f32 %v1135, %v1148
    %v1163 = vmul.f32 %v1133, %v1152
    %v1164 = vmul.f32 %v1131, %v1156
    %v1165 = vmul.f32 %v1138, %v1144
    %v1166 = vmul.f32 %v1136, %v1148
    %v1167 = vmul.f32 %v1134, %v1152
    %v1168 = vmul.f32 %v1132, %v1156
    %1169 = vst [vmem:[#allocation2] sm:$0xff] %v1161
    %1170 = vst [vmem:[#allocation2 + $0x8] sm:$0xff] %v1162
    %1171 = vst [vmem:[#allocation2 + $0x10] sm:$0xff] %v1163
    %1172 = vst [vmem:[#allocation2 + $0x18] sm:$0xff] %v1164
    %1173 = vst [vmem:[#allocation2 + $0x20] sm:$0xff] %v1165
    %1174 = vst [vmem:[#allocation2 + $0x28] sm:$0xff] %v1166
    %1175 = vst [vmem:[#allocation2 + $0x30] sm:$0xff] %v1167
    %1176 = vst [vmem:[#allocation2 + $0x38] sm:$0xff] %v1168
    %1177 = vrot.lane.b32.xlu0 %v1107, 16
    %v1178 = vpop.permute.xlu0 %1177
    %1179 = vrot.lane.b32.xlu0 %v1111, 16
    %v1180 = vpop.permute.xlu0 %1179
    %1181 = vrot.lane.b32.xlu0 %v1108, 16
    %v1182 = vpop.permute.xlu0 %1181
    %1183 = vrot.lane.b32.xlu0 %v1112, 16
    %v1184 = vpop.permute.xlu0 %1183
    %1185 = vrot.lane.b32.xlu0 %v1109, 16
    %v1186 = vpop.permute.xlu0 %1185
    %1187 = vrot.lane.b32.xlu0 %v1113, 16
    %v1188 = vpop.permute.xlu0 %1187
    %1189 = vrot.lane.b32.xlu0 %v1110, 16
    %v1190 = vpop.permute.xlu0 %1189
    %1191 = vrot.lane.b32.xlu0 %v1114, 16
    %v1192 = vpop.permute.xlu0 %1191
    %v1193 = vsel %vm134, %v1186, %v1190
    %v1194 = vsel %vm134, %v1188, %v1192
    %v1195 = vsel %vm134, %v1182, %v1186
    %v1196 = vsel %vm134, %v1184, %v1188
    %v1197 = vsel %vm134, %v1178, %v1182
    %v1198 = vsel %vm134, %v1180, %v1184
    %v1199 = vsel %vm134, %v1190, %v1178
    %v1200 = vsel %vm134, %v1192, %v1180
    %v1201 = vld [vmem:[%s143] ss:$8 sm:$0xf]
    %v1203 = vlaneseq
    %v1204 = vshrl.u32 %v1203, 7
    %v1205 = vsub.s32 0, %v1204
    %v1206 = vrot.slane %v1201, %v1205
    %v1207 = vlaneseq
    %v1208 = vshrl.u32 %v1207, 7
    %v1209 = vsub.s32 1, %v1208
    %v1210 = vrot.slane %v1201, %v1209
    %v1211 = vlaneseq
    %v1212 = vshrl.u32 %v1211, 7
    %v1213 = vsub.s32 2, %v1212
    %v1214 = vrot.slane %v1201, %v1213
    %v1215 = vlaneseq
    %v1216 = vshrl.u32 %v1215, 7
    %v1217 = vsub.s32 3, %v1216
    %v1218 = vrot.slane %v1201, %v1217
    %v1223 = vmul.f32 %v1199, %v1206
    %v1224 = vmul.f32 %v1197, %v1210
    %v1225 = vmul.f32 %v1195, %v1214
    %v1226 = vmul.f32 %v1193, %v1218
    %v1227 = vmul.f32 %v1200, %v1206
    %v1228 = vmul.f32 %v1198, %v1210
    %v1229 = vmul.f32 %v1196, %v1214
    %v1230 = vmul.f32 %v1194, %v1218
    %1231 = vst [vmem:[#allocation2 + $0x40] sm:$0xff] %v1223
    %1232 = vst [vmem:[#allocation2 + $0x48] sm:$0xff] %v1224
    %1233 = vst [vmem:[#allocation2 + $0x50] sm:$0xff] %v1225
    %1234 = vst [vmem:[#allocation2 + $0x58] sm:$0xff] %v1226
    %1235 = vst [vmem:[#allocation2 + $0x60] sm:$0xff] %v1227
    %1236 = vst [vmem:[#allocation2 + $0x68] sm:$0xff] %v1228
    %1237 = vst [vmem:[#allocation2 + $0x70] sm:$0xff] %v1229
    %1238 = vst [vmem:[#allocation2 + $0x78] sm:$0xff] %v1230
    %1239 = vrot.lane.b32.xlu0 %v1107, 15
    %v1240 = vpop.permute.xlu0 %1239
    %1241 = vrot.lane.b32.xlu0 %v1111, 15
    %v1242 = vpop.permute.xlu0 %1241
    %1243 = vrot.lane.b32.xlu0 %v1108, 15
    %v1244 = vpop.permute.xlu0 %1243
    %1245 = vrot.lane.b32.xlu0 %v1112, 15
    %v1246 = vpop.permute.xlu0 %1245
    %1247 = vrot.lane.b32.xlu0 %v1109, 15
    %v1248 = vpop.permute.xlu0 %1247
    %1249 = vrot.lane.b32.xlu0 %v1113, 15
    %v1250 = vpop.permute.xlu0 %1249
    %1251 = vrot.lane.b32.xlu0 %v1110, 15
    %v1252 = vpop.permute.xlu0 %1251
    %1253 = vrot.lane.b32.xlu0 %v1114, 15
    %v1254 = vpop.permute.xlu0 %1253
    %v1255 = vsel %vm198, %v1248, %v1252
    %v1256 = vsel %vm198, %v1250, %v1254
    %v1257 = vsel %vm198, %v1244, %v1248
    %v1258 = vsel %vm198, %v1246, %v1250
    %v1259 = vsel %vm198, %v1240, %v1244
    %v1260 = vsel %vm198, %v1242, %v1246
    %v1261 = vsel %vm198, %v1252, %v1240
    %v1262 = vsel %vm198, %v1254, %v1242
    %v1263 = vld [vmem:[%s207] ss:$8 sm:$0xf]
    %v1265 = vlaneseq
    %v1266 = vshrl.u32 %v1265, 7
    %v1267 = vsub.s32 0, %v1266
    %v1268 = vrot.slane %v1263, %v1267
    %v1269 = vlaneseq
    %v1270 = vshrl.u32 %v1269, 7
    %v1271 = vsub.s32 1, %v1270
    %v1272 = vrot.slane %v1263, %v1271
    %v1273 = vlaneseq
    %v1274 = vshrl.u32 %v1273, 7
    %v1275 = vsub.s32 2, %v1274
    %v1276 = vrot.slane %v1263, %v1275
    %v1277 = vlaneseq
    %v1278 = vshrl.u32 %v1277, 7
    %v1279 = vsub.s32 3, %v1278
    %v1280 = vrot.slane %v1263, %v1279
    %v1285 = vmul.f32 %v1261, %v1268
    %v1286 = vmul.f32 %v1259, %v1272
    %v1287 = vmul.f32 %v1257, %v1276
    %v1288 = vmul.f32 %v1255, %v1280
    %v1289 = vmul.f32 %v1262, %v1268
    %v1290 = vmul.f32 %v1260, %v1272
    %v1291 = vmul.f32 %v1258, %v1276
    %v1292 = vmul.f32 %v1256, %v1280
    %1293 = vst [vmem:[#allocation2 + $0x80] sm:$0xff] %v1285
    %1294 = vst [vmem:[#allocation2 + $0x88] sm:$0xff] %v1286
    %1295 = vst [vmem:[#allocation2 + $0x90] sm:$0xff] %v1287
    %1296 = vst [vmem:[#allocation2 + $0x98] sm:$0xff] %v1288
    %1297 = vst [vmem:[#allocation2 + $0xa0] sm:$0xff] %v1289
    %1298 = vst [vmem:[#allocation2 + $0xa8] sm:$0xff] %v1290
    %1299 = vst [vmem:[#allocation2 + $0xb0] sm:$0xff] %v1291
    %1300 = vst [vmem:[#allocation2 + $0xb8] sm:$0xff] %v1292
    %1301 = vrot.lane.b32.xlu0 %v1107, 1
    %v1302 = vpop.permute.xlu0 %1301
    %1303 = vrot.lane.b32.xlu0 %v1111, 1
    %v1304 = vpop.permute.xlu0 %1303
    %1305 = vrot.lane.b32.xlu0 %v1108, 1
    %v1306 = vpop.permute.xlu0 %1305
    %1307 = vrot.lane.b32.xlu0 %v1112, 1
    %v1308 = vpop.permute.xlu0 %1307
    %1309 = vrot.lane.b32.xlu0 %v1109, 1
    %v1310 = vpop.permute.xlu0 %1309
    %1311 = vrot.lane.b32.xlu0 %v1113, 1
    %v1312 = vpop.permute.xlu0 %1311
    %1313 = vrot.lane.b32.xlu0 %v1110, 1
    %v1314 = vpop.permute.xlu0 %1313
    %1315 = vrot.lane.b32.xlu0 %v1114, 1
    %v1316 = vpop.permute.xlu0 %1315
    %v1317 = vsel %vm262, %v1310, %v1314
    %v1318 = vsel %vm262, %v1312, %v1316
    %v1319 = vsel %vm262, %v1306, %v1310
    %v1320 = vsel %vm262, %v1308, %v1312
    %v1321 = vsel %vm262, %v1302, %v1306
    %v1322 = vsel %vm262, %v1304, %v1308
    %v1323 = vsel %vm262, %v1314, %v1302
    %v1324 = vsel %vm262, %v1316, %v1304
    %v1325 = vld [vmem:[%s271] ss:$8 sm:$0xf]
    %v1327 = vlaneseq
    %v1328 = vshrl.u32 %v1327, 7
    %v1329 = vsub.s32 0, %v1328
    %v1330 = vrot.slane %v1325, %v1329
    %v1331 = vlaneseq
    %v1332 = vshrl.u32 %v1331, 7
    %v1333 = vsub.s32 1, %v1332
    %v1334 = vrot.slane %v1325, %v1333
    %v1335 = vlaneseq
    %v1336 = vshrl.u32 %v1335, 7
    %v1337 = vsub.s32 2, %v1336
    %v1338 = vrot.slane %v1325, %v1337
    %v1339 = vlaneseq
    %v1340 = vshrl.u32 %v1339, 7
    %v1341 = vsub.s32 3, %v1340
    %v1342 = vrot.slane %v1325, %v1341
    %v1347 = vmul.f32 %v1323, %v1330
    %v1348 = vmul.f32 %v1321, %v1334
    %v1349 = vmul.f32 %v1319, %v1338
    %v1350 = vmul.f32 %v1317, %v1342
    %v1351 = vmul.f32 %v1324, %v1330
    %v1352 = vmul.f32 %v1322, %v1334
    %v1353 = vmul.f32 %v1320, %v1338
    %v1354 = vmul.f32 %v1318, %v1342
    %1355 = vst [vmem:[#allocation2 + $0xc0] sm:$0xff] %v1347
    %1356 = vst [vmem:[#allocation2 + $0xc8] sm:$0xff] %v1348
    %1357 = vst [vmem:[#allocation2 + $0xd0] sm:$0xff] %v1349
    %1358 = vst [vmem:[#allocation2 + $0xd8] sm:$0xff] %v1350
    %1359 = vst [vmem:[#allocation2 + $0xe0] sm:$0xff] %v1351
    %1360 = vst [vmem:[#allocation2 + $0xe8] sm:$0xff] %v1352
    %1361 = vst [vmem:[#allocation2 + $0xf0] sm:$0xff] %v1353
    %1362 = vst [vmem:[#allocation2 + $0xf8] sm:$0xff] %v1354
    %1363 = vst [vmem:[#allocation2 + $0x100] sm:$0xff] %v1107
    %1364 = vst [vmem:[#allocation2 + $0x108] sm:$0xff] %v1108
    %1365 = vst [vmem:[#allocation2 + $0x110] sm:$0xff] %v1109
    %1366 = vst [vmem:[#allocation2 + $0x118] sm:$0xff] %v1110
    %1367 = vst [vmem:[#allocation2 + $0x120] sm:$0xff] %v1111
    %1368 = vst [vmem:[#allocation2 + $0x128] sm:$0xff] %v1112
    %1369 = vst [vmem:[#allocation2 + $0x130] sm:$0xff] %v1113
    %1370 = vst [vmem:[#allocation2 + $0x138] sm:$0xff] %v1114
    %1371 = vrot.lane.b32.xlu0 %v1107, 127
    %v1372 = vpop.permute.xlu0 %1371
    %1373 = vrot.lane.b32.xlu0 %v1111, 127
    %v1374 = vpop.permute.xlu0 %1373
    %1375 = vrot.lane.b32.xlu0 %v1108, 127
    %v1376 = vpop.permute.xlu0 %1375
    %1377 = vrot.lane.b32.xlu0 %v1112, 127
    %v1378 = vpop.permute.xlu0 %1377
    %1379 = vrot.lane.b32.xlu0 %v1109, 127
    %v1380 = vpop.permute.xlu0 %1379
    %1381 = vrot.lane.b32.xlu0 %v1113, 127
    %v1382 = vpop.permute.xlu0 %1381
    %1383 = vrot.lane.b32.xlu0 %v1110, 127
    %v1384 = vpop.permute.xlu0 %1383
    %1385 = vrot.lane.b32.xlu0 %v1114, 127
    %v1386 = vpop.permute.xlu0 %1385
    %v1387 = vsel %vm334, %v1380, %v1384
    %v1388 = vsel %vm334, %v1382, %v1386
    %v1389 = vsel %vm334, %v1376, %v1380
    %v1390 = vsel %vm334, %v1378, %v1382
    %v1391 = vsel %vm334, %v1372, %v1376
    %v1392 = vsel %vm334, %v1374, %v1378
    %v1393 = vsel %vm334, %v1384, %v1372
    %v1394 = vsel %vm334, %v1386, %v1374
    %v1395 = vld [vmem:[%s343] ss:$8 sm:$0xf]
    %v1397 = vlaneseq
    %v1398 = vshrl.u32 %v1397, 7
    %v1399 = vsub.s32 0, %v1398
    %v1400 = vrot.slane %v1395, %v1399
    %v1401 = vlaneseq
    %v1402 = vshrl.u32 %v1401, 7
    %v1403 = vsub.s32 1, %v1402
    %v1404 = vrot.slane %v1395, %v1403
    %v1405 = vlaneseq
    %v1406 = vshrl.u32 %v1405, 7
    %v1407 = vsub.s32 2, %v1406
    %v1408 = vrot.slane %v1395, %v1407
    %v1409 = vlaneseq
    %v1410 = vshrl.u32 %v1409, 7
    %v1411 = vsub.s32 3, %v1410
    %v1412 = vrot.slane %v1395, %v1411
    %v1417 = vmul.f32 %v1391, %v1400
    %v1418 = vmul.f32 %v1389, %v1404
    %v1419 = vmul.f32 %v1387, %v1408
    %v1420 = vmul.f32 %v1393, %v1412
    %v1421 = vmul.f32 %v1392, %v1400
    %v1422 = vmul.f32 %v1390, %v1404
    %v1423 = vmul.f32 %v1388, %v1408
    %v1424 = vmul.f32 %v1394, %v1412
    %1425 = vst [vmem:[#allocation2 + $0x140] sm:$0xff] %v1417
    %1426 = vst [vmem:[#allocation2 + $0x148] sm:$0xff] %v1418
    %1427 = vst [vmem:[#allocation2 + $0x150] sm:$0xff] %v1419
    %1428 = vst [vmem:[#allocation2 + $0x158] sm:$0xff] %v1420
    %1429 = vst [vmem:[#allocation2 + $0x160] sm:$0xff] %v1421
    %1430 = vst [vmem:[#allocation2 + $0x168] sm:$0xff] %v1422
    %1431 = vst [vmem:[#allocation2 + $0x170] sm:$0xff] %v1423
    %1432 = vst [vmem:[#allocation2 + $0x178] sm:$0xff] %v1424
    %1433 = vrot.lane.b32.xlu0 %v1107, 113
    %v1434 = vpop.permute.xlu0 %1433
    %1435 = vrot.lane.b32.xlu0 %v1111, 113
    %v1436 = vpop.permute.xlu0 %1435
    %1437 = vrot.lane.b32.xlu0 %v1108, 113
    %v1438 = vpop.permute.xlu0 %1437
    %1439 = vrot.lane.b32.xlu0 %v1112, 113
    %v1440 = vpop.permute.xlu0 %1439
    %1441 = vrot.lane.b32.xlu0 %v1109, 113
    %v1442 = vpop.permute.xlu0 %1441
    %1443 = vrot.lane.b32.xlu0 %v1113, 113
    %v1444 = vpop.permute.xlu0 %1443
    %1445 = vrot.lane.b32.xlu0 %v1110, 113
    %v1446 = vpop.permute.xlu0 %1445
    %1447 = vrot.lane.b32.xlu0 %v1114, 113
    %v1448 = vpop.permute.xlu0 %1447
    %v1449 = vsel %vm398, %v1442, %v1446
    %v1450 = vsel %vm398, %v1444, %v1448
    %v1451 = vsel %vm398, %v1438, %v1442
    %v1452 = vsel %vm398, %v1440, %v1444
    %v1453 = vsel %vm398, %v1434, %v1438
    %v1454 = vsel %vm398, %v1436, %v1440
    %v1455 = vsel %vm398, %v1446, %v1434
    %v1456 = vsel %vm398, %v1448, %v1436
    %v1457 = vld [vmem:[%s407] ss:$8 sm:$0xf]
    %v1459 = vlaneseq
    %v1460 = vshrl.u32 %v1459, 7
    %v1461 = vsub.s32 0, %v1460
    %v1462 = vrot.slane %v1457, %v1461
    %v1463 = vlaneseq
    %v1464 = vshrl.u32 %v1463, 7
    %v1465 = vsub.s32 1, %v1464
    %v1466 = vrot.slane %v1457, %v1465
    %v1467 = vlaneseq
    %v1468 = vshrl.u32 %v1467, 7
    %v1469 = vsub.s32 2, %v1468
    %v1470 = vrot.slane %v1457, %v1469
    %v1471 = vlaneseq
    %v1472 = vshrl.u32 %v1471, 7
    %v1473 = vsub.s32 3, %v1472
    %v1474 = vrot.slane %v1457, %v1473
    %v1479 = vmul.f32 %v1453, %v1462
    %v1480 = vmul.f32 %v1451, %v1466
    %v1481 = vmul.f32 %v1449, %v1470
    %v1482 = vmul.f32 %v1455, %v1474
    %v1483 = vmul.f32 %v1454, %v1462
    %v1484 = vmul.f32 %v1452, %v1466
    %v1485 = vmul.f32 %v1450, %v1470
    %v1486 = vmul.f32 %v1456, %v1474
    %1487 = vst [vmem:[#allocation2 + $0x180] sm:$0xff] %v1479
    %1488 = vst [vmem:[#allocation2 + $0x188] sm:$0xff] %v1480
    %1489 = vst [vmem:[#allocation2 + $0x190] sm:$0xff] %v1481
    %1490 = vst [vmem:[#allocation2 + $0x198] sm:$0xff] %v1482
    %1491 = vst [vmem:[#allocation2 + $0x1a0] sm:$0xff] %v1483
    %1492 = vst [vmem:[#allocation2 + $0x1a8] sm:$0xff] %v1484
    %1493 = vst [vmem:[#allocation2 + $0x1b0] sm:$0xff] %v1485
    %1494 = vst [vmem:[#allocation2 + $0x1b8] sm:$0xff] %v1486
    %1495 = vrot.lane.b32.xlu0 %v1107, 112
    %v1496 = vpop.permute.xlu0 %1495
    %1497 = vrot.lane.b32.xlu0 %v1111, 112
    %v1498 = vpop.permute.xlu0 %1497
    %1499 = vrot.lane.b32.xlu0 %v1108, 112
    %v1500 = vpop.permute.xlu0 %1499
    %1501 = vrot.lane.b32.xlu0 %v1112, 112
    %v1502 = vpop.permute.xlu0 %1501
    %1503 = vrot.lane.b32.xlu0 %v1109, 112
    %v1504 = vpop.permute.xlu0 %1503
    %1505 = vrot.lane.b32.xlu0 %v1113, 112
    %v1506 = vpop.permute.xlu0 %1505
    %1507 = vrot.lane.b32.xlu0 %v1110, 112
    %v1508 = vpop.permute.xlu0 %1507
    %1509 = vrot.lane.b32.xlu0 %v1114, 112
    %v1510 = vpop.permute.xlu0 %1509
    %v1511 = vsel %vm462, %v1504, %v1508
    %v1512 = vsel %vm462, %v1506, %v1510
    %v1513 = vsel %vm462, %v1500, %v1504
    %v1514 = vsel %vm462, %v1502, %v1506
    %v1515 = vsel %vm462, %v1496, %v1500
    %v1516 = vsel %vm462, %v1498, %v1502
    %v1517 = vsel %vm462, %v1508, %v1496
    %v1518 = vsel %vm462, %v1510, %v1498
    %v1519 = vld [vmem:[%s471] ss:$8 sm:$0xf]
    %v1521 = vlaneseq
    %v1522 = vshrl.u32 %v1521, 7
    %v1523 = vsub.s32 0, %v1522
    %v1524 = vrot.slane %v1519, %v1523
    %v1525 = vlaneseq
    %v1526 = vshrl.u32 %v1525, 7
    %v1527 = vsub.s32 1, %v1526
    %v1528 = vrot.slane %v1519, %v1527
    %v1529 = vlaneseq
    %v1530 = vshrl.u32 %v1529, 7
    %v1531 = vsub.s32 2, %v1530
    %v1532 = vrot.slane %v1519, %v1531
    %v1533 = vlaneseq
    %v1534 = vshrl.u32 %v1533, 7
    %v1535 = vsub.s32 3, %v1534
    %v1536 = vrot.slane %v1519, %v1535
    %v1541 = vmul.f32 %v1515, %v1524
    %v1542 = vmul.f32 %v1513, %v1528
    %v1543 = vmul.f32 %v1511, %v1532
    %v1544 = vmul.f32 %v1517, %v1536
    %v1545 = vmul.f32 %v1516, %v1524
    %v1546 = vmul.f32 %v1514, %v1528
    %v1547 = vmul.f32 %v1512, %v1532
    %v1548 = vmul.f32 %v1518, %v1536
    %1549 = vst [vmem:[#allocation2 + $0x1c0] sm:$0xff] %v1541
    %1550 = vst [vmem:[#allocation2 + $0x1c8] sm:$0xff] %v1542
    %1551 = vst [vmem:[#allocation2 + $0x1d0] sm:$0xff] %v1543
    %1552 = vst [vmem:[#allocation2 + $0x1d8] sm:$0xff] %v1544
    %1553 = vst [vmem:[#allocation2 + $0x1e0] sm:$0xff] %v1545
    %1554 = vst [vmem:[#allocation2 + $0x1e8] sm:$0xff] %v1546
    %1555 = vst [vmem:[#allocation2 + $0x1f0] sm:$0xff] %v1547
    %1556 = vst [vmem:[#allocation2 + $0x1f8] sm:$0xff] %v1548
    %1557 = vrot.lane.b32.xlu0 %v1107, 111
    %v1558 = vpop.permute.xlu0 %1557
    %1559 = vrot.lane.b32.xlu0 %v1111, 111
    %v1560 = vpop.permute.xlu0 %1559
    %1561 = vrot.lane.b32.xlu0 %v1108, 111
    %v1562 = vpop.permute.xlu0 %1561
    %1563 = vrot.lane.b32.xlu0 %v1112, 111
    %v1564 = vpop.permute.xlu0 %1563
    %1565 = vrot.lane.b32.xlu0 %v1109, 111
    %v1566 = vpop.permute.xlu0 %1565
    %1567 = vrot.lane.b32.xlu0 %v1113, 111
    %v1568 = vpop.permute.xlu0 %1567
    %1569 = vrot.lane.b32.xlu0 %v1110, 111
    %v1570 = vpop.permute.xlu0 %1569
    %1571 = vrot.lane.b32.xlu0 %v1114, 111
    %v1572 = vpop.permute.xlu0 %1571
    %v1573 = vsel %vm526, %v1566, %v1570
    %v1574 = vsel %vm526, %v1568, %v1572
    %v1575 = vsel %vm526, %v1562, %v1566
    %v1576 = vsel %vm526, %v1564, %v1568
    %v1577 = vsel %vm526, %v1558, %v1562
    %v1578 = vsel %vm526, %v1560, %v1564
    %v1579 = vsel %vm526, %v1570, %v1558
    %v1580 = vsel %vm526, %v1572, %v1560
    %v1581 = vld [vmem:[%s535] ss:$8 sm:$0xf]
    %v1583 = vlaneseq
    %v1584 = vshrl.u32 %v1583, 7
    %v1585 = vsub.s32 0, %v1584
    %v1586 = vrot.slane %v1581, %v1585
    %v1587 = vlaneseq
    %v1588 = vshrl.u32 %v1587, 7
    %v1589 = vsub.s32 1, %v1588
    %v1590 = vrot.slane %v1581, %v1589
    %v1591 = vlaneseq
    %v1592 = vshrl.u32 %v1591, 7
    %v1593 = vsub.s32 2, %v1592
    %v1594 = vrot.slane %v1581, %v1593
    %v1595 = vlaneseq
    %v1596 = vshrl.u32 %v1595, 7
    %v1597 = vsub.s32 3, %v1596
    %v1598 = vrot.slane %v1581, %v1597
    %v1603 = vmul.f32 %v1577, %v1586
    %v1604 = vmul.f32 %v1575, %v1590
    %v1605 = vmul.f32 %v1573, %v1594
    %v1606 = vmul.f32 %v1579, %v1598
    %v1607 = vmul.f32 %v1578, %v1586
    %v1608 = vmul.f32 %v1576, %v1590
    %v1609 = vmul.f32 %v1574, %v1594
    %v1610 = vmul.f32 %v1580, %v1598
    %1611 = vst [vmem:[#allocation2 + $0x200] sm:$0xff] %v1603
    %1612 = vst [vmem:[#allocation2 + $0x208] sm:$0xff] %v1604
    %1613 = vst [vmem:[#allocation2 + $0x210] sm:$0xff] %v1605
    %1614 = vst [vmem:[#allocation2 + $0x218] sm:$0xff] %v1606
    %1615 = vst [vmem:[#allocation2 + $0x220] sm:$0xff] %v1607
    %1616 = vst [vmem:[#allocation2 + $0x228] sm:$0xff] %v1608
    %1617 = vst [vmem:[#allocation2 + $0x230] sm:$0xff] %v1609
    %1618 = vst [vmem:[#allocation2 + $0x238] sm:$0xff] %v1610
    %v1619 = vld [vmem:[%s4] sm:$0xff]
    %v1620 = vld [vmem:[%s4 + $0x8] sm:$0xff]
    %v1621 = vld [vmem:[%s4 + $0x10] sm:$0xff]
    %v1622 = vld [vmem:[%s4 + $0x18] sm:$0xff]
    %v1623 = vld [vmem:[#allocation2] sm:$0xff]
    %v1624 = vld [vmem:[#allocation2 + $0x8] sm:$0xff]
    %v1625 = vld [vmem:[#allocation2 + $0x10] sm:$0xff]
    %v1626 = vld [vmem:[#allocation2 + $0x18] sm:$0xff]
    %v1627 = vld [vmem:[#allocation2 + $0x20] sm:$0xff]
    %v1628 = vld [vmem:[#allocation2 + $0x28] sm:$0xff]
    %v1629 = vld [vmem:[#allocation2 + $0x30] sm:$0xff]
    %v1630 = vld [vmem:[#allocation2 + $0x38] sm:$0xff]
    %v1631 = vld [vmem:[#allocation2 + $0x40] sm:$0xff]
    %v1632 = vld [vmem:[#allocation2 + $0x48] sm:$0xff]
    %v1633 = vld [vmem:[#allocation2 + $0x50] sm:$0xff]
    %v1634 = vld [vmem:[#allocation2 + $0x58] sm:$0xff]
    %v1635 = vld [vmem:[#allocation2 + $0x60] sm:$0xff]
    %v1636 = vld [vmem:[#allocation2 + $0x68] sm:$0xff]
    %v1637 = vld [vmem:[#allocation2 + $0x70] sm:$0xff]
    %v1638 = vld [vmem:[#allocation2 + $0x78] sm:$0xff]
    %v1639 = vld [vmem:[#allocation2 + $0x80] sm:$0xff]
    %v1640 = vld [vmem:[#allocation2 + $0x88] sm:$0xff]
    %v1641 = vld [vmem:[#allocation2 + $0x90] sm:$0xff]
    %v1642 = vld [vmem:[#allocation2 + $0x98] sm:$0xff]
    %v1643 = vld [vmem:[#allocation2 + $0xa0] sm:$0xff]
    %v1644 = vld [vmem:[#allocation2 + $0xa8] sm:$0xff]
    %v1645 = vld [vmem:[#allocation2 + $0xb0] sm:$0xff]
    %v1646 = vld [vmem:[#allocation2 + $0xb8] sm:$0xff]
    %v1647 = vld [vmem:[#allocation2 + $0xc0] sm:$0xff]
    %v1648 = vld [vmem:[#allocation2 + $0xc8] sm:$0xff]
    %v1649 = vld [vmem:[#allocation2 + $0xd0] sm:$0xff]
    %v1650 = vld [vmem:[#allocation2 + $0xd8] sm:$0xff]
    %v1651 = vld [vmem:[#allocation2 + $0xe0] sm:$0xff]
    %v1652 = vld [vmem:[#allocation2 + $0xe8] sm:$0xff]
    %v1653 = vld [vmem:[#allocation2 + $0xf0] sm:$0xff]
    %v1654 = vld [vmem:[#allocation2 + $0xf8] sm:$0xff]
    %v1655 = vld [vmem:[#allocation2 + $0x100] sm:$0xff]
    %v1656 = vld [vmem:[#allocation2 + $0x108] sm:$0xff]
    %v1657 = vld [vmem:[#allocation2 + $0x110] sm:$0xff]
    %v1658 = vld [vmem:[#allocation2 + $0x118] sm:$0xff]
    %v1659 = vld [vmem:[#allocation2 + $0x120] sm:$0xff]
    %v1660 = vld [vmem:[#allocation2 + $0x128] sm:$0xff]
    %v1661 = vld [vmem:[#allocation2 + $0x130] sm:$0xff]
    %v1662 = vld [vmem:[#allocation2 + $0x138] sm:$0xff]
    %v1663 = vld [vmem:[#allocation2 + $0x140] sm:$0xff]
    %v1664 = vld [vmem:[#allocation2 + $0x148] sm:$0xff]
    %v1665 = vld [vmem:[#allocation2 + $0x150] sm:$0xff]
    %v1666 = vld [vmem:[#allocation2 + $0x158] sm:$0xff]
    %v1667 = vld [vmem:[#allocation2 + $0x160] sm:$0xff]
    %v1668 = vld [vmem:[#allocation2 + $0x168] sm:$0xff]
    %v1669 = vld [vmem:[#allocation2 + $0x170] sm:$0xff]
    %v1670 = vld [vmem:[#allocation2 + $0x178] sm:$0xff]
    %v1671 = vld [vmem:[#allocation2 + $0x180] sm:$0xff]
    %v1672 = vld [vmem:[#allocation2 + $0x188] sm:$0xff]
    %v1673 = vld [vmem:[#allocation2 + $0x190] sm:$0xff]
    %v1674 = vld [vmem:[#allocation2 + $0x198] sm:$0xff]
    %v1675 = vld [vmem:[#allocation2 + $0x1a0] sm:$0xff]
    %v1676 = vld [vmem:[#allocation2 + $0x1a8] sm:$0xff]
    %v1677 = vld [vmem:[#allocation2 + $0x1b0] sm:$0xff]
    %v1678 = vld [vmem:[#allocation2 + $0x1b8] sm:$0xff]
    %v1679 = vld [vmem:[#allocation2 + $0x1c0] sm:$0xff]
    %v1680 = vld [vmem:[#allocation2 + $0x1c8] sm:$0xff]
    %v1681 = vld [vmem:[#allocation2 + $0x1d0] sm:$0xff]
    %v1682 = vld [vmem:[#allocation2 + $0x1d8] sm:$0xff]
    %v1683 = vld [vmem:[#allocation2 + $0x1e0] sm:$0xff]
    %v1684 = vld [vmem:[#allocation2 + $0x1e8] sm:$0xff]
    %v1685 = vld [vmem:[#allocation2 + $0x1f0] sm:$0xff]
    %v1686 = vld [vmem:[#allocation2 + $0x1f8] sm:$0xff]
    %v1687 = vld [vmem:[#allocation2 + $0x200] sm:$0xff]
    %v1688 = vld [vmem:[#allocation2 + $0x208] sm:$0xff]
    %v1689 = vld [vmem:[#allocation2 + $0x210] sm:$0xff]
    %v1690 = vld [vmem:[#allocation2 + $0x218] sm:$0xff]
    %v1691 = vld [vmem:[#allocation2 + $0x220] sm:$0xff]
    %v1692 = vld [vmem:[#allocation2 + $0x228] sm:$0xff]
    %v1693 = vld [vmem:[#allocation2 + $0x230] sm:$0xff]
    %v1694 = vld [vmem:[#allocation2 + $0x238] sm:$0xff]
    %v1696 = vsel %vm650, %v1620, 0
    %v1699 = vsel %vm650, %v1622, 0
    %1701 = vmatprep.subr.mxu0 %v1624
    %1702 = vmatpush1.msra.mxu0 %v1623
    %1703 = vmatprep.subr.mxu0 %v1628
    %1704 = vmatpush1.msra.mxu0 %v1627
    %1705 = vmatprep.subr.mxu0 %v1632
    %1706 = vmatpush1.msra.mxu0 %v1631
    %1707 = vmatprep.subr.mxu0 %v1636
    %1708 = vmatpush1.msra.mxu0 %v1635
    %1709 = vmatprep.subr.mxu0 %v1640
    %1710 = vmatpush1.msra.mxu0 %v1639
    %1711 = vmatprep.subr.mxu0 %v1644
    %1712 = vmatpush1.msra.mxu0 %v1643
    %1713 = vmatprep.subr.mxu0 %v1648
    %1714 = vmatpush1.msra.mxu0 %v1647
    %1715 = vmatprep.subr.mxu0 %v1652
    %1716 = vmatpush1.msra.mxu0 %v1651
    %1717 = vmatprep.subr.mxu0 %v1656
    %1718 = vmatpush1.msra.mxu0 %v1655
    %1719 = vmatprep.subr.mxu0 %v1660
    %1720 = vmatpush1.msra.mxu0 %v1659
    %1721 = vmatprep.subr.mxu0 %v1664
    %1722 = vmatpush1.msra.mxu0 %v1663
    %1723 = vmatprep.subr.mxu0 %v1668
    %1724 = vmatpush1.msra.mxu0 %v1667
    %1725 = vmatprep.subr.mxu0 %v1672
    %1726 = vmatpush1.msra.mxu0 %v1671
    %1727 = vmatprep.subr.mxu0 %v1676
    %1728 = vmatpush1.msra.mxu0 %v1675
    %1729 = vmatprep.subr.mxu0 %v1680
    %1730 = vmatpush1.msra.mxu0 %v1679
    %1731 = vmatprep.subr.mxu0 %v1684
    %1732 = vmatpush1.msra.mxu0 %v1683
    %1733 = vmatprep.subr.mxu0 %v1688
    %1734 = vmatpush1.msra.mxu0 %v1687
    %1735 = vmatprep.subr.mxu0 %v1692
    %1736 = vmatpush1.msra.mxu0 %v1691
    %1737 = vmatprep.subr.mxu0 0.0
    %1738 = vmatpush1.msra.mxu0 0.0
    %1739 = vmatprep.subr.mxu0 0.0
    %1740 = vmatpush1.msra.mxu0 0.0
    %1741 = vmatprep.subr.mxu0 0.0
    %1742 = vmatpush1.msra.mxu0 0.0
    %1743 = vmatprep.subr.mxu0 0.0
    %1744 = vmatpush1.msra.mxu0 0.0
    %1745 = vmatprep.subr.mxu0 0.0
    %1746 = vmatpush1.msra.mxu0 0.0
    %1747 = vmatprep.subr.mxu0 0.0
    %1748 = vmatpush1.msra.mxu0 0.0
    %1749 = vmatprep.subr.mxu0 0.0
    %1750 = vmatpush1.msra.mxu0 0.0
    %1751 = vmatprep.subr.mxu0 0.0
    %1752 = vmatpush1.msra.mxu0 0.0
    %1753 = vmatprep.subr.mxu0 0.0
    %1754 = vmatpush1.msra.mxu0 0.0
    %1755 = vmatprep.subr.mxu0 0.0
    %1756 = vmatpush1.msra.mxu0 0.0
    %1757 = vmatprep.subr.mxu0 0.0
    %1758 = vmatpush1.msra.mxu0 0.0
    %1759 = vmatprep.subr.mxu0 0.0
    %1760 = vmatpush1.msra.mxu0 0.0
    %1761 = vmatprep.subr.mxu0 0.0
    %1762 = vmatpush1.msra.mxu0 0.0
    %1763 = vmatprep.subr.mxu0 0.0
    %1764 = vmatpush1.msra.mxu0 0.0
    %1765 = vmatprep.mubr.f32.mxu0 %v1696
    %1766 = vmatmul.mubr.f32.gmra.mrb[0].mxu0 %v1619
    %v1767 = vpop.f32.mrb[0].mxu0
    %v1768 = vadd.f32 0.0, %v1767
    %v1769 = vpop.f32.mrb[0].mxu0
    %v1770 = vadd.f32 0.0, %v1769
    %1771 = vmatprep.mubr.f32.mxu0 %v1699
    %1772 = vmatmul.mubr.f32.gmra.mrb[0].mxu0 %v1621
    %v1773 = vpop.f32.mrb[0].mxu0
    %v1774 = vadd.f32 0.0, %v1773
    %v1775 = vpop.f32.mrb[0].mxu0
    %v1776 = vadd.f32 0.0, %v1775
    %1777 = vdwg.mxu0
    %1778 = vmatprep.subr.mxu0 %v1626
    %1779 = vmatpush1.msra.mxu0 %v1625
    %1780 = vmatprep.subr.mxu0 %v1630
    %1781 = vmatpush1.msra.mxu0 %v1629
    %1782 = vmatprep.subr.mxu0 %v1634
    %1783 = vmatpush1.msra.mxu0 %v1633
    %1784 = vmatprep.subr.mxu0 %v1638
    %1785 = vmatpush1.msra.mxu0 %v1637
    %1786 = vmatprep.subr.mxu0 %v1642
    %1787 = vmatpush1.msra.mxu0 %v1641
    %1788 = vmatprep.subr.mxu0 %v1646
    %1789 = vmatpush1.msra.mxu0 %v1645
    %1790 = vmatprep.subr.mxu0 %v1650
    %1791 = vmatpush1.msra.mxu0 %v1649
    %1792 = vmatprep.subr.mxu0 %v1654
    %1793 = vmatpush1.msra.mxu0 %v1653
    %1794 = vmatprep.subr.mxu0 %v1658
    %1795 = vmatpush1.msra.mxu0 %v1657
    %1796 = vmatprep.subr.mxu0 %v1662
    %1797 = vmatpush1.msra.mxu0 %v1661
    %1798 = vmatprep.subr.mxu0 %v1666
    %1799 = vmatpush1.msra.mxu0 %v1665
    %1800 = vmatprep.subr.mxu0 %v1670
    %1801 = vmatpush1.msra.mxu0 %v1669
    %1802 = vmatprep.subr.mxu0 %v1674
    %1803 = vmatpush1.msra.mxu0 %v1673
    %1804 = vmatprep.subr.mxu0 %v1678
    %1805 = vmatpush1.msra.mxu0 %v1677
    %1806 = vmatprep.subr.mxu0 %v1682
    %1807 = vmatpush1.msra.mxu0 %v1681
    %1808 = vmatprep.subr.mxu0 %v1686
    %1809 = vmatpush1.msra.mxu0 %v1685
    %1810 = vmatprep.subr.mxu0 %v1690
    %1811 = vmatpush1.msra.mxu0 %v1689
    %1812 = vmatprep.subr.mxu0 %v1694
    %1813 = vmatpush1.msra.mxu0 %v1693
    %1814 = vmatprep.subr.mxu0 0.0
    %1815 = vmatpush1.msra.mxu0 0.0
    %1816 = vmatprep.subr.mxu0 0.0
    %1817 = vmatpush1.msra.mxu0 0.0
    %1818 = vmatprep.subr.mxu0 0.0
    %1819 = vmatpush1.msra.mxu0 0.0
    %1820 = vmatprep.subr.mxu0 0.0
    %1821 = vmatpush1.msra.mxu0 0.0
    %1822 = vmatprep.subr.mxu0 0.0
    %1823 = vmatpush1.msra.mxu0 0.0
    %1824 = vmatprep.subr.mxu0 0.0
    %1825 = vmatpush1.msra.mxu0 0.0
    %1826 = vmatprep.subr.mxu0 0.0
    %1827 = vmatpush1.msra.mxu0 0.0
    %1828 = vmatprep.subr.mxu0 0.0
    %1829 = vmatpush1.msra.mxu0 0.0
    %1830 = vmatprep.subr.mxu0 0.0
    %1831 = vmatpush1.msra.mxu0 0.0
    %1832 = vmatprep.subr.mxu0 0.0
    %1833 = vmatpush1.msra.mxu0 0.0
    %1834 = vmatprep.subr.mxu0 0.0
    %1835 = vmatpush1.msra.mxu0 0.0
    %1836 = vmatprep.subr.mxu0 0.0
    %1837 = vmatpush1.msra.mxu0 0.0
    %1838 = vmatprep.subr.mxu0 0.0
    %1839 = vmatpush1.msra.mxu0 0.0
    %1840 = vmatprep.subr.mxu0 0.0
    %1841 = vmatpush1.msra.mxu0 0.0
    %1842 = vmatprep.mubr.f32.mxu0 %v1696
    %1843 = vmatmul.mubr.f32.gmra.mrb[0].mxu0 %v1619
    %v1844 = vpop.f32.mrb[0].mxu0
    %v1845 = vadd.f32 0.0, %v1844
    %v1846 = vpop.f32.mrb[0].mxu0
    %v1847 = vadd.f32 0.0, %v1846
    %1848 = vmatprep.mubr.f32.mxu0 %v1699
    %1849 = vmatmul.mubr.f32.gmra.mrb[0].mxu0 %v1621
    %v1850 = vpop.f32.mrb[0].mxu0
    %v1851 = vadd.f32 0.0, %v1850
    %v1852 = vpop.f32.mrb[0].mxu0
    %v1853 = vadd.f32 0.0, %v1852
    %1854 = vdwg.mxu0
    %v1855 = vld [vmem:[%s5] sm:$0xff]
    %v1856 = vld [vmem:[%s5 + $0x8] sm:$0xff]
    %v1857 = vld [vmem:[%s6] sm:$0xff]
    %v1858 = vld [vmem:[%s6 + $0x8] sm:$0xff]
    %v1859 = vmul.f32 %v1768, %v1768
    %v1860 = vmul.f32 %v1770, %v1770
    %v1861 = vmul.f32 %v1845, %v1845
    %v1862 = vmul.f32 %v1847, %v1847
    %v1863 = vmul.f32 %v1774, %v1774
    %v1864 = vmul.f32 %v1776, %v1776
    %v1865 = vmul.f32 %v1851, %v1851
    %v1866 = vmul.f32 %v1853, %v1853
    %v1867 = vld [vmem:[%s10] sm:$0xff]
    %v1868 = vld [vmem:[%s10 + $0x8] sm:$0xff]
    %v1869 = vld [vmem:[%s10 + $0x10] sm:$0xff]
    %v1870 = vld [vmem:[%s10 + $0x18] sm:$0xff]
    %v1871 = vld [vmem:[%s10 + $0x20] sm:$0xff]
    %v1872 = vld [vmem:[%s10 + $0x28] sm:$0xff]
    %v1873 = vld [vmem:[%s10 + $0x30] sm:$0xff]
    %v1874 = vld [vmem:[%s10 + $0x38] sm:$0xff]
    %v1875 = vld [vmem:[%s10 + $0x40] sm:$0xff]
    %v1876 = vld [vmem:[%s10 + $0x48] sm:$0xff]
    %v1877 = vld [vmem:[%s10 + $0x50] sm:$0xff]
    %v1878 = vld [vmem:[%s10 + $0x58] sm:$0xff]
    %v1879 = vld [vmem:[%s10 + $0x60] sm:$0xff]
    %v1880 = vld [vmem:[%s10 + $0x68] sm:$0xff]
    %v1881 = vld [vmem:[%s10 + $0x70] sm:$0xff]
    %v1882 = vld [vmem:[%s10 + $0x78] sm:$0xff]
    %v1883 = vld [vmem:[%s10 + $0x80] sm:$0xff]
    %v1884 = vld [vmem:[%s10 + $0x88] sm:$0xff]
    %v1885 = vld [vmem:[%s10 + $0x90] sm:$0xff]
    %v1886 = vld [vmem:[%s10 + $0x98] sm:$0xff]
    %v1887 = vld [vmem:[%s10 + $0xa0] sm:$0xff]
    %v1888 = vld [vmem:[%s10 + $0xa8] sm:$0xff]
    %v1889 = vld [vmem:[%s10 + $0xb0] sm:$0xff]
    %v1890 = vld [vmem:[%s10 + $0xb8] sm:$0xff]
    %v1891 = vld [vmem:[%s10 + $0xc0] sm:$0xff]
    %v1892 = vld [vmem:[%s10 + $0xc8] sm:$0xff]
    %v1893 = vld [vmem:[%s10 + $0xd0] sm:$0xff]
    %v1894 = vld [vmem:[%s10 + $0xd8] sm:$0xff]
    %v1895 = vld [vmem:[%s10 + $0xe0] sm:$0xff]
    %v1896 = vld [vmem:[%s10 + $0xe8] sm:$0xff]
    %v1897 = vld [vmem:[%s10 + $0xf0] sm:$0xff]
    %v1898 = vld [vmem:[%s10 + $0xf8] sm:$0xff]
    %v1899 = vld [vmem:[%s10 + $0x100] sm:$0xff]
    %v1900 = vld [vmem:[%s10 + $0x108] sm:$0xff]
    %v1901 = vld [vmem:[%s10 + $0x110] sm:$0xff]
    %v1902 = vld [vmem:[%s10 + $0x118] sm:$0xff]
    %v1903 = vld [vmem:[%s10 + $0x120] sm:$0xff]
    %v1904 = vld [vmem:[%s10 + $0x128] sm:$0xff]
    %v1905 = vld [vmem:[%s10 + $0x130] sm:$0xff]
    %v1906 = vld [vmem:[%s10 + $0x138] sm:$0xff]
    %v1907 = vld [vmem:[%s10 + $0x140] sm:$0xff]
    %v1908 = vld [vmem:[%s10 + $0x148] sm:$0xff]
    %v1909 = vld [vmem:[%s10 + $0x150] sm:$0xff]
    %v1910 = vld [vmem:[%s10 + $0x158] sm:$0xff]
    %v1911 = vld [vmem:[%s10 + $0x160] sm:$0xff]
    %v1912 = vld [vmem:[%s10 + $0x168] sm:$0xff]
    %v1913 = vld [vmem:[%s10 + $0x170] sm:$0xff]
    %v1914 = vld [vmem:[%s10 + $0x178] sm:$0xff]
    %v1915 = vld [vmem:[%s10 + $0x180] sm:$0xff]
    %v1916 = vld [vmem:[%s10 + $0x188] sm:$0xff]
    %v1917 = vld [vmem:[%s10 + $0x190] sm:$0xff]
    %v1918 = vld [vmem:[%s10 + $0x198] sm:$0xff]
    %v1919 = vld [vmem:[%s10 + $0x1a0] sm:$0xff]
    %v1920 = vld [vmem:[%s10 + $0x1a8] sm:$0xff]
    %v1921 = vld [vmem:[%s10 + $0x1b0] sm:$0xff]
    %v1922 = vld [vmem:[%s10 + $0x1b8] sm:$0xff]
    %v1923 = vld [vmem:[%s10 + $0x1c0] sm:$0xff]
    %v1924 = vld [vmem:[%s10 + $0x1c8] sm:$0xff]
    %v1925 = vld [vmem:[%s10 + $0x1d0] sm:$0xff]
    %v1926 = vld [vmem:[%s10 + $0x1d8] sm:$0xff]
    %v1927 = vld [vmem:[%s10 + $0x1e0] sm:$0xff]
    %v1928 = vld [vmem:[%s10 + $0x1e8] sm:$0xff]
    %v1929 = vld [vmem:[%s10 + $0x1f0] sm:$0xff]
    %v1930 = vld [vmem:[%s10 + $0x1f8] sm:$0xff]
    %1931 = vmatprep.subr.mxu0 0.0
    %1932 = vmatpush1.msra.mxu0 %v1867
    %1933 = vmatprep.subr.mxu0 0.0
    %1934 = vmatpush1.msra.mxu0 %v1868
    %1935 = vmatprep.subr.mxu0 0.0
    %1936 = vmatpush1.msra.mxu0 %v1869
    %1937 = vmatprep.subr.mxu0 0.0
    %1938 = vmatpush1.msra.mxu0 %v1870
    %1939 = vmatprep.subr.mxu0 0.0
    %1940 = vmatpush1.msra.mxu0 %v1871
    %1941 = vmatprep.subr.mxu0 0.0
    %1942 = vmatpush1.msra.mxu0 %v1872
    %1943 = vmatprep.subr.mxu0 0.0
    %1944 = vmatpush1.msra.mxu0 %v1873
    %1945 = vmatprep.subr.mxu0 0.0
    %1946 = vmatpush1.msra.mxu0 %v1874
    %1947 = vmatprep.subr.mxu0 0.0
    %1948 = vmatpush1.msra.mxu0 %v1875
    %1949 = vmatprep.subr.mxu0 0.0
    %1950 = vmatpush1.msra.mxu0 %v1876
    %1951 = vmatprep.subr.mxu0 0.0
    %1952 = vmatpush1.msra.mxu0 %v1877
    %1953 = vmatprep.subr.mxu0 0.0
    %1954 = vmatpush1.msra.mxu0 %v1878
    %1955 = vmatprep.subr.mxu0 0.0
    %1956 = vmatpush1.msra.mxu0 %v1879
    %1957 = vmatprep.subr.mxu0 0.0
    %1958 = vmatpush1.msra.mxu0 %v1880
    %1959 = vmatprep.subr.mxu0 0.0
    %1960 = vmatpush1.msra.mxu0 %v1881
    %1961 = vmatprep.subr.mxu0 0.0
    %1962 = vmatpush1.msra.mxu0 %v1882
    %1963 = vmatprep.subr.mxu0 0.0
    %1964 = vmatpush1.msra.mxu0 %v1883
    %1965 = vmatprep.subr.mxu0 0.0
    %1966 = vmatpush1.msra.mxu0 %v1884
    %1967 = vmatprep.subr.mxu0 0.0
    %1968 = vmatpush1.msra.mxu0 %v1885
    %1969 = vmatprep.subr.mxu0 0.0
    %1970 = vmatpush1.msra.mxu0 %v1886
    %1971 = vmatprep.subr.mxu0 0.0
    %1972 = vmatpush1.msra.mxu0 %v1887
    %1973 = vmatprep.subr.mxu0 0.0
    %1974 = vmatpush1.msra.mxu0 %v1888
    %1975 = vmatprep.subr.mxu0 0.0
    %1976 = vmatpush1.msra.mxu0 %v1889
    %1977 = vmatprep.subr.mxu0 0.0
    %1978 = vmatpush1.msra.mxu0 %v1890
    %1979 = vmatprep.subr.mxu0 0.0
    %1980 = vmatpush1.msra.mxu0 %v1891
    %1981 = vmatprep.subr.mxu0 0.0
    %1982 = vmatpush1.msra.mxu0 %v1892
    %1983 = vmatprep.subr.mxu0 0.0
    %1984 = vmatpush1.msra.mxu0 %v1893
    %1985 = vmatprep.subr.mxu0 0.0
    %1986 = vmatpush1.msra.mxu0 %v1894
    %1987 = vmatprep.subr.mxu0 0.0
    %1988 = vmatpush1.msra.mxu0 %v1895
    %1989 = vmatprep.subr.mxu0 0.0
    %1990 = vmatpush1.msra.mxu0 %v1896
    %1991 = vmatprep.subr.mxu0 0.0
    %1992 = vmatpush1.msra.mxu0 %v1897
    %1993 = vmatprep.subr.mxu0 0.0
    %1994 = vmatpush1.msra.mxu0 %v1898
    %1995 = vmatprep.mubr.f32.mxu0 %v1770
    %1996 = vmatmul.mubr.f32.gmra.mrb[0].mxu0 %v1768
    %v1997 = vpop.f32.mrb[0].mxu0
    %v1998 = vadd.f32 0.0, %v1997
    %v1999 = vpop.f32.mrb[0].mxu0
    %2000 = vmatprep.mubr.f32.mxu0 %v1776
    %2001 = vmatmul.mubr.f32.gmra.mrb[0].mxu0 %v1774
    %v2002 = vpop.f32.mrb[0].mxu0
    %v2003 = vadd.f32 0.0, %v2002
    %v2004 = vpop.f32.mrb[0].mxu0
    %2005 = vmatprep.mubr.f32.mxu0 %v1860
    %2006 = vmatmul.mubr.f32.gmra.mrb[0].mxu0 %v1859
    %v2007 = vpop.f32.mrb[0].mxu0
    %v2008 = vadd.f32 0.0, %v2007
    %v2009 = vpop.f32.mrb[0].mxu0
    %2010 = vmatprep.mubr.f32.mxu0 %v1864
    %2011 = vmatmul.mubr.f32.gmra.mrb[0].mxu0 %v1863
    %v2012 = vpop.f32.mrb[0].mxu0
    %v2013 = vadd.f32 0.0, %v2012
    %v2014 = vpop.f32.mrb[0].mxu0
    %2015 = vdwg.mxu0
    %2016 = vmatprep.subr.mxu0 0.0
    %2017 = vmatpush1.msra.mxu0 %v1899
    %2018 = vmatprep.subr.mxu0 0.0
    %2019 = vmatpush1.msra.mxu0 %v1900
    %2020 = vmatprep.subr.mxu0 0.0
    %2021 = vmatpush1.msra.mxu0 %v1901
    %2022 = vmatprep.subr.mxu0 0.0
    %2023 = vmatpush1.msra.mxu0 %v1902
    %2024 = vmatprep.subr.mxu0 0.0
    %2025 = vmatpush1.msra.mxu0 %v1903
    %2026 = vmatprep.subr.mxu0 0.0
    %2027 = vmatpush1.msra.mxu0 %v1904
    %2028 = vmatprep.subr.mxu0 0.0
    %2029 = vmatpush1.msra.mxu0 %v1905
    %2030 = vmatprep.subr.mxu0 0.0
    %2031 = vmatpush1.msra.mxu0 %v1906
    %2032 = vmatprep.subr.mxu0 0.0
    %2033 = vmatpush1.msra.mxu0 %v1907
    %2034 = vmatprep.subr.mxu0 0.0
    %2035 = vmatpush1.msra.mxu0 %v1908
    %2036 = vmatprep.subr.mxu0 0.0
    %2037 = vmatpush1.msra.mxu0 %v1909
    %2038 = vmatprep.subr.mxu0 0.0
    %2039 = vmatpush1.msra.mxu0 %v1910
    %2040 = vmatprep.subr.mxu0 0.0
    %2041 = vmatpush1.msra.mxu0 %v1911
    %2042 = vmatprep.subr.mxu0 0.0
    %2043 = vmatpush1.msra.mxu0 %v1912
    %2044 = vmatprep.subr.mxu0 0.0
    %2045 = vmatpush1.msra.mxu0 %v1913
    %2046 = vmatprep.subr.mxu0 0.0
    %2047 = vmatpush1.msra.mxu0 %v1914
    %2048 = vmatprep.subr.mxu0 0.0
    %2049 = vmatpush1.msra.mxu0 %v1915
    %2050 = vmatprep.subr.mxu0 0.0
    %2051 = vmatpush1.msra.mxu0 %v1916
    %2052 = vmatprep.subr.mxu0 0.0
    %2053 = vmatpush1.msra.mxu0 %v1917
    %2054 = vmatprep.subr.mxu0 0.0
    %2055 = vmatpush1.msra.mxu0 %v1918
    %2056 = vmatprep.subr.mxu0 0.0
    %2057 = vmatpush1.msra.mxu0 %v1919
    %2058 = vmatprep.subr.mxu0 0.0
    %2059 = vmatpush1.msra.mxu0 %v1920
    %2060 = vmatprep.subr.mxu0 0.0
    %2061 = vmatpush1.msra.mxu0 %v1921
    %2062 = vmatprep.subr.mxu0 0.0
    %2063 = vmatpush1.msra.mxu0 %v1922
    %2064 = vmatprep.subr.mxu0 0.0
    %2065 = vmatpush1.msra.mxu0 %v1923
    %2066 = vmatprep.subr.mxu0 0.0
    %2067 = vmatpush1.msra.mxu0 %v1924
    %2068 = vmatprep.subr.mxu0 0.0
    %2069 = vmatpush1.msra.mxu0 %v1925
    %2070 = vmatprep.subr.mxu0 0.0
    %2071 = vmatpush1.msra.mxu0 %v1926
    %2072 = vmatprep.subr.mxu0 0.0
    %2073 = vmatpush1.msra.mxu0 %v1927
    %2074 = vmatprep.subr.mxu0 0.0
    %2075 = vmatpush1.msra.mxu0 %v1928
    %2076 = vmatprep.subr.mxu0 0.0
    %2077 = vmatpush1.msra.mxu0 %v1929
    %2078 = vmatprep.subr.mxu0 0.0
    %2079 = vmatpush1.msra.mxu0 %v1930
    %2080 = vmatprep.mubr.f32.mxu0 %v1847
    %2081 = vmatmul.mubr.f32.gmra.mrb[0].mxu0 %v1845
    %v2082 = vpop.f32.mrb[0].mxu0
    %v2083 = vadd.f32 %v1998, %v2082
    %v2084 = vpop.f32.mrb[0].mxu0
    %2085 = vmatprep.mubr.f32.mxu0 %v1853
    %2086 = vmatmul.mubr.f32.gmra.mrb[0].mxu0 %v1851
    %v2087 = vpop.f32.mrb[0].mxu0
    %v2088 = vadd.f32 %v2003, %v2087
    %v2089 = vpop.f32.mrb[0].mxu0
    %2090 = vmatprep.mubr.f32.mxu0 %v1862
    %2091 = vmatmul.mubr.f32.gmra.mrb[0].mxu0 %v1861
    %v2092 = vpop.f32.mrb[0].mxu0
    %v2093 = vadd.f32 %v2008, %v2092
    %v2094 = vpop.f32.mrb[0].mxu0
    %2095 = vmatprep.mubr.f32.mxu0 %v1866
    %2096 = vmatmul.mubr.f32.gmra.mrb[0].mxu0 %v1865
    %v2097 = vpop.f32.mrb[0].mxu0
    %v2098 = vadd.f32 %v2013, %v2097
    %v2099 = vpop.f32.mrb[0].mxu0
    %2100 = vdwg.mxu0
    %v2101 = vmul.f32 %v2083, %v2083
    %v2102 = vmul.f32 %v2088, %v2088
    %v2103 = vsub.f32 %v2093, %v2101
    %v2104 = vsub.f32 %v2098, %v2102
    %v2105 = vadd.f32 %v2103, 1e-05
    %v2106 = vadd.f32 %v2104, 1e-05
    %v2107 = vrsqrt.pop %v2105
    %v2108 = vrsqrt.pop %v2106
    %v2109 = vmul.f32 %v1855, %v2107
    %v2110 = vmul.f32 %v1856, %v2108
    %v2111 = vmul.f32 %v2083, %v2109
    %v2112 = vmul.f32 %v2088, %v2110
    %v2113 = vsub.f32 %v1857, %v2111
    %v2114 = vsub.f32 %v1858, %v2112
    %2116 = vset.pattern.permute.xlu0 0
    %2117 = vperm.xlu0 %2116, %v2109
    %v2118 = vpop.permute.xlu0 %2117
    %2121 = vset.pattern.permute.xlu0 0
    %2122 = vperm.xlu0 %2121, %v2110
    %v2123 = vpop.permute.xlu0 %2122
    %v2125 = vmul.f32 %v1768, %v2118
    %v2126 = vmul.f32 %v1770, %v2118
    %v2127 = vmul.f32 %v1845, %v2118
    %v2128 = vmul.f32 %v1847, %v2118
    %v2129 = vmul.f32 %v1774, %v2123
    %v2130 = vmul.f32 %v1776, %v2123
    %v2131 = vmul.f32 %v1851, %v2123
    %v2132 = vmul.f32 %v1853, %v2123
    %2134 = vset.pattern.permute.xlu0 0
    %2135 = vperm.xlu0 %2134, %v2113
    %v2136 = vpop.permute.xlu0 %2135
    %2139 = vset.pattern.permute.xlu0 0
    %2140 = vperm.xlu0 %2139, %v2114
    %v2141 = vpop.permute.xlu0 %2140
    %v2143 = vadd.f32 %v2125, %v2136
    %v2144 = vadd.f32 %v2126, %v2136
    %v2145 = vadd.f32 %v2127, %v2136
    %v2146 = vadd.f32 %v2128, %v2136
    %v2147 = vadd.f32 %v2129, %v2141
    %v2148 = vadd.f32 %v2130, %v2141
    %v2149 = vadd.f32 %v2131, %v2141
    %v2150 = vadd.f32 %v2132, %v2141
    %v2151 = vld [vmem:[%s11] sm:$0xff]
    %v2152 = vld [vmem:[%s11 + $0x8] sm:$0xff]
    %v2153 = vld [vmem:[%s11 + $0x10] sm:$0xff]
    %v2154 = vld [vmem:[%s11 + $0x18] sm:$0xff]
    %v2155 = vld [vmem:[%s11 + $0x20] sm:$0xff]
    %v2156 = vld [vmem:[%s11 + $0x28] sm:$0xff]
    %v2157 = vld [vmem:[%s11 + $0x30] sm:$0xff]
    %v2158 = vld [vmem:[%s11 + $0x38] sm:$0xff]
    %v2159 = vld [vmem:[%s11 + $0x40] sm:$0xff]
    %v2160 = vld [vmem:[%s11 + $0x48] sm:$0xff]
    %v2161 = vld [vmem:[%s11 + $0x50] sm:$0xff]
    %v2162 = vld [vmem:[%s11 + $0x58] sm:$0xff]
    %v2163 = vld [vmem:[%s11 + $0x60] sm:$0xff]
    %v2164 = vld [vmem:[%s11 + $0x68] sm:$0xff]
    %v2165 = vld [vmem:[%s11 + $0x70] sm:$0xff]
    %v2166 = vld [vmem:[%s11 + $0x78] sm:$0xff]
    %v2167 = vld [vmem:[%s11 + $0x80] sm:$0xff]
    %v2168 = vld [vmem:[%s11 + $0x88] sm:$0xff]
    %v2169 = vld [vmem:[%s11 + $0x90] sm:$0xff]
    %v2170 = vld [vmem:[%s11 + $0x98] sm:$0xff]
    %v2171 = vld [vmem:[%s11 + $0xa0] sm:$0xff]
    %v2172 = vld [vmem:[%s11 + $0xa8] sm:$0xff]
    %v2173 = vld [vmem:[%s11 + $0xb0] sm:$0xff]
    %v2174 = vld [vmem:[%s11 + $0xb8] sm:$0xff]
    %v2175 = vld [vmem:[%s11 + $0xc0] sm:$0xff]
    %v2176 = vld [vmem:[%s11 + $0xc8] sm:$0xff]
    %v2177 = vld [vmem:[%s11 + $0xd0] sm:$0xff]
    %v2178 = vld [vmem:[%s11 + $0xd8] sm:$0xff]
    %v2179 = vld [vmem:[%s11 + $0xe0] sm:$0xff]
    %v2180 = vld [vmem:[%s11 + $0xe8] sm:$0xff]
    %v2181 = vld [vmem:[%s11 + $0xf0] sm:$0xff]
    %v2182 = vld [vmem:[%s11 + $0xf8] sm:$0xff]
    %v2183 = vld [vmem:[%s11 + $0x100] sm:$0xff]
    %v2184 = vld [vmem:[%s11 + $0x108] sm:$0xff]
    %v2185 = vld [vmem:[%s11 + $0x110] sm:$0xff]
    %v2186 = vld [vmem:[%s11 + $0x118] sm:$0xff]
    %v2187 = vld [vmem:[%s11 + $0x120] sm:$0xff]
    %v2188 = vld [vmem:[%s11 + $0x128] sm:$0xff]
    %v2189 = vld [vmem:[%s11 + $0x130] sm:$0xff]
    %v2190 = vld [vmem:[%s11 + $0x138] sm:$0xff]
    %v2191 = vld [vmem:[%s11 + $0x140] sm:$0xff]
    %v2192 = vld [vmem:[%s11 + $0x148] sm:$0xff]
    %v2193 = vld [vmem:[%s11 + $0x150] sm:$0xff]
    %v2194 = vld [vmem:[%s11 + $0x158] sm:$0xff]
    %v2195 = vld [vmem:[%s11 + $0x160] sm:$0xff]
    %v2196 = vld [vmem:[%s11 + $0x168] sm:$0xff]
    %v2197 = vld [vmem:[%s11 + $0x170] sm:$0xff]
    %v2198 = vld [vmem:[%s11 + $0x178] sm:$0xff]
    %v2199 = vld [vmem:[%s11 + $0x180] sm:$0xff]
    %v2200 = vld [vmem:[%s11 + $0x188] sm:$0xff]
    %v2201 = vld [vmem:[%s11 + $0x190] sm:$0xff]
    %v2202 = vld [vmem:[%s11 + $0x198] sm:$0xff]
    %v2203 = vld [vmem:[%s11 + $0x1a0] sm:$0xff]
    %v2204 = vld [vmem:[%s11 + $0x1a8] sm:$0xff]
    %v2205 = vld [vmem:[%s11 + $0x1b0] sm:$0xff]
    %v2206 = vld [vmem:[%s11 + $0x1b8] sm:$0xff]
    %v2207 = vld [vmem:[%s11 + $0x1c0] sm:$0xff]
    %v2208 = vld [vmem:[%s11 + $0x1c8] sm:$0xff]
    %v2209 = vld [vmem:[%s11 + $0x1d0] sm:$0xff]
    %v2210 = vld [vmem:[%s11 + $0x1d8] sm:$0xff]
    %v2211 = vld [vmem:[%s11 + $0x1e0] sm:$0xff]
    %v2212 = vld [vmem:[%s11 + $0x1e8] sm:$0xff]
    %v2213 = vld [vmem:[%s11 + $0x1f0] sm:$0xff]
    %v2214 = vld [vmem:[%s11 + $0x1f8] sm:$0xff]
    %2215 = vmatprep.subr.mxu0 0.0
    %2216 = vmatpush1.msra.mxu0 %v2151
    %2217 = vmatprep.subr.mxu0 0.0
    %2218 = vmatpush1.msra.mxu0 %v2152
    %2219 = vmatprep.subr.mxu0 0.0
    %2220 = vmatpush1.msra.mxu0 %v2153
    %2221 = vmatprep.subr.mxu0 0.0
    %2222 = vmatpush1.msra.mxu0 %v2154
    %2223 = vmatprep.subr.mxu0 0.0
    %2224 = vmatpush1.msra.mxu0 %v2155
    %2225 = vmatprep.subr.mxu0 0.0
    %2226 = vmatpush1.msra.mxu0 %v2156
    %2227 = vmatprep.subr.mxu0 0.0
    %2228 = vmatpush1.msra.mxu0 %v2157
    %2229 = vmatprep.subr.mxu0 0.0
    %2230 = vmatpush1.msra.mxu0 %v2158
    %2231 = vmatprep.subr.mxu0 0.0
    %2232 = vmatpush1.msra.mxu0 %v2159
    %2233 = vmatprep.subr.mxu0 0.0
    %2234 = vmatpush1.msra.mxu0 %v2160
    %2235 = vmatprep.subr.mxu0 0.0
    %2236 = vmatpush1.msra.mxu0 %v2161
    %2237 = vmatprep.subr.mxu0 0.0
    %2238 = vmatpush1.msra.mxu0 %v2162
    %2239 = vmatprep.subr.mxu0 0.0
    %2240 = vmatpush1.msra.mxu0 %v2163
    %2241 = vmatprep.subr.mxu0 0.0
    %2242 = vmatpush1.msra.mxu0 %v2164
    %2243 = vmatprep.subr.mxu0 0.0
    %2244 = vmatpush1.msra.mxu0 %v2165
    %2245 = vmatprep.subr.mxu0 0.0
    %2246 = vmatpush1.msra.mxu0 %v2166
    %2247 = vmatprep.subr.mxu0 0.0
    %2248 = vmatpush1.msra.mxu0 %v2167
    %2249 = vmatprep.subr.mxu0 0.0
    %2250 = vmatpush1.msra.mxu0 %v2168
    %2251 = vmatprep.subr.mxu0 0.0
    %2252 = vmatpush1.msra.mxu0 %v2169
    %2253 = vmatprep.subr.mxu0 0.0
    %2254 = vmatpush1.msra.mxu0 %v2170
    %2255 = vmatprep.subr.mxu0 0.0
    %2256 = vmatpush1.msra.mxu0 %v2171
    %2257 = vmatprep.subr.mxu0 0.0
    %2258 = vmatpush1.msra.mxu0 %v2172
    %2259 = vmatprep.subr.mxu0 0.0
    %2260 = vmatpush1.msra.mxu0 %v2173
    %2261 = vmatprep.subr.mxu0 0.0
    %2262 = vmatpush1.msra.mxu0 %v2174
    %2263 = vmatprep.subr.mxu0 0.0
    %2264 = vmatpush1.msra.mxu0 %v2175
    %2265 = vmatprep.subr.mxu0 0.0
    %2266 = vmatpush1.msra.mxu0 %v2176
    %2267 = vmatprep.subr.mxu0 0.0
    %2268 = vmatpush1.msra.mxu0 %v2177
    %2269 = vmatprep.subr.mxu0 0.0
    %2270 = vmatpush1.msra.mxu0 %v2178
    %2271 = vmatprep.subr.mxu0 0.0
    %2272 = vmatpush1.msra.mxu0 %v2179
    %2273 = vmatprep.subr.mxu0 0.0
    %2274 = vmatpush1.msra.mxu0 %v2180
    %2275 = vmatprep.subr.mxu0 0.0
    %2276 = vmatpush1.msra.mxu0 %v2181
    %2277 = vmatprep.subr.mxu0 0.0
    %2278 = vmatpush1.msra.mxu0 %v2182
    %2279 = vmatprep.mubr.f32.mxu0 %v2144
    %2280 = vmatmul.mubr.f32.gmra.mrb[0].mxu0 %v2143
    %v2281 = vpop.f32.mrb[0].mxu0
    %v2282 = vadd.f32 0.0, %v2281
    %v2283 = vpop.f32.mrb[0].mxu0
    %2284 = vmatprep.mubr.f32.mxu0 %v2148
    %2285 = vmatmul.mubr.f32.gmra.mrb[0].mxu0 %v2147
    %v2286 = vpop.f32.mrb[0].mxu0
    %v2287 = vadd.f32 0.0, %v2286
    %v2288 = vpop.f32.mrb[0].mxu0
    %2289 = vdwg.mxu0
    %2290 = vmatprep.subr.mxu0 0.0
    %2291 = vmatpush1.msra.mxu0 %v2183
    %2292 = vmatprep.subr.mxu0 0.0
    %2293 = vmatpush1.msra.mxu0 %v2184
    %2294 = vmatprep.subr.mxu0 0.0
    %2295 = vmatpush1.msra.mxu0 %v2185
    %2296 = vmatprep.subr.mxu0 0.0
    %2297 = vmatpush1.msra.mxu0 %v2186
    %2298 = vmatprep.subr.mxu0 0.0
    %2299 = vmatpush1.msra.mxu0 %v2187
    %2300 = vmatprep.subr.mxu0 0.0
    %2301 = vmatpush1.msra.mxu0 %v2188
    %2302 = vmatprep.subr.mxu0 0.0
    %2303 = vmatpush1.msra.mxu0 %v2189
    %2304 = vmatprep.subr.mxu0 0.0
    %2305 = vmatpush1.msra.mxu0 %v2190
    %2306 = vmatprep.subr.mxu0 0.0
    %2307 = vmatpush1.msra.mxu0 %v2191
    %2308 = vmatprep.subr.mxu0 0.0
    %2309 = vmatpush1.msra.mxu0 %v2192
    %2310 = vmatprep.subr.mxu0 0.0
    %2311 = vmatpush1.msra.mxu0 %v2193
    %2312 = vmatprep.subr.mxu0 0.0
    %2313 = vmatpush1.msra.mxu0 %v2194
    %2314 = vmatprep.subr.mxu0 0.0
    %2315 = vmatpush1.msra.mxu0 %v2195
    %2316 = vmatprep.subr.mxu0 0.0
    %2317 = vmatpush1.msra.mxu0 %v2196
    %2318 = vmatprep.subr.mxu0 0.0
    %2319 = vmatpush1.msra.mxu0 %v2197
    %2320 = vmatprep.subr.mxu0 0.0
    %2321 = vmatpush1.msra.mxu0 %v2198
    %2322 = vmatprep.subr.mxu0 0.0
    %2323 = vmatpush1.msra.mxu0 %v2199
    %2324 = vmatprep.subr.mxu0 0.0
    %2325 = vmatpush1.msra.mxu0 %v2200
    %2326 = vmatprep.subr.mxu0 0.0
    %2327 = vmatpush1.msra.mxu0 %v2201
    %2328 = vmatprep.subr.mxu0 0.0
    %2329 = vmatpush1.msra.mxu0 %v2202
    %2330 = vmatprep.subr.mxu0 0.0
    %2331 = vmatpush1.msra.mxu0 %v2203
    %2332 = vmatprep.subr.mxu0 0.0
    %2333 = vmatpush1.msra.mxu0 %v2204
    %2334 = vmatprep.subr.mxu0 0.0
    %2335 = vmatpush1.msra.mxu0 %v2205
    %2336 = vmatprep.subr.mxu0 0.0
    %2337 = vmatpush1.msra.mxu0 %v2206
    %2338 = vmatprep.subr.mxu0 0.0
    %2339 = vmatpush1.msra.mxu0 %v2207
    %2340 = vmatprep.subr.mxu0 0.0
    %2341 = vmatpush1.msra.mxu0 %v2208
    %2342 = vmatprep.subr.mxu0 0.0
    %2343 = vmatpush1.msra.mxu0 %v2209
    %2344 = vmatprep.subr.mxu0 0.0
    %2345 = vmatpush1.msra.mxu0 %v2210
    %2346 = vmatprep.subr.mxu0 0.0
    %2347 = vmatpush1.msra.mxu0 %v2211
    %2348 = vmatprep.subr.mxu0 0.0
    %2349 = vmatpush1.msra.mxu0 %v2212
    %2350 = vmatprep.subr.mxu0 0.0
    %2351 = vmatpush1.msra.mxu0 %v2213
    %2352 = vmatprep.subr.mxu0 0.0
    %2353 = vmatpush1.msra.mxu0 %v2214
    %2354 = vmatprep.mubr.f32.mxu0 %v2146
    %2355 = vmatmul.mubr.f32.gmra.mrb[0].mxu0 %v2145
    %v2356 = vpop.f32.mrb[0].mxu0
    %v2357 = vadd.f32 %v2282, %v2356
    %v2358 = vpop.f32.mrb[0].mxu0
    %2359 = vmatprep.mubr.f32.mxu0 %v2150
    %2360 = vmatmul.mubr.f32.gmra.mrb[0].mxu0 %v2149
    %v2361 = vpop.f32.mrb[0].mxu0
    %v2362 = vadd.f32 %v2287, %v2361
    %v2363 = vpop.f32.mrb[0].mxu0
    %2364 = vdwg.mxu0
    %v2365 = vld [vmem:[%s7] sm:$0xf]
    %v2367 = vsel %vm650, %v2365, 0
    %2369 = vmatprep.subr.mxu0 0.0
    %2370 = vmatpush1.msra.mxu0 %v2357
    %2371 = vmatprep.subr.mxu0 0.0
    %2372 = vmatpush1.msra.mxu0 %v2362
    %2373 = vmatprep.subr.mxu0 0.0
    %2374 = vmatpush1.msra.mxu0 0.0
    %2375 = vmatprep.subr.mxu0 0.0
    %2376 = vmatpush1.msra.mxu0 0.0
    %2377 = vmatprep.subr.mxu0 0.0
    %2378 = vmatpush1.msra.mxu0 0.0
    %2379 = vmatprep.subr.mxu0 0.0
    %2380 = vmatpush1.msra.mxu0 0.0
    %2381 = vmatprep.subr.mxu0 0.0
    %2382 = vmatpush1.msra.mxu0 0.0
    %2383 = vmatprep.subr.mxu0 0.0
    %2384 = vmatpush1.msra.mxu0 0.0
    %2385 = vmatprep.subr.mxu0 0.0
    %2386 = vmatpush1.msra.mxu0 0.0
    %2387 = vmatprep.subr.mxu0 0.0
    %2388 = vmatpush1.msra.mxu0 0.0
    %2389 = vmatprep.subr.mxu0 0.0
    %2390 = vmatpush1.msra.mxu0 0.0
    %2391 = vmatprep.subr.mxu0 0.0
    %2392 = vmatpush1.msra.mxu0 0.0
    %2393 = vmatprep.subr.mxu0 0.0
    %2394 = vmatpush1.msra.mxu0 0.0
    %2395 = vmatprep.subr.mxu0 0.0
    %2396 = vmatpush1.msra.mxu0 0.0
    %2397 = vmatprep.subr.mxu0 0.0
    %2398 = vmatpush1.msra.mxu0 0.0
    %2399 = vmatprep.subr.mxu0 0.0
    %2400 = vmatpush1.msra.mxu0 0.0
    %2401 = vmatprep.subr.mxu0 0.0
    %2402 = vmatpush1.msra.mxu0 0.0
    %2403 = vmatprep.subr.mxu0 0.0
    %2404 = vmatpush1.msra.mxu0 0.0
    %2405 = vmatprep.subr.mxu0 0.0
    %2406 = vmatpush1.msra.mxu0 0.0
    %2407 = vmatprep.subr.mxu0 0.0
    %2408 = vmatpush1.msra.mxu0 0.0
    %2409 = vmatprep.subr.mxu0 0.0
    %2410 = vmatpush1.msra.mxu0 0.0
    %2411 = vmatprep.subr.mxu0 0.0
    %2412 = vmatpush1.msra.mxu0 0.0
    %2413 = vmatprep.subr.mxu0 0.0
    %2414 = vmatpush1.msra.mxu0 0.0
    %2415 = vmatprep.subr.mxu0 0.0
    %2416 = vmatpush1.msra.mxu0 0.0
    %2417 = vmatprep.subr.mxu0 0.0
    %2418 = vmatpush1.msra.mxu0 0.0
    %2419 = vmatprep.subr.mxu0 0.0
    %2420 = vmatpush1.msra.mxu0 0.0
    %2421 = vmatprep.subr.mxu0 0.0
    %2422 = vmatpush1.msra.mxu0 0.0
    %2423 = vmatprep.subr.mxu0 0.0
    %2424 = vmatpush1.msra.mxu0 0.0
    %2425 = vmatprep.subr.mxu0 0.0
    %2426 = vmatpush1.msra.mxu0 0.0
    %2427 = vmatprep.subr.mxu0 0.0
    %2428 = vmatpush1.msra.mxu0 0.0
    %2429 = vmatprep.subr.mxu0 0.0
    %2430 = vmatpush1.msra.mxu0 0.0
    %2431 = vmatprep.subr.mxu0 0.0
    %2432 = vmatpush1.msra.mxu0 0.0
    %2433 = vmatprep.mubr.f32.mxu0 0.0
    %2434 = vmatmul.mubr.f32.gmra.mrb[0].mxu0 %v2367
    %v2435 = vpop.f32.mrb[0].mxu0
    %v2436 = vadd.f32 0.0, %v2435
    %v2437 = vpop.f32.mrb[0].mxu0
    %2438 = vdwg.mxu0
    %v2439 = vmax.f32 %v2436, 0.0
    %v2440 = vld [vmem:[%s8] sm:$0xff]
    %v2441 = vld [vmem:[%s8 + $0x8] sm:$0xff]
    %vm2442 = vcmask 31744
    %v2444 = vsel %vm2442, %v2440, 0
    %v2447 = vsel %vm2442, %v2441, 0
    %vm2449 = vcmask 1043456
    %v2451 = vsel %vm2449, %v2439, 0
    %2453 = vmatprep.subr.mxu0 0.0
    %2454 = vmatpush1.msra.mxu0 %v2451
    %2455 = vmatprep.subr.mxu0 0.0
    %2456 = vmatpush1.msra.mxu0 0.0
    %2457 = vmatprep.subr.mxu0 0.0
    %2458 = vmatpush1.msra.mxu0 0.0
    %2459 = vmatprep.subr.mxu0 0.0
    %2460 = vmatpush1.msra.mxu0 0.0
    %2461 = vmatprep.subr.mxu0 0.0
    %2462 = vmatpush1.msra.mxu0 0.0
    %2463 = vmatprep.subr.mxu0 0.0
    %2464 = vmatpush1.msra.mxu0 0.0
    %2465 = vmatprep.subr.mxu0 0.0
    %2466 = vmatpush1.msra.mxu0 0.0
    %2467 = vmatprep.subr.mxu0 0.0
    %2468 = vmatpush1.msra.mxu0 0.0
    %2469 = vmatprep.subr.mxu0 0.0
    %2470 = vmatpush1.msra.mxu0 0.0
    %2471 = vmatprep.subr.mxu0 0.0
    %2472 = vmatpush1.msra.mxu0 0.0
    %2473 = vmatprep.subr.mxu0 0.0
    %2474 = vmatpush1.msra.mxu0 0.0
    %2475 = vmatprep.subr.mxu0 0.0
    %2476 = vmatpush1.msra.mxu0 0.0
    %2477 = vmatprep.subr.mxu0 0.0
    %2478 = vmatpush1.msra.mxu0 0.0
    %2479 = vmatprep.subr.mxu0 0.0
    %2480 = vmatpush1.msra.mxu0 0.0
    %2481 = vmatprep.subr.mxu0 0.0
    %2482 = vmatpush1.msra.mxu0 0.0
    %2483 = vmatprep.subr.mxu0 0.0
    %2484 = vmatpush1.msra.mxu0 0.0
    %2485 = vmatprep.subr.mxu0 0.0
    %2486 = vmatpush1.msra.mxu0 0.0
    %2487 = vmatprep.subr.mxu0 0.0
    %2488 = vmatpush1.msra.mxu0 0.0
    %2489 = vmatprep.subr.mxu0 0.0
    %2490 = vmatpush1.msra.mxu0 0.0
    %2491 = vmatprep.subr.mxu0 0.0
    %2492 = vmatpush1.msra.mxu0 0.0
    %2493 = vmatprep.subr.mxu0 0.0
    %2494 = vmatpush1.msra.mxu0 0.0
    %2495 = vmatprep.subr.mxu0 0.0
    %2496 = vmatpush1.msra.mxu0 0.0
    %2497 = vmatprep.subr.mxu0 0.0
    %2498 = vmatpush1.msra.mxu0 0.0
    %2499 = vmatprep.subr.mxu0 0.0
    %2500 = vmatpush1.msra.mxu0 0.0
    %2501 = vmatprep.subr.mxu0 0.0
    %2502 = vmatpush1.msra.mxu0 0.0
    %2503 = vmatprep.subr.mxu0 0.0
    %2504 = vmatpush1.msra.mxu0 0.0
    %2505 = vmatprep.subr.mxu0 0.0
    %2506 = vmatpush1.msra.mxu0 0.0
    %2507 = vmatprep.subr.mxu0 0.0
    %2508 = vmatpush1.msra.mxu0 0.0
    %2509 = vmatprep.subr.mxu0 0.0
    %2510 = vmatpush1.msra.mxu0 0.0
    %2511 = vmatprep.subr.mxu0 0.0
    %2512 = vmatpush1.msra.mxu0 0.0
    %2513 = vmatprep.subr.mxu0 0.0
    %2514 = vmatpush1.msra.mxu0 0.0
    %2515 = vmatprep.subr.mxu0 0.0
    %2516 = vmatpush1.msra.mxu0 0.0
    %2517 = vmatprep.mubr.f32.mxu0 0.0
    %2518 = vmatmul.mubr.f32.gmra.mrb[0].mxu0 %v2444
    %v2519 = vpop.f32.mrb[0].mxu0
    %v2520 = vadd.f32 0.0, %v2519
    %v2521 = vpop.f32.mrb[0].mxu0
    %2522 = vmatprep.mubr.f32.mxu0 0.0
    %2523 = vmatmul.mubr.f32.gmra.mrb[0].mxu0 %v2447
    %v2524 = vpop.f32.mrb[0].mxu0
    %v2525 = vadd.f32 0.0, %v2524
    %v2526 = vpop.f32.mrb[0].mxu0
    %2527 = vdwg.mxu0
    %v2528 = vxor.u32 %v2520, 2147483648
    %v2529 = vxor.u32 %v2525, 2147483648
    %v2530 = vmul.f32 %v2528, 1.442695
    %v2531 = vpow.pop %v2530
    %v2532 = vmul.f32 %v2529, 1.442695
    %v2533 = vpow.pop %v2532
    %v2534 = vadd.f32 %v2531, 1.0
    %v2535 = vadd.f32 %v2533, 1.0
    %v2536 = vrcp.pop %v2534
    %v2537 = vmul.f32 1.0, %v2536
    %v2538 = vrcp.pop %v2535
    %v2539 = vmul.f32 1.0, %v2538
    %v2540 = vld [vmem:[%s12] sm:$0xff]
    %v2542 = vcombine.high %v2540, %v2540
    %v2544 = vunpack.c.l.s4 1983009808
    %v2545 = vunpack.c.0.s8 %v2544
    %v2546 = vlaneseq
    %v2547 = vshrl.u32 %v2546, 7
    %v2548 = vsub.s32 %v2545, %v2547
    %v2549 = vrot.slane %v2540, %v2548
    %v2551 = vunpack.c.l.s4 1983009808
    %v2552 = vunpack.c.0.s8 %v2551
    %v2553 = vlaneseq
    %v2554 = vshrl.u32 %v2553, 7
    %v2555 = vsub.s32 %v2552, %v2554
    %v2556 = vrot.slane %v2542, %v2555
    %v2557 = vcombine.high %v2549, %v2549
    %v2558 = vcombine.high %v2556, %v2556
    %vm2559 = vcmask 15360
    %v2561 = vsel %vm2559, %v2537, 0
    %v2564 = vsel %vm2559, %v2539, 0
    %vm2566 = vcmask 1041408
    %v2567 = vsel %vm2566, %v2549, 0
    %v2569 = vsel %vm2566, %v2557, 0
    %v2571 = vsel %vm2566, %v2556, 0
    %v2573 = vsel %vm2566, %v2558, 0
    %2575 = vmatprep.subr.mxu0 %v2569
    %2576 = vmatpush1.msra.mxu0 %v2567
    %2577 = vmatprep.subr.mxu0 0.0
    %2578 = vmatpush1.msra.mxu0 0.0
    %2579 = vmatprep.subr.mxu0 0.0
    %2580 = vmatpush1.msra.mxu0 0.0
    %2581 = vmatprep.subr.mxu0 0.0
    %2582 = vmatpush1.msra.mxu0 0.0
    %2583 = vmatprep.subr.mxu0 0.0
    %2584 = vmatpush1.msra.mxu0 0.0
    %2585 = vmatprep.subr.mxu0 0.0
    %2586 = vmatpush1.msra.mxu0 0.0
    %2587 = vmatprep.subr.mxu0 0.0
    %2588 = vmatpush1.msra.mxu0 0.0
    %2589 = vmatprep.subr.mxu0 0.0
    %2590 = vmatpush1.msra.mxu0 0.0
    %2591 = vmatprep.subr.mxu0 0.0
    %2592 = vmatpush1.msra.mxu0 0.0
    %2593 = vmatprep.subr.mxu0 0.0
    %2594 = vmatpush1.msra.mxu0 0.0
    %2595 = vmatprep.subr.mxu0 0.0
    %2596 = vmatpush1.msra.mxu0 0.0
    %2597 = vmatprep.subr.mxu0 0.0
    %2598 = vmatpush1.msra.mxu0 0.0
    %2599 = vmatprep.subr.mxu0 0.0
    %2600 = vmatpush1.msra.mxu0 0.0
    %2601 = vmatprep.subr.mxu0 0.0
    %2602 = vmatpush1.msra.mxu0 0.0
    %2603 = vmatprep.subr.mxu0 0.0
    %2604 = vmatpush1.msra.mxu0 0.0
    %2605 = vmatprep.subr.mxu0 0.0
    %2606 = vmatpush1.msra.mxu0 0.0
    %2607 = vmatprep.subr.mxu0 0.0
    %2608 = vmatpush1.msra.mxu0 0.0
    %2609 = vmatprep.subr.mxu0 0.0
    %2610 = vmatpush1.msra.mxu0 0.0
    %2611 = vmatprep.subr.mxu0 0.0
    %2612 = vmatpush1.msra.mxu0 0.0
    %2613 = vmatprep.subr.mxu0 0.0
    %2614 = vmatpush1.msra.mxu0 0.0
    %2615 = vmatprep.subr.mxu0 0.0
    %2616 = vmatpush1.msra.mxu0 0.0
    %2617 = vmatprep.subr.mxu0 0.0
    %2618 = vmatpush1.msra.mxu0 0.0
    %2619 = vmatprep.subr.mxu0 0.0
    %2620 = vmatpush1.msra.mxu0 0.0
    %2621 = vmatprep.subr.mxu0 0.0
    %2622 = vmatpush1.msra.mxu0 0.0
    %2623 = vmatprep.subr.mxu0 0.0
    %2624 = vmatpush1.msra.mxu0 0.0
    %2625 = vmatprep.subr.mxu0 0.0
    %2626 = vmatpush1.msra.mxu0 0.0
    %2627 = vmatprep.subr.mxu0 0.0
    %2628 = vmatpush1.msra.mxu0 0.0
    %2629 = vmatprep.subr.mxu0 0.0
    %2630 = vmatpush1.msra.mxu0 0.0
    %2631 = vmatprep.subr.mxu0 0.0
    %2632 = vmatpush1.msra.mxu0 0.0
    %2633 = vmatprep.subr.mxu0 0.0
    %2634 = vmatpush1.msra.mxu0 0.0
    %2635 = vmatprep.subr.mxu0 0.0
    %2636 = vmatpush1.msra.mxu0 0.0
    %2637 = vmatprep.subr.mxu0 0.0
    %2638 = vmatpush1.msra.mxu0 0.0
    %2639 = vmatprep.mubr.f32.mxu0 0.0
    %2640 = vmatmul.mubr.f32.gmra.mrb[0].mxu0 %v2561
    %v2641 = vpop.f32.mrb[0].mxu0
    %v2642 = vadd.f32 0.0, %v2641
    %v2643 = vpop.f32.mrb[0].mxu0
    %v2644 = vadd.f32 0.0, %v2643
    %2645 = vmatprep.mubr.f32.mxu0 0.0
    %2646 = vmatmul.mubr.f32.gmra.mrb[0].mxu0 %v2564
    %v2647 = vpop.f32.mrb[0].mxu0
    %v2648 = vadd.f32 0.0, %v2647
    %v2649 = vpop.f32.mrb[0].mxu0
    %v2650 = vadd.f32 0.0, %v2649
    %2651 = vdwg.mxu0
    %2652 = vmatprep.subr.mxu0 %v2573
    %2653 = vmatpush1.msra.mxu0 %v2571
    %2654 = vmatprep.subr.mxu0 0.0
    %2655 = vmatpush1.msra.mxu0 0.0
    %2656 = vmatprep.subr.mxu0 0.0
    %2657 = vmatpush1.msra.mxu0 0.0
    %2658 = vmatprep.subr.mxu0 0.0
    %2659 = vmatpush1.msra.mxu0 0.0
    %2660 = vmatprep.subr.mxu0 0.0
    %2661 = vmatpush1.msra.mxu0 0.0
    %2662 = vmatprep.subr.mxu0 0.0
    %2663 = vmatpush1.msra.mxu0 0.0
    %2664 = vmatprep.subr.mxu0 0.0
    %2665 = vmatpush1.msra.mxu0 0.0
    %2666 = vmatprep.subr.mxu0 0.0
    %2667 = vmatpush1.msra.mxu0 0.0
    %2668 = vmatprep.subr.mxu0 0.0
    %2669 = vmatpush1.msra.mxu0 0.0
    %2670 = vmatprep.subr.mxu0 0.0
    %2671 = vmatpush1.msra.mxu0 0.0
    %2672 = vmatprep.subr.mxu0 0.0
    %2673 = vmatpush1.msra.mxu0 0.0
    %2674 = vmatprep.subr.mxu0 0.0
    %2675 = vmatpush1.msra.mxu0 0.0
    %2676 = vmatprep.subr.mxu0 0.0
    %2677 = vmatpush1.msra.mxu0 0.0
    %2678 = vmatprep.subr.mxu0 0.0
    %2679 = vmatpush1.msra.mxu0 0.0
    %2680 = vmatprep.subr.mxu0 0.0
    %2681 = vmatpush1.msra.mxu0 0.0
    %2682 = vmatprep.subr.mxu0 0.0
    %2683 = vmatpush1.msra.mxu0 0.0
    %2684 = vmatprep.subr.mxu0 0.0
    %2685 = vmatpush1.msra.mxu0 0.0
    %2686 = vmatprep.subr.mxu0 0.0
    %2687 = vmatpush1.msra.mxu0 0.0
    %2688 = vmatprep.subr.mxu0 0.0
    %2689 = vmatpush1.msra.mxu0 0.0
    %2690 = vmatprep.subr.mxu0 0.0
    %2691 = vmatpush1.msra.mxu0 0.0
    %2692 = vmatprep.subr.mxu0 0.0
    %2693 = vmatpush1.msra.mxu0 0.0
    %2694 = vmatprep.subr.mxu0 0.0
    %2695 = vmatpush1.msra.mxu0 0.0
    %2696 = vmatprep.subr.mxu0 0.0
    %2697 = vmatpush1.msra.mxu0 0.0
    %2698 = vmatprep.subr.mxu0 0.0
    %2699 = vmatpush1.msra.mxu0 0.0
    %2700 = vmatprep.subr.mxu0 0.0
    %2701 = vmatpush1.msra.mxu0 0.0
    %2702 = vmatprep.subr.mxu0 0.0
    %2703 = vmatpush1.msra.mxu0 0.0
    %2704 = vmatprep.subr.mxu0 0.0
    %2705 = vmatpush1.msra.mxu0 0.0
    %2706 = vmatprep.subr.mxu0 0.0
    %2707 = vmatpush1.msra.mxu0 0.0
    %2708 = vmatprep.subr.mxu0 0.0
    %2709 = vmatpush1.msra.mxu0 0.0
    %2710 = vmatprep.subr.mxu0 0.0
    %2711 = vmatpush1.msra.mxu0 0.0
    %2712 = vmatprep.subr.mxu0 0.0
    %2713 = vmatpush1.msra.mxu0 0.0
    %2714 = vmatprep.subr.mxu0 0.0
    %2715 = vmatpush1.msra.mxu0 0.0
    %2716 = vmatprep.mubr.f32.mxu0 0.0
    %2717 = vmatmul.mubr.f32.gmra.mrb[0].mxu0 %v2561
    %v2718 = vpop.f32.mrb[0].mxu0
    %v2719 = vadd.f32 0.0, %v2718
    %v2720 = vpop.f32.mrb[0].mxu0
    %v2721 = vadd.f32 0.0, %v2720
    %2722 = vmatprep.mubr.f32.mxu0 0.0
    %2723 = vmatmul.mubr.f32.gmra.mrb[0].mxu0 %v2564
    %v2724 = vpop.f32.mrb[0].mxu0
    %v2725 = vadd.f32 0.0, %v2724
    %v2726 = vpop.f32.mrb[0].mxu0
    %v2727 = vadd.f32 0.0, %v2726
    %2728 = vdwg.mxu0
    %v2729 = vmul.f32 %v2143, %v2642
    %v2730 = vmul.f32 %v2144, %v2644
    %v2731 = vmul.f32 %v2145, %v2719
    %v2732 = vmul.f32 %v2146, %v2721
    %v2733 = vmul.f32 %v2147, %v2648
    %v2734 = vmul.f32 %v2148, %v2650
    %v2735 = vmul.f32 %v2149, %v2725
    %v2736 = vmul.f32 %v2150, %v2727
    %v2737 = vadd.f32 %v2729, %v45
    %v2738 = vadd.f32 %v2730, %v46
    %v2739 = vadd.f32 %v2731, %v47
    %v2740 = vadd.f32 %v2732, %v48
    %v2741 = vadd.f32 %v2733, %v49
    %v2742 = vadd.f32 %v2734, %v50
    %v2743 = vadd.f32 %v2735, %v51
    %v2744 = vadd.f32 %v2736, %v52
    %v2745 = vmax.f32 %v2737, 0.0
    %v2746 = vmax.f32 %v2738, 0.0
    %v2747 = vmax.f32 %v2739, 0.0
    %v2748 = vmax.f32 %v2740, 0.0
    %v2749 = vmax.f32 %v2741, 0.0
    %v2750 = vmax.f32 %v2742, 0.0
    %v2751 = vmax.f32 %v2743, 0.0
    %v2752 = vmax.f32 %v2744, 0.0
    %2753 = vst [vmem:[#allocation3] sm:$0xff] %v2745
    %2754 = vst [vmem:[#allocation3 + $0x8] sm:$0xff] %v2746
    %2755 = vst [vmem:[#allocation3 + $0x10] sm:$0xff] %v2747
    %2756 = vst [vmem:[#allocation3 + $0x18] sm:$0xff] %v2748
    %2757 = vst [vmem:[#allocation3 + $0x20] sm:$0xff] %v2749
    %2758 = vst [vmem:[#allocation3 + $0x28] sm:$0xff] %v2750
    %2759 = vst [vmem:[#allocation3 + $0x30] sm:$0xff] %v2751
    %2760 = vst [vmem:[#allocation3 + $0x38] sm:$0xff] %v2752
    // Predicated region
    $region54: #{tpu_custom_call.1} parent=1 // pred_check
      _
    $region55: #{tpu_custom_call.1} parent=1 // pred_check_branch
      %2762 = sbr.rel (0) target = $region57
    $region56: #{tpu_custom_call.1} parent=1 // pred_region
      %s2764 = ssub.s32 1024, 1024
      %2765 = vsyncadd [#allocation4], %s2764
      %s2766 = sshll.u32 [#allocation3], 4
      %s2767 = int_to_ptr.vmem [resolvable:$true] %s2766
      %2772 = dma.vmem_to_hbm [thread:$0]  %s2767, 1024, %s13, [#allocation4], 512, 512, 32
    $region57: #{tpu_custom_call.1} parent=1 // pred_fallthru
      _
    // Predicated region
    $region58: #{tpu_custom_call.1} parent=1 // pred_check
      _
    $region59: #{tpu_custom_call.1} parent=1 // pred_check_branch
      %2774 = sbr.rel (0) target = $region61
    $region60: #{tpu_custom_call.1} parent=1 // pred_region
      %2775 = dma.done [#allocation4], 1024
    $region61: #{tpu_custom_call.1} parent=1 // pred_fallthru
      _
    %2776 = vsyncpa [#allocation4], 1

</llo_original>
